<compile_context>
chip_gen: v7x
topology: tpu7x:2x2x1
jax: 0.10.0
libtpu: 0.0.40
codegen_flags: <defaults>
</compile_context>

<pallas_src>
import functools

import jax
import jax.numpy as jnp
from jax import lax
from jax.experimental import pallas as pl
from jax.experimental.pallas import tpu as pltpu


def encoder_block_kernel(n_heads,
                         x_ref,
                         wq_ref, bq_ref, wk_ref, bk_ref, wv_ref, bv_ref,
                         wo_ref, bo_ref, g1_ref, be1_ref,
                         w1_ref, bm1_ref, w2_ref, bm2_ref, g2_ref, be2_ref,
                         o_ref,
                         kT_cache, v_cache):
    qi = pl.program_id(1)                     # query-row tile index (sequential per batch)
    block_q = o_ref.shape[1]
    E = o_ref.shape[2]
    d = E // n_heads
    bf16 = jnp.bfloat16

    # ---- Full-sequence K/V projections: once per batch element (first q tile),
    #      full-width matmuls (N = E), K cached pre-transposed. ----
    @pl.when(qi == 0)
    def _():
        x_full = x_ref[0]                                                     # (S, E) bf16
        k_full = jnp.dot(x_full, wk_ref[...],
                         preferred_element_type=jnp.float32) + bk_ref[...]    # (S, E) f32
        v_full = jnp.dot(x_full, wv_ref[...],
                         preferred_element_type=jnp.float32) + bv_ref[...]
        kT_cache[...] = jnp.transpose(k_full).astype(bf16)                    # (E, S)
        v_cache[...] = v_full.astype(bf16)                                    # (S, E)

    # ---- Q projection for this row tile (1/sqrt(d) folded into wq/bq), full-width ----
    row0 = pl.multiple_of(qi * block_q, block_q)
    x_q = x_ref[0, pl.ds(row0, block_q), :]                                   # (bq, E) bf16
    q_tile = (jnp.dot(x_q, wq_ref[...], preferred_element_type=jnp.float32)
              + bq_ref[...]).astype(bf16)                                     # (bq, E)

    # ---- per-head attention: heads folded into the body (static loop),
    #      scores are MXU-native q_h @ K^T_h with N = S ----
    ctx_parts = []
    for h in range(n_heads):
        lo = h * d
        q_h = q_tile[:, lo:lo + d]                                            # (bq, d) bf16
        kT_h = kT_cache[pl.ds(lo, d), :]                                      # (d, S)  bf16
        v_h = v_cache[:, pl.ds(lo, d)]                                        # (S, d)  bf16
        s = jnp.dot(q_h, kT_h, preferred_element_type=jnp.float32)            # (bq, S) f32
        s = s - jnp.max(s, axis=-1, keepdims=True)
        p = jnp.exp(s)
        p = p * pl.reciprocal(jnp.sum(p, axis=-1, keepdims=True), approx=True)
        ctx_parts.append(jnp.dot(p.astype(bf16), v_h,
                                 preferred_element_type=jnp.float32).astype(bf16))
    # lane-aligned concat (d is a multiple of 128 in the demo) -> one K=E out-proj matmul
    ctx = ctx_parts[0] if n_heads == 1 else jnp.concatenate(ctx_parts, axis=-1)

    def layer_norm(y, gamma, beta):
        # two-pass (centered) form for numerical safety
        mu = jnp.mean(y, axis=-1, keepdims=True)
        yc = y - mu
        var = jnp.mean(yc * yc, axis=-1, keepdims=True)
        return yc * lax.rsqrt(var + 1e-5) * gamma + beta

    # ---- out-proj bias, residual + LN1, MLP, residual + LN2 (drop1/drop2 = identity) ----
    attn = jnp.dot(ctx, wo_ref[...], preferred_element_type=jnp.float32) + bo_ref[...]
    x1 = layer_norm(attn + x_q.astype(jnp.float32), g1_ref[...], be1_ref[...])   # (bq, E) f32

    h1 = jnp.dot(x1.astype(bf16), w1_ref[...],
                 preferred_element_type=jnp.float32) + bm1_ref[...]
    h1 = jnp.maximum(h1, 0.0)
    h2 = jnp.dot(h1.astype(bf16), w2_ref[...],
                 preferred_element_type=jnp.float32) + bm2_ref[...]

    o_ref[0] = layer_norm(h2 + x1, g2_ref[...], be2_ref[...]).astype(o_ref.dtype)


def prepare_weights(params, n_heads):
    """One-time weight re-layout (outside the kernel call path): transposes to
    x @ W form, 1/sqrt(d) folded into Wq/bq, matmul operands cast to bf16."""
    E = params["w_out"].shape[0]
    assert E % n_heads == 0, "embedding_dim must be divisible by n_heads"
    d = E // n_heads
    mlp = params["w1"].shape[0]
    f32, bf16 = jnp.float32, jnp.bfloat16
    scale = 1.0 / (d ** 0.5)
    w_in, b_in = params["w_in"], params["b_in"]

    wq = (jnp.transpose(w_in[:E]) * scale).astype(bf16)          # (E, E)
    wk = jnp.transpose(w_in[E:2 * E]).astype(bf16)               # (E, E)
    wv = jnp.transpose(w_in[2 * E:]).astype(bf16)                # (E, E)
    bq = (b_in[:E] * scale).reshape(1, E).astype(f32)
    bk = b_in[E:2 * E].reshape(1, E).astype(f32)
    bv = b_in[2 * E:].reshape(1, E).astype(f32)
    wo = jnp.transpose(params["w_out"]).astype(bf16)             # (E, E)
    bo = params["b_out"].reshape(1, E).astype(f32)

    g1 = params["g1"].reshape(1, E).astype(f32)
    be1 = params["beta1"].reshape(1, E).astype(f32)
    w1 = jnp.transpose(params["w1"]).astype(bf16)                # (E, mlp)
    bm1 = params["b1"].reshape(1, mlp).astype(f32)
    w2 = jnp.transpose(params["w2"]).astype(bf16)                # (mlp, E)
    bm2 = params["b2"].reshape(1, E).astype(f32)
    g2 = params["g2"].reshape(1, E).astype(f32)
    be2 = params["beta2"].reshape(1, E).astype(f32)

    return (wq, bq, wk, bk, wv, bv, wo, bo, g1, be1,
            w1, bm1, w2, bm2, g2, be2)


def encoder_block(x, prepared, n_heads, block_q=128):
    B, S, E = x.shape
    block_q = min(block_q, S)
    assert S % block_q == 0, "S must be divisible by block_q"
    n_q = S // block_q

    # bf16 HBM boundary: halves the x / output DMA traffic.
    x_bf = x.astype(jnp.bfloat16)

    def full_spec(a):
        zeros = (0,) * a.ndim                 # resident: fetched once, same block each step
        return pl.BlockSpec(a.shape, lambda b, q: zeros)

    kernel = functools.partial(encoder_block_kernel, n_heads)
    return pl.pallas_call(
        kernel,
        out_shape=jax.ShapeDtypeStruct((B, S, E), jnp.bfloat16),
        grid=(B, n_q),
        in_specs=[pl.BlockSpec((1, S, E), lambda b, q: (b, 0, 0))]   # x (full seq per batch)
                 + [full_spec(a) for a in prepared],
        out_specs=pl.BlockSpec((1, block_q, E), lambda b, q: (b, q, 0)),
        scratch_shapes=[
            pltpu.VMEM((E, S), jnp.bfloat16),   # K^T cache (per batch element)
            pltpu.VMEM((S, E), jnp.bfloat16),   # V cache
        ],
        compiler_params=pltpu.CompilerParams(
            # q-tile axis carries the K/V caches -> "arbitrary"; batch is megacore-parallel
            # (each core recomputes its own caches at qi == 0, so splitting B is safe).
            dimension_semantics=("parallel", "arbitrary"),
            vmem_limit_bytes=32 * 1024 * 1024,
        ),
    )(x_bf, *prepared)


def make_params(key, n_heads, E, mlp):
    ks = jax.random.split(key, 6)

    def unif(k, shape, fan_in):
        bound = 1.0 / (fan_in ** 0.5)
        return jax.random.uniform(k, shape, jnp.float32, -bound, bound)

    return {
        "w_in": unif(ks[0], (3 * E, E), E),     # nn.MultiheadAttention in_proj_weight
        "b_in": jnp.zeros((3 * E,), jnp.float32),
        "w_out": unif(ks[1], (E, E), E),        # out_proj
        "b_out": jnp.zeros((E,), jnp.float32),
        "g1": jnp.ones((E,), jnp.float32),      # norm1
        "beta1": jnp.zeros((E,), jnp.float32),
        "w1": unif(ks[2], (mlp, E), E),         # linear[0]
        "b1": unif(ks[3], (mlp,), E),
        "w2": unif(ks[4], (E, mlp), mlp),       # linear[2]
        "b2": unif(ks[5], (E,), mlp),
        "g2": jnp.ones((E,), jnp.float32),      # norm2
        "beta2": jnp.zeros((E,), jnp.float32),
    }


def reference(x, params, n_heads):
    """Pure-JAX f32 reference mirroring the torch forward (eval mode)."""
    B, S, E = x.shape
    d = E // n_heads

    def ln(y, g, b):
        mu = jnp.mean(y, axis=-1, keepdims=True)
        var = jnp.mean((y - mu) ** 2, axis=-1, keepdims=True)
        return (y - mu) / jnp.sqrt(var + 1e-5) * g + b

    qkv = x @ params["w_in"].T + params["b_in"]
    q, k, v = jnp.split(qkv, 3, axis=-1)
    q = q.reshape(B, S, n_heads, d).transpose(0, 2, 1, 3) / (d ** 0.5)
    k = k.reshape(B, S, n_heads, d).transpose(0, 2, 1, 3)
    v = v.reshape(B, S, n_heads, d).transpose(0, 2, 1, 3)
    p = jax.nn.softmax(q @ k.transpose(0, 1, 3, 2), axis=-1)
    attn = (p @ v).transpose(0, 2, 1, 3).reshape(B, S, E)
    attn = attn @ params["w_out"].T + params["b_out"]
    x1 = ln(attn + x, params["g1"], params["beta1"])
    h = jnp.maximum(x1 @ params["w1"].T + params["b1"], 0.0)
    h = h @ params["w2"].T + params["b2"]
    return ln(h + x1, params["g2"], params["beta2"])


if __name__ == "__main__":
    # Small but lane-friendly demo shapes: E, d, mlp, block_q are multiples of 128,
    # S = 256 so the q-tile grid axis (and the K/V cache reuse path) is exercised.
    B, S, E = 2, 256, 256
    n_heads, mlp_size = 2, 512

    key = jax.random.PRNGKey(0)
    kx, kp = jax.random.split(key)
    x = jax.random.normal(kx, (B, S, E), jnp.float32)
    params = make_params(kp, n_heads, E, mlp_size)

    prepared = prepare_weights(params, n_heads)        # one-time weight re-layout
    out = encoder_block(x, prepared, n_heads, block_q=128)
    out = jax.block_until_ready(out)

    ref = reference(x, params, n_heads)
    assert out.shape == (B, S, E)
    out_f32 = out.astype(jnp.float32)
    max_err = float(jnp.max(jnp.abs(out_f32 - ref)))
    # bf16 matmul operands + bf16 HBM I/O + approx reciprocal -> relaxed tolerance
    # against the pure-f32 reference.
    assert jnp.allclose(out_f32, ref, atol=5e-2, rtol=5e-2), \
        f"mismatch vs reference, max abs err = {max_err}"
    print("KERNEL_OK")
</pallas_src>

<mosaic_0001>
module attributes {stable_mosaic.version = 11 : i64} {
  func.func @encoder_block_kernel(%arg0: i32, %arg1: i32, %arg2: memref<1x256x256xbf16, #tpu.memory_space<vmem>>, %arg3: memref<256x256xbf16, #tpu.memory_space<vmem>>, %arg4: memref<1x256xf32, #tpu.memory_space<vmem>>, %arg5: memref<256x256xbf16, #tpu.memory_space<vmem>>, %arg6: memref<1x256xf32, #tpu.memory_space<vmem>>, %arg7: memref<256x256xbf16, #tpu.memory_space<vmem>>, %arg8: memref<1x256xf32, #tpu.memory_space<vmem>>, %arg9: memref<256x256xbf16, #tpu.memory_space<vmem>>, %arg10: memref<1x256xf32, #tpu.memory_space<vmem>>, %arg11: memref<1x256xf32, #tpu.memory_space<vmem>>, %arg12: memref<1x256xf32, #tpu.memory_space<vmem>>, %arg13: memref<256x512xbf16, #tpu.memory_space<vmem>>, %arg14: memref<1x512xf32, #tpu.memory_space<vmem>>, %arg15: memref<512x256xbf16, #tpu.memory_space<vmem>>, %arg16: memref<1x256xf32, #tpu.memory_space<vmem>>, %arg17: memref<1x256xf32, #tpu.memory_space<vmem>>, %arg18: memref<1x256xf32, #tpu.memory_space<vmem>>, %arg19: memref<1x128x256xbf16, #tpu.memory_space<vmem>>, %arg20: memref<256x256xbf16, #tpu.memory_space<vmem>>, %arg21: memref<256x256xbf16, #tpu.memory_space<vmem>>) attributes {dimension_semantics = [#tpu.dimension_semantics<parallel>, #tpu.dimension_semantics<arbitrary>], iteration_bounds = array<i64: 2, 2>, scalar_prefetch = 0 : i64, scratch_operands = 2 : i64, tpu.core_type = #tpu.core_type<tc>, window_params = [{transform_indices = @transform_0, window_bounds = array<i64: 1, 256, 256>}, {pipeline_mode = #tpu.pipeline_mode<synchronous>, transform_indices = @transform_1, window_bounds = array<i64: 256, 256>}, {pipeline_mode = #tpu.pipeline_mode<synchronous>, transform_indices = @transform_2, window_bounds = array<i64: 1, 256>}, {pipeline_mode = #tpu.pipeline_mode<synchronous>, transform_indices = @transform_3, window_bounds = array<i64: 256, 256>}, {pipeline_mode = #tpu.pipeline_mode<synchronous>, transform_indices = @transform_4, window_bounds = array<i64: 1, 256>}, {pipeline_mode = #tpu.pipeline_mode<synchronous>, transform_indices = @transform_5, window_bounds = array<i64: 256, 256>}, {pipeline_mode = #tpu.pipeline_mode<synchronous>, transform_indices = @transform_6, window_bounds = array<i64: 1, 256>}, {pipeline_mode = #tpu.pipeline_mode<synchronous>, transform_indices = @transform_7, window_bounds = array<i64: 256, 256>}, {pipeline_mode = #tpu.pipeline_mode<synchronous>, transform_indices = @transform_8, window_bounds = array<i64: 1, 256>}, {pipeline_mode = #tpu.pipeline_mode<synchronous>, transform_indices = @transform_9, window_bounds = array<i64: 1, 256>}, {pipeline_mode = #tpu.pipeline_mode<synchronous>, transform_indices = @transform_10, window_bounds = array<i64: 1, 256>}, {pipeline_mode = #tpu.pipeline_mode<synchronous>, transform_indices = @transform_11, window_bounds = array<i64: 256, 512>}, {pipeline_mode = #tpu.pipeline_mode<synchronous>, transform_indices = @transform_12, window_bounds = array<i64: 1, 512>}, {pipeline_mode = #tpu.pipeline_mode<synchronous>, transform_indices = @transform_13, window_bounds = array<i64: 512, 256>}, {pipeline_mode = #tpu.pipeline_mode<synchronous>, transform_indices = @transform_14, window_bounds = array<i64: 1, 256>}, {pipeline_mode = #tpu.pipeline_mode<synchronous>, transform_indices = @transform_15, window_bounds = array<i64: 1, 256>}, {pipeline_mode = #tpu.pipeline_mode<synchronous>, transform_indices = @transform_16, window_bounds = array<i64: 1, 256>}, {transform_indices = @transform_17, window_bounds = array<i64: 1, 128, 256>}]} {
    %c0_i32 = arith.constant 0 : i32
    %0 = arith.cmpi eq, %arg1, %c0_i32 : i32
    %1 = arith.extui %0 : i1 to i32
    %c0_i32_0 = arith.constant 0 : i32
    %2 = arith.cmpi ne, %1, %c0_i32_0 : i32
    scf.if %2 {
      %c0_58 = arith.constant 0 : index
      %c0_59 = arith.constant 0 : index
      %c0_60 = arith.constant 0 : index
      %119 = vector.load %arg2[%c0_58, %c0_59, %c0_60] : memref<1x256x256xbf16, #tpu.memory_space<vmem>>, vector<1x256x256xbf16>
      %120 = vector.shape_cast %119 : vector<1x256x256xbf16> to vector<256x256xbf16>
      %c0_61 = arith.constant 0 : index
      %c0_62 = arith.constant 0 : index
      %121 = vector.load %arg5[%c0_61, %c0_62] : memref<256x256xbf16, #tpu.memory_space<vmem>>, vector<256x256xbf16>
      %cst_63 = arith.constant dense<0.000000e+00> : vector<256x256xf32>
      %122 = tpu.matmul %120, %121, %cst_63 {dimension_numbers = #tpu.dot_dimension_numbers<[1], [0], [0], [1], [0, 0, 1, 1], [], []>} : vector<256x256xbf16>, vector<256x256xbf16>, vector<256x256xf32> -> vector<256x256xf32>
      %c0_64 = arith.constant 0 : index
      %c0_65 = arith.constant 0 : index
      %123 = vector.load %arg6[%c0_64, %c0_65] : memref<1x256xf32, #tpu.memory_space<vmem>>, vector<1x256xf32>
      %124 = vector.broadcast %123 : vector<1x256xf32> to vector<256x256xf32>
      %125 = arith.addf %122, %124 : vector<256x256xf32>
      %c0_66 = arith.constant 0 : index
      %c0_67 = arith.constant 0 : index
      %126 = vector.load %arg7[%c0_66, %c0_67] : memref<256x256xbf16, #tpu.memory_space<vmem>>, vector<256x256xbf16>
      %cst_68 = arith.constant dense<0.000000e+00> : vector<256x256xf32>
      %127 = tpu.matmul %120, %126, %cst_68 {dimension_numbers = #tpu.dot_dimension_numbers<[1], [0], [0], [1], [0, 0, 1, 1], [], []>} : vector<256x256xbf16>, vector<256x256xbf16>, vector<256x256xf32> -> vector<256x256xf32>
      %c0_69 = arith.constant 0 : index
      %c0_70 = arith.constant 0 : index
      %128 = vector.load %arg8[%c0_69, %c0_70] : memref<1x256xf32, #tpu.memory_space<vmem>>, vector<1x256xf32>
      %129 = vector.broadcast %128 : vector<1x256xf32> to vector<256x256xf32>
      %130 = arith.addf %127, %129 : vector<256x256xf32>
      %131 = tpu.transpose %125, [1, 0] : vector<256x256xf32> -> vector<256x256xf32>
      %132 = arith.truncf %131 : vector<256x256xf32> to vector<256x256xbf16>
      %c0_71 = arith.constant 0 : index
      %c0_72 = arith.constant 0 : index
      %133 = vector.load %arg20[%c0_71, %c0_72] : memref<256x256xbf16, #tpu.memory_space<vmem>>, vector<256x256xbf16>
      tpu.vector_store %arg20[%c0_71, %c0_72], %132 {strides = array<i32>} : memref<256x256xbf16, #tpu.memory_space<vmem>>, vector<256x256xbf16>,
      %134 = arith.truncf %130 : vector<256x256xf32> to vector<256x256xbf16>
      %c0_73 = arith.constant 0 : index
      %c0_74 = arith.constant 0 : index
      %135 = vector.load %arg21[%c0_73, %c0_74] : memref<256x256xbf16, #tpu.memory_space<vmem>>, vector<256x256xbf16>
      tpu.vector_store %arg21[%c0_73, %c0_74], %134 {strides = array<i32>} : memref<256x256xbf16, #tpu.memory_space<vmem>>, vector<256x256xbf16>,
    } else {
    }
    %c128_i32 = arith.constant 128 : i32
    %3 = arith.muli %arg1, %c128_i32 : i32
    %4 = tpu.assume_multiple %3, 128 : i32
    %c0 = arith.constant 0 : index
    %5 = arith.index_cast %4 : i32 to index
    %c0_1 = arith.constant 0 : index
    %6 = vector.load %arg2[%c0, %5, %c0_1] : memref<1x256x256xbf16, #tpu.memory_space<vmem>>, vector<1x128x256xbf16>
    %7 = vector.shape_cast %6 : vector<1x128x256xbf16> to vector<128x256xbf16>
    %c0_2 = arith.constant 0 : index
    %c0_3 = arith.constant 0 : index
    %8 = vector.load %arg3[%c0_2, %c0_3] : memref<256x256xbf16, #tpu.memory_space<vmem>>, vector<256x256xbf16>
    %cst = arith.constant dense<0.000000e+00> : vector<128x256xf32>
    %9 = tpu.matmul %7, %8, %cst {dimension_numbers = #tpu.dot_dimension_numbers<[1], [0], [0], [1], [0, 0, 1, 1], [], []>} : vector<128x256xbf16>, vector<256x256xbf16>, vector<128x256xf32> -> vector<128x256xf32>
    %c0_4 = arith.constant 0 : index
    %c0_5 = arith.constant 0 : index
    %10 = vector.load %arg4[%c0_4, %c0_5] : memref<1x256xf32, #tpu.memory_space<vmem>>, vector<1x256xf32>
    %11 = vector.broadcast %10 : vector<1x256xf32> to vector<128x256xf32>
    %12 = arith.addf %9, %11 : vector<128x256xf32>
    %13 = arith.truncf %12 : vector<128x256xf32> to vector<128x256xbf16>
    %14 = vector.extract_strided_slice %13 {offsets = [0, 0], sizes = [128, 128], strides = [1, 1]} : vector<128x256xbf16> to vector<128x128xbf16>
    %c0_6 = arith.constant 0 : index
    %c0_7 = arith.constant 0 : index
    %15 = vector.load %arg20[%c0_6, %c0_7] : memref<256x256xbf16, #tpu.memory_space<vmem>>, vector<128x256xbf16>
    %c0_8 = arith.constant 0 : index
    %c0_9 = arith.constant 0 : index
    %16 = vector.load %arg21[%c0_8, %c0_9] : memref<256x256xbf16, #tpu.memory_space<vmem>>, vector<256x128xbf16>
    %cst_10 = arith.constant dense<0.000000e+00> : vector<128x256xf32>
    %17 = tpu.matmul %14, %15, %cst_10 {dimension_numbers = #tpu.dot_dimension_numbers<[1], [0], [0], [1], [0, 0, 1, 1], [], []>} : vector<128x128xbf16>, vector<128x256xbf16>, vector<128x256xf32> -> vector<128x256xf32>
    %cst_11 = arith.constant dense<0xFF800000> : vector<128xf32>
    %18 = vector.multi_reduction <maximumf>, %17, %cst_11 [1] : vector<128x256xf32> to vector<128xf32>
    %19 = vector.shape_cast %18 : vector<128xf32> to vector<128x1xf32>
    %20 = vector.broadcast %19 : vector<128x1xf32> to vector<128x256xf32>
    %21 = arith.subf %17, %20 : vector<128x256xf32>
    %22 = math.exp %21 : vector<128x256xf32>
    %cst_12 = arith.constant dense<0.000000e+00> : vector<128xf32>
    %23 = vector.multi_reduction <add>, %22, %cst_12 [1] : vector<128x256xf32> to vector<128xf32>
    %24 = vector.shape_cast %23 : vector<128xf32> to vector<128x1xf32>
    %25 = tpu.reciprocal %24 {approx = true} : vector<128x1xf32> -> vector<128x1xf32>
    %26 = vector.broadcast %25 : vector<128x1xf32> to vector<128x256xf32>
    %27 = arith.mulf %22, %26 : vector<128x256xf32>
    %28 = arith.truncf %27 : vector<128x256xf32> to vector<128x256xbf16>
    %cst_13 = arith.constant dense<0.000000e+00> : vector<128x128xf32>
    %29 = tpu.matmul %28, %16, %cst_13 {dimension_numbers = #tpu.dot_dimension_numbers<[1], [0], [0], [1], [0, 0, 1, 1], [], []>} : vector<128x256xbf16>, vector<256x128xbf16>, vector<128x128xf32> -> vector<128x128xf32>
    %30 = arith.truncf %29 : vector<128x128xf32> to vector<128x128xbf16>
    %31 = vector.extract_strided_slice %13 {offsets = [0, 128], sizes = [128, 128], strides = [1, 1]} : vector<128x256xbf16> to vector<128x128xbf16>
    %c128 = arith.constant 128 : index
    %c0_14 = arith.constant 0 : index
    %32 = vector.load %arg20[%c128, %c0_14] : memref<256x256xbf16, #tpu.memory_space<vmem>>, vector<128x256xbf16>
    %c0_15 = arith.constant 0 : index
    %c128_16 = arith.constant 128 : index
    %33 = vector.load %arg21[%c0_15, %c128_16] : memref<256x256xbf16, #tpu.memory_space<vmem>>, vector<256x128xbf16>
    %cst_17 = arith.constant dense<0.000000e+00> : vector<128x256xf32>
    %34 = tpu.matmul %31, %32, %cst_17 {dimension_numbers = #tpu.dot_dimension_numbers<[1], [0], [0], [1], [0, 0, 1, 1], [], []>} : vector<128x128xbf16>, vector<128x256xbf16>, vector<128x256xf32> -> vector<128x256xf32>
    %cst_18 = arith.constant dense<0xFF800000> : vector<128xf32>
    %35 = vector.multi_reduction <maximumf>, %34, %cst_18 [1] : vector<128x256xf32> to vector<128xf32>
    %36 = vector.shape_cast %35 : vector<128xf32> to vector<128x1xf32>
    %37 = vector.broadcast %36 : vector<128x1xf32> to vector<128x256xf32>
    %38 = arith.subf %34, %37 : vector<128x256xf32>
    %39 = math.exp %38 : vector<128x256xf32>
    %cst_19 = arith.constant dense<0.000000e+00> : vector<128xf32>
    %40 = vector.multi_reduction <add>, %39, %cst_19 [1] : vector<128x256xf32> to vector<128xf32>
    %41 = vector.shape_cast %40 : vector<128xf32> to vector<128x1xf32>
    %42 = tpu.reciprocal %41 {approx = true} : vector<128x1xf32> -> vector<128x1xf32>
    %43 = vector.broadcast %42 : vector<128x1xf32> to vector<128x256xf32>
    %44 = arith.mulf %39, %43 : vector<128x256xf32>
    %45 = arith.truncf %44 : vector<128x256xf32> to vector<128x256xbf16>
    %cst_20 = arith.constant dense<0.000000e+00> : vector<128x128xf32>
    %46 = tpu.matmul %45, %33, %cst_20 {dimension_numbers = #tpu.dot_dimension_numbers<[1], [0], [0], [1], [0, 0, 1, 1], [], []>} : vector<128x256xbf16>, vector<256x128xbf16>, vector<128x128xf32> -> vector<128x128xf32>
    %47 = arith.truncf %46 : vector<128x128xf32> to vector<128x128xbf16>
    %48 = tpu.concatenate %30, %47 in 1 : vector<128x128xbf16>, vector<128x128xbf16> -> vector<128x256xbf16>
    %c0_21 = arith.constant 0 : index
    %c0_22 = arith.constant 0 : index
    %49 = vector.load %arg9[%c0_21, %c0_22] : memref<256x256xbf16, #tpu.memory_space<vmem>>, vector<256x256xbf16>
    %cst_23 = arith.constant dense<0.000000e+00> : vector<128x256xf32>
    %50 = tpu.matmul %48, %49, %cst_23 {dimension_numbers = #tpu.dot_dimension_numbers<[1], [0], [0], [1], [0, 0, 1, 1], [], []>} : vector<128x256xbf16>, vector<256x256xbf16>, vector<128x256xf32> -> vector<128x256xf32>
    %c0_24 = arith.constant 0 : index
    %c0_25 = arith.constant 0 : index
    %51 = vector.load %arg10[%c0_24, %c0_25] : memref<1x256xf32, #tpu.memory_space<vmem>>, vector<1x256xf32>
    %52 = vector.broadcast %51 : vector<1x256xf32> to vector<128x256xf32>
    %53 = arith.addf %50, %52 : vector<128x256xf32>
    %54 = arith.extf %7 : vector<128x256xbf16> to vector<128x256xf32>
    %55 = arith.addf %53, %54 : vector<128x256xf32>
    %c0_26 = arith.constant 0 : index
    %c0_27 = arith.constant 0 : index
    %56 = vector.load %arg11[%c0_26, %c0_27] : memref<1x256xf32, #tpu.memory_space<vmem>>, vector<1x256xf32>
    %c0_28 = arith.constant 0 : index
    %c0_29 = arith.constant 0 : index
    %57 = vector.load %arg12[%c0_28, %c0_29] : memref<1x256xf32, #tpu.memory_space<vmem>>, vector<1x256xf32>
    %cst_30 = arith.constant dense<0.000000e+00> : vector<128xf32>
    %58 = vector.multi_reduction <add>, %55, %cst_30 [1] : vector<128x256xf32> to vector<128xf32>
    %59 = vector.shape_cast %58 : vector<128xf32> to vector<128x1xf32>
    %cst_31 = arith.constant 2.560000e+02 : f32
    %60 = vector.broadcast %cst_31 : f32 to vector<128x1xf32>
    %61 = arith.divf %59, %60 : vector<128x1xf32>
    %62 = vector.broadcast %61 : vector<128x1xf32> to vector<128x256xf32>
    %63 = arith.subf %55, %62 : vector<128x256xf32>
    %64 = arith.mulf %63, %63 : vector<128x256xf32>
    %cst_32 = arith.constant dense<0.000000e+00> : vector<128xf32>
    %65 = vector.multi_reduction <add>, %64, %cst_32 [1] : vector<128x256xf32> to vector<128xf32>
    %66 = vector.shape_cast %65 : vector<128xf32> to vector<128x1xf32>
    %cst_33 = arith.constant 2.560000e+02 : f32
    %67 = vector.broadcast %cst_33 : f32 to vector<128x1xf32>
    %68 = arith.divf %66, %67 : vector<128x1xf32>
    %cst_34 = arith.constant 9.99999974E-6 : f32
    %69 = vector.broadcast %cst_34 : f32 to vector<128x1xf32>
    %70 = arith.addf %68, %69 : vector<128x1xf32>
    %71 = math.rsqrt %70 : vector<128x1xf32>
    %72 = vector.broadcast %71 : vector<128x1xf32> to vector<128x256xf32>
    %73 = arith.mulf %63, %72 : vector<128x256xf32>
    %74 = vector.broadcast %56 : vector<1x256xf32> to vector<128x256xf32>
    %75 = arith.mulf %73, %74 : vector<128x256xf32>
    %76 = vector.broadcast %57 : vector<1x256xf32> to vector<128x256xf32>
    %77 = arith.addf %75, %76 : vector<128x256xf32>
    %78 = arith.truncf %77 : vector<128x256xf32> to vector<128x256xbf16>
    %c0_35 = arith.constant 0 : index
    %c0_36 = arith.constant 0 : index
    %79 = vector.load %arg13[%c0_35, %c0_36] : memref<256x512xbf16, #tpu.memory_space<vmem>>, vector<256x512xbf16>
    %cst_37 = arith.constant dense<0.000000e+00> : vector<128x512xf32>
    %80 = tpu.matmul %78, %79, %cst_37 {dimension_numbers = #tpu.dot_dimension_numbers<[1], [0], [0], [1], [0, 0, 1, 1], [], []>} : vector<128x256xbf16>, vector<256x512xbf16>, vector<128x512xf32> -> vector<128x512xf32>
    %c0_38 = arith.constant 0 : index
    %c0_39 = arith.constant 0 : index
    %81 = vector.load %arg14[%c0_38, %c0_39] : memref<1x512xf32, #tpu.memory_space<vmem>>, vector<1x512xf32>
    %82 = vector.broadcast %81 : vector<1x512xf32> to vector<128x512xf32>
    %83 = arith.addf %80, %82 : vector<128x512xf32>
    %cst_40 = arith.constant 0.000000e+00 : f32
    %84 = vector.broadcast %cst_40 : f32 to vector<128x512xf32>
    %85 = arith.maximumf %83, %84 : vector<128x512xf32>
    %86 = arith.truncf %85 : vector<128x512xf32> to vector<128x512xbf16>
    %c0_41 = arith.constant 0 : index
    %c0_42 = arith.constant 0 : index
    %87 = vector.load %arg15[%c0_41, %c0_42] : memref<512x256xbf16, #tpu.memory_space<vmem>>, vector<512x256xbf16>
    %cst_43 = arith.constant dense<0.000000e+00> : vector<128x256xf32>
    %88 = tpu.matmul %86, %87, %cst_43 {dimension_numbers = #tpu.dot_dimension_numbers<[1], [0], [0], [1], [0, 0, 1, 1], [], []>} : vector<128x512xbf16>, vector<512x256xbf16>, vector<128x256xf32> -> vector<128x256xf32>
    %c0_44 = arith.constant 0 : index
    %c0_45 = arith.constant 0 : index
    %89 = vector.load %arg16[%c0_44, %c0_45] : memref<1x256xf32, #tpu.memory_space<vmem>>, vector<1x256xf32>
    %90 = vector.broadcast %89 : vector<1x256xf32> to vector<128x256xf32>
    %91 = arith.addf %88, %90 : vector<128x256xf32>
    %92 = arith.addf %91, %77 : vector<128x256xf32>
    %c0_46 = arith.constant 0 : index
    %c0_47 = arith.constant 0 : index
    %93 = vector.load %arg17[%c0_46, %c0_47] : memref<1x256xf32, #tpu.memory_space<vmem>>, vector<1x256xf32>
    %c0_48 = arith.constant 0 : index
    %c0_49 = arith.constant 0 : index
    %94 = vector.load %arg18[%c0_48, %c0_49] : memref<1x256xf32, #tpu.memory_space<vmem>>, vector<1x256xf32>
    %cst_50 = arith.constant dense<0.000000e+00> : vector<128xf32>
    %95 = vector.multi_reduction <add>, %92, %cst_50 [1] : vector<128x256xf32> to vector<128xf32>
    %96 = vector.shape_cast %95 : vector<128xf32> to vector<128x1xf32>
    %cst_51 = arith.constant 2.560000e+02 : f32
    %97 = vector.broadcast %cst_51 : f32 to vector<128x1xf32>
    %98 = arith.divf %96, %97 : vector<128x1xf32>
    %99 = vector.broadcast %98 : vector<128x1xf32> to vector<128x256xf32>
    %100 = arith.subf %92, %99 : vector<128x256xf32>
    %101 = arith.mulf %100, %100 : vector<128x256xf32>
    %cst_52 = arith.constant dense<0.000000e+00> : vector<128xf32>
    %102 = vector.multi_reduction <add>, %101, %cst_52 [1] : vector<128x256xf32> to vector<128xf32>
    %103 = vector.shape_cast %102 : vector<128xf32> to vector<128x1xf32>
    %cst_53 = arith.constant 2.560000e+02 : f32
    %104 = vector.broadcast %cst_53 : f32 to vector<128x1xf32>
    %105 = arith.divf %103, %104 : vector<128x1xf32>
    %cst_54 = arith.constant 9.99999974E-6 : f32
    %106 = vector.broadcast %cst_54 : f32 to vector<128x1xf32>
    %107 = arith.addf %105, %106 : vector<128x1xf32>
    %108 = math.rsqrt %107 : vector<128x1xf32>
    %109 = vector.broadcast %108 : vector<128x1xf32> to vector<128x256xf32>
    %110 = arith.mulf %100, %109 : vector<128x256xf32>
    %111 = vector.broadcast %93 : vector<1x256xf32> to vector<128x256xf32>
    %112 = arith.mulf %110, %111 : vector<128x256xf32>
    %113 = vector.broadcast %94 : vector<1x256xf32> to vector<128x256xf32>
    %114 = arith.addf %112, %113 : vector<128x256xf32>
    %115 = arith.truncf %114 : vector<128x256xf32> to vector<128x256xbf16>
    %c0_55 = arith.constant 0 : index
    %c0_56 = arith.constant 0 : index
    %c0_57 = arith.constant 0 : index
    %116 = vector.load %arg19[%c0_55, %c0_56, %c0_57] : memref<1x128x256xbf16, #tpu.memory_space<vmem>>, vector<1x128x256xbf16>
    %117 = vector.shape_cast %116 : vector<1x128x256xbf16> to vector<128x256xbf16>
    %118 = vector.shape_cast %115 : vector<128x256xbf16> to vector<1x128x256xbf16>
    tpu.vector_store %arg19[%c0_55, %c0_56, %c0_57], %118 {strides = array<i32>} : memref<1x128x256xbf16, #tpu.memory_space<vmem>>, vector<1x128x256xbf16>,
    return
  }
  func.func @transform_0(%arg0: i32, %arg1: i32) -> (i32, i32, i32) {
    %c0_i32 = arith.constant 0 : i32
    %c0_i32_0 = arith.constant 0 : i32
    %c0_i32_1 = arith.constant 0 : i32
    return %arg0, %c0_i32, %c0_i32_0 : i32, i32, i32
  }
  func.func @transform_1(%arg0: i32, %arg1: i32) -> (i32, i32) {
    %c0_i32 = arith.constant 0 : i32
    %c0_i32_0 = arith.constant 0 : i32
    %c0_i32_1 = arith.constant 0 : i32
    return %c0_i32, %c0_i32_0 : i32, i32
  }
  func.func @transform_2(%arg0: i32, %arg1: i32) -> (i32, i32) {
    %c0_i32 = arith.constant 0 : i32
    %c0_i32_0 = arith.constant 0 : i32
    %c0_i32_1 = arith.constant 0 : i32
    return %c0_i32, %c0_i32_0 : i32, i32
  }
  func.func @transform_3(%arg0: i32, %arg1: i32) -> (i32, i32) {
    %c0_i32 = arith.constant 0 : i32
    %c0_i32_0 = arith.constant 0 : i32
    %c0_i32_1 = arith.constant 0 : i32
    return %c0_i32, %c0_i32_0 : i32, i32
  }
  func.func @transform_4(%arg0: i32, %arg1: i32) -> (i32, i32) {
    %c0_i32 = arith.constant 0 : i32
    %c0_i32_0 = arith.constant 0 : i32
    %c0_i32_1 = arith.constant 0 : i32
    return %c0_i32, %c0_i32_0 : i32, i32
  }
  func.func @transform_5(%arg0: i32, %arg1: i32) -> (i32, i32) {
    %c0_i32 = arith.constant 0 : i32
    %c0_i32_0 = arith.constant 0 : i32
    %c0_i32_1 = arith.constant 0 : i32
    return %c0_i32, %c0_i32_0 : i32, i32
  }
  func.func @transform_6(%arg0: i32, %arg1: i32) -> (i32, i32) {
    %c0_i32 = arith.constant 0 : i32
    %c0_i32_0 = arith.constant 0 : i32
    %c0_i32_1 = arith.constant 0 : i32
    return %c0_i32, %c0_i32_0 : i32, i32
  }
  func.func @transform_7(%arg0: i32, %arg1: i32) -> (i32, i32) {
    %c0_i32 = arith.constant 0 : i32
    %c0_i32_0 = arith.constant 0 : i32
    %c0_i32_1 = arith.constant 0 : i32
    return %c0_i32, %c0_i32_0 : i32, i32
  }
  func.func @transform_8(%arg0: i32, %arg1: i32) -> (i32, i32) {
    %c0_i32 = arith.constant 0 : i32
    %c0_i32_0 = arith.constant 0 : i32
    %c0_i32_1 = arith.constant 0 : i32
    return %c0_i32, %c0_i32_0 : i32, i32
  }
  func.func @transform_9(%arg0: i32, %arg1: i32) -> (i32, i32) {
    %c0_i32 = arith.constant 0 : i32
    %c0_i32_0 = arith.constant 0 : i32
    %c0_i32_1 = arith.constant 0 : i32
    return %c0_i32, %c0_i32_0 : i32, i32
  }
  func.func @transform_10(%arg0: i32, %arg1: i32) -> (i32, i32) {
    %c0_i32 = arith.constant 0 : i32
    %c0_i32_0 = arith.constant 0 : i32
    %c0_i32_1 = arith.constant 0 : i32
    return %c0_i32, %c0_i32_0 : i32, i32
  }
  func.func @transform_11(%arg0: i32, %arg1: i32) -> (i32, i32) {
    %c0_i32 = arith.constant 0 : i32
    %c0_i32_0 = arith.constant 0 : i32
    %c0_i32_1 = arith.constant 0 : i32
    return %c0_i32, %c0_i32_0 : i32, i32
  }
  func.func @transform_12(%arg0: i32, %arg1: i32) -> (i32, i32) {
    %c0_i32 = arith.constant 0 : i32
    %c0_i32_0 = arith.constant 0 : i32
    %c0_i32_1 = arith.constant 0 : i32
    return %c0_i32, %c0_i32_0 : i32, i32
  }
  func.func @transform_13(%arg0: i32, %arg1: i32) -> (i32, i32) {
    %c0_i32 = arith.constant 0 : i32
    %c0_i32_0 = arith.constant 0 : i32
    %c0_i32_1 = arith.constant 0 : i32
    return %c0_i32, %c0_i32_0 : i32, i32
  }
  func.func @transform_14(%arg0: i32, %arg1: i32) -> (i32, i32) {
    %c0_i32 = arith.constant 0 : i32
    %c0_i32_0 = arith.constant 0 : i32
    %c0_i32_1 = arith.constant 0 : i32
    return %c0_i32, %c0_i32_0 : i32, i32
  }
  func.func @transform_15(%arg0: i32, %arg1: i32) -> (i32, i32) {
    %c0_i32 = arith.constant 0 : i32
    %c0_i32_0 = arith.constant 0 : i32
    %c0_i32_1 = arith.constant 0 : i32
    return %c0_i32, %c0_i32_0 : i32, i32
  }
  func.func @transform_16(%arg0: i32, %arg1: i32) -> (i32, i32) {
    %c0_i32 = arith.constant 0 : i32
    %c0_i32_0 = arith.constant 0 : i32
    %c0_i32_1 = arith.constant 0 : i32
    return %c0_i32, %c0_i32_0 : i32, i32
  }
  func.func @transform_17(%arg0: i32, %arg1: i32) -> (i32, i32, i32) {
    %c0_i32 = arith.constant 0 : i32
    %c0_i32_0 = arith.constant 0 : i32
    return %arg0, %arg1, %c0_i32 : i32, i32, i32
  }
}

</mosaic_0001>

<llo_original>
// kernel: tpu_custom_call.1
$region0: #{tpu_custom_call.1}
  #allocation0 [shape = 'u32[]', space=smem, size = 0x4, offset = 0x4, fixed_abs, tag = 'smem constant byte address 0x4 - core index']
  #allocation1 [shape = 'u32[144,128]{1,0:T(1,128)}', space=vmem, size = 0x12000, scoped, tag = 'internal scratch']
  #allocation2 [shape = 'bf16[256,256]{1,0:T(16,128)(2,1)}', space=vmem, size = 0x20000, scoped, tag = 'scratch operand']
  #allocation3 [shape = 'bf16[256,256]{1,0:T(16,128)(2,1)}', space=vmem, size = 0x20000, scoped, tag = 'scratch operand']
  %s0 = inlined_call_operand.hbm [shape: bf16[2,256,256], index: 0, kind: input, shape index: {}]
  %s1 = inlined_call_operand.hbm [shape: bf16[256,256], index: 1, kind: input, shape index: {}]
  %s2 = inlined_call_operand.vmem [shape: f32[1,256], index: 2, kind: input, shape index: {}]
  %s3 = inlined_call_operand.hbm [shape: bf16[256,256], index: 3, kind: input, shape index: {}]
  %s4 = inlined_call_operand.vmem [shape: f32[1,256], index: 4, kind: input, shape index: {}]
  %s5 = inlined_call_operand.hbm [shape: bf16[256,256], index: 5, kind: input, shape index: {}]
  %s6 = inlined_call_operand.vmem [shape: f32[1,256], index: 6, kind: input, shape index: {}]
  %s7 = inlined_call_operand.hbm [shape: bf16[256,256], index: 7, kind: input, shape index: {}]
  %s8 = inlined_call_operand.vmem [shape: f32[1,256], index: 8, kind: input, shape index: {}]
  %s9 = inlined_call_operand.vmem [shape: f32[1,256], index: 9, kind: input, shape index: {}]
  %s10 = inlined_call_operand.vmem [shape: f32[1,256], index: 10, kind: input, shape index: {}]
  %s11 = inlined_call_operand.hbm [shape: bf16[256,512], index: 11, kind: input, shape index: {}]
  %s12 = inlined_call_operand.vmem [shape: f32[1,512], index: 12, kind: input, shape index: {}]
  %s13 = inlined_call_operand.hbm [shape: bf16[512,256], index: 13, kind: input, shape index: {}]
  %s14 = inlined_call_operand.vmem [shape: f32[1,256], index: 14, kind: input, shape index: {}]
  %s15 = inlined_call_operand.vmem [shape: f32[1,256], index: 15, kind: input, shape index: {}]
  %s16 = inlined_call_operand.vmem [shape: f32[1,256], index: 16, kind: input, shape index: {}]
  %s17 = inlined_call_operand.hbm [shape: bf16[2,256,256], index: 17, kind: output, shape index: {}]
  %s18 = sld [smem:[#allocation0]]
  $region133: #{tpu_custom_call.1} parent=0
    _
  %s20 = ssub.s32 1, %s18
  %s21 = scalar_select 0, %s20, %s18
  $region1: #{tpu_custom_call.1} parent=0
    #allocation4 [shape = 'u8[262144]{0}', space=vmem, size = 0x40000, scoped, tag = 'input window, operand 0']
    #allocation5 [shape = 's32[2]{0}', space=sflag, size = 0x8, scoped, tag = 'scoped memory for tpu_custom_call.1']
    #allocation6 [shape = 's32[2]{0}', space=sflag, size = 0x8, scoped, tag = 'scoped memory for tpu_custom_call.1']
    #allocation7 [shape = 'u8[131072]{0}', space=vmem, size = 0x20000, scoped, tag = 'input window, operand 1, single buffered']
    #allocation8 [shape = 's32[1]{0}', space=sflag, size = 0x4, scoped, tag = 'scoped memory for tpu_custom_call.1']
    #allocation9 [shape = 'u8[131072]{0}', space=vmem, size = 0x20000, scoped, tag = 'input window, operand 3, single buffered']
    #allocation10 [shape = 'u8[131072]{0}', space=vmem, size = 0x20000, scoped, tag = 'input window, operand 5, single buffered']
    #allocation11 [shape = 's32[1]{0}', space=sflag, size = 0x4, scoped, tag = 'scoped memory for tpu_custom_call.1']
    #allocation12 [shape = 'u8[131072]{0}', space=vmem, size = 0x20000, scoped, tag = 'input window, operand 7, single buffered']
    #allocation13 [shape = 'u8[262144]{0}', space=vmem, size = 0x40000, scoped, tag = 'input window, operand 11, single buffered']
    #allocation14 [shape = 's32[1]{0}', space=sflag, size = 0x4, scoped, tag = 'scoped memory for tpu_custom_call.1']
    #allocation15 [shape = 'u8[262144]{0}', space=vmem, size = 0x40000, scoped, tag = 'input window, operand 13, single buffered']
    #allocation16 [shape = 'u8[131072]{0}', space=vmem, size = 0x20000, scoped, tag = 'output window, operand 0']
    %22 = vsyncpa [#allocation5], 0
    %s23 = scalar_lea.sflag [#allocation5], 1
    %24 = vsyncpa %s23, 0
    %25 = vsyncpa [#allocation8], 0
    %26 = vsyncpa [#allocation11], 0
    %27 = vsyncpa [#allocation14], 0
    %28 = vsyncpa [#allocation6], 0
    %s29 = scalar_lea.sflag [#allocation6], 1
    %30 = vsyncpa %s29, 0
    loop: start=0, step=1, limit=6
    $region2: #{tpu_custom_call.1} parent=1 // loop_pre_header
      _
    $region3: #{tpu_custom_call.1} parent=1 // loop_header
      %s32 = sphi 0, %s36
      %p33 = scmp.ge.s32.totalorder %s32, 6
      %s39 = sphi 0, %s51
      %s40 = sphi 0, %s47
      %s41 = sphi 0, %s39
      %s42 = sphi 0, %s40
      %s43 = sphi 0, %s41
      %s44 = sphi 0, %s42
      %s54 = sphi 0, %s56
      %s57 = sphi 0, %s54
      %s58 = sphi 0, %s57
      %s74 = sphi 0, %s58
      %s78 = sphi 0, %s78
      %s80 = sphi 0, %s78
      %s81 = sphi 0, %s80
      %s95 = sphi 0, %s81
      %s99 = sphi 0, %s99
      %s101 = sphi 0, %s99
      %s102 = sphi 0, %s101
      %s116 = sphi 0, %s102
      %s120 = sphi 0, %s120
      %s122 = sphi 0, %s120
      %s123 = sphi 0, %s122
      %s137 = sphi 0, %s123
      %s141 = sphi 0, %s141
      %s143 = sphi 0, %s141
      %s144 = sphi 0, %s143
      %s158 = sphi 0, %s144
      %s162 = sphi 0, %s162
      %s164 = sphi 0, %s162
      %s165 = sphi 0, %s164
      %s179 = sphi 0, %s165
      %s183 = sphi 0, %s183
      %s185 = sphi 0, %s183
      %s186 = sphi 0, %s185
      %s200 = sphi 0, %s186
      %s204 = sphi 0, %s204
      %s206 = sphi 0, %s204
      %s207 = sphi 0, %s206
      %s221 = sphi 0, %s207
      %s225 = sphi 0, %s225
      %s227 = sphi 0, %s225
      %s228 = sphi 0, %s227
      %s242 = sphi 0, %s228
      %s246 = sphi 0, %s246
      %s248 = sphi 0, %s246
      %s249 = sphi 0, %s248
      %s263 = sphi 0, %s249
      %s267 = sphi 0, %s267
      %s269 = sphi 0, %s267
      %s270 = sphi 0, %s269
      %s284 = sphi 0, %s270
      %s288 = sphi 0, %s288
      %s290 = sphi 0, %s288
      %s291 = sphi 0, %s290
      %s305 = sphi 0, %s291
      %s309 = sphi 0, %s309
      %s311 = sphi 0, %s309
      %s312 = sphi 0, %s311
      %s326 = sphi 0, %s312
      %s330 = sphi 0, %s330
      %s332 = sphi 0, %s330
      %s333 = sphi 0, %s332
      %s347 = sphi 0, %s333
      %s351 = sphi 0, %s351
      %s353 = sphi 0, %s351
      %s354 = sphi 0, %s353
      %s368 = sphi 0, %s354
      %s372 = sphi 0, %s372
      %s374 = sphi 0, %s372
      %s375 = sphi 0, %s374
      %s389 = sphi 0, %s375
      %s393 = sphi 0, %s393
      %s395 = sphi 0, %s393
      %s396 = sphi 0, %s395
      %s410 = sphi 0, %s396
      %s418 = sphi 0, %s420
      %s421 = sphi 0, %s418
      %s422 = sphi 0, %s421
      %s438 = sphi 0, %s422
    $region4: #{tpu_custom_call.1} parent=1 // loop_header_branch
      %35 = sbr.rel (%p33) target = $region8
    $region5: #{tpu_custom_call.1} parent=1 // loop_body
      %s37 = ssub.s32 %s32, 1
      %s38 = ssub.s32 %s32, 2
      %s45 = sadd.s32 1, %s40
      %p46 = scmp.ge.s32.totalorder %s45, 2
      %s47 = scalar_select %p46, 0, %s45
      %s48 = sadd.s32 1, %s39
      %s49 = scalar_select %p46, %s48, %s39
      %p50 = scmp.ge.s32.totalorder %s49, 2
      %s51 = scalar_select %p50, 0, %s49
      %s52 = ssub.s32 %s39, %s51
      %p53 = scmp.eq.s32.totalorder %s52, 0
      %s55 = sadd.s32 %s54, 1
      %s56 = scalar_select %p53, %s54, %s55
      %p59 = pneg %p53
      %p60 = scmp.eq.s32.totalorder %s32, 3
      %p61 = por %p59, %p60
      %p62 = scmp.ne.s32.totalorder %s54, %s57
      %p63 = scmp.eq.s32.totalorder %s32, 0
      %p64 = por %p62, %p63
      %p65 = scmp.ne.s32.totalorder %s54, %s57
      %p66 = scmp.eq.s32.totalorder %s37, 3
      %p67 = por %p65, %p66
      %p68 = scmp.ne.s32.totalorder %s57, %s58
      %p69 = scmp.eq.s32.totalorder %s37, 0
      %p70 = por %p68, %p69
      %p71 = scmp.ne.s32.totalorder %s57, %s58
      %p72 = scmp.eq.s32.totalorder %s38, 3
      %p73 = por %p71, %p72
      %p75 = scmp.ne.s32.totalorder %s58, %s74
      %p76 = scmp.eq.s32.totalorder %s38, 0
      %p77 = por %p75, %p76
      %s79 = sadd.s32 %s78, 1
      %p82 = scmp.eq.s32.totalorder %s32, 3
      %p83 = scmp.ne.s32.totalorder %s78, %s80
      %p84 = scmp.eq.s32.totalorder %s32, 0
      %p85 = por %p83, %p84
      %p86 = scmp.ne.s32.totalorder %s78, %s80
      %p87 = scmp.eq.s32.totalorder %s37, 3
      %p88 = por %p86, %p87
      %p89 = scmp.ne.s32.totalorder %s80, %s81
      %p90 = scmp.eq.s32.totalorder %s37, 0
      %p91 = por %p89, %p90
      %p92 = scmp.ne.s32.totalorder %s80, %s81
      %p93 = scmp.eq.s32.totalorder %s38, 3
      %p94 = por %p92, %p93
      %p96 = scmp.ne.s32.totalorder %s81, %s95
      %p97 = scmp.eq.s32.totalorder %s38, 0
      %p98 = por %p96, %p97
      %s100 = sadd.s32 %s99, 1
      %p103 = scmp.eq.s32.totalorder %s32, 3
      %p104 = scmp.ne.s32.totalorder %s99, %s101
      %p105 = scmp.eq.s32.totalorder %s32, 0
      %p106 = por %p104, %p105
      %p107 = scmp.ne.s32.totalorder %s99, %s101
      %p108 = scmp.eq.s32.totalorder %s37, 3
      %p109 = por %p107, %p108
      %p110 = scmp.ne.s32.totalorder %s101, %s102
      %p111 = scmp.eq.s32.totalorder %s37, 0
      %p112 = por %p110, %p111
      %p113 = scmp.ne.s32.totalorder %s101, %s102
      %p114 = scmp.eq.s32.totalorder %s38, 3
      %p115 = por %p113, %p114
      %p117 = scmp.ne.s32.totalorder %s102, %s116
      %p118 = scmp.eq.s32.totalorder %s38, 0
      %p119 = por %p117, %p118
      %s121 = sadd.s32 %s120, 1
      %p124 = scmp.eq.s32.totalorder %s32, 3
      %p125 = scmp.ne.s32.totalorder %s120, %s122
      %p126 = scmp.eq.s32.totalorder %s32, 0
      %p127 = por %p125, %p126
      %p128 = scmp.ne.s32.totalorder %s120, %s122
      %p129 = scmp.eq.s32.totalorder %s37, 3
      %p130 = por %p128, %p129
      %p131 = scmp.ne.s32.totalorder %s122, %s123
      %p132 = scmp.eq.s32.totalorder %s37, 0
      %p133 = por %p131, %p132
      %p134 = scmp.ne.s32.totalorder %s122, %s123
      %p135 = scmp.eq.s32.totalorder %s38, 3
      %p136 = por %p134, %p135
      %p138 = scmp.ne.s32.totalorder %s123, %s137
      %p139 = scmp.eq.s32.totalorder %s38, 0
      %p140 = por %p138, %p139
      %s142 = sadd.s32 %s141, 1
      %p145 = scmp.eq.s32.totalorder %s32, 3
      %p146 = scmp.ne.s32.totalorder %s141, %s143
      %p147 = scmp.eq.s32.totalorder %s32, 0
      %p148 = por %p146, %p147
      %p149 = scmp.ne.s32.totalorder %s141, %s143
      %p150 = scmp.eq.s32.totalorder %s37, 3
      %p151 = por %p149, %p150
      %p152 = scmp.ne.s32.totalorder %s143, %s144
      %p153 = scmp.eq.s32.totalorder %s37, 0
      %p154 = por %p152, %p153
      %p155 = scmp.ne.s32.totalorder %s143, %s144
      %p156 = scmp.eq.s32.totalorder %s38, 3
      %p157 = por %p155, %p156
      %p159 = scmp.ne.s32.totalorder %s144, %s158
      %p160 = scmp.eq.s32.totalorder %s38, 0
      %p161 = por %p159, %p160
      %s163 = sadd.s32 %s162, 1
      %p166 = scmp.eq.s32.totalorder %s32, 3
      %p167 = scmp.ne.s32.totalorder %s162, %s164
      %p168 = scmp.eq.s32.totalorder %s32, 0
      %p169 = por %p167, %p168
      %p170 = scmp.ne.s32.totalorder %s162, %s164
      %p171 = scmp.eq.s32.totalorder %s37, 3
      %p172 = por %p170, %p171
      %p173 = scmp.ne.s32.totalorder %s164, %s165
      %p174 = scmp.eq.s32.totalorder %s37, 0
      %p175 = por %p173, %p174
      %p176 = scmp.ne.s32.totalorder %s164, %s165
      %p177 = scmp.eq.s32.totalorder %s38, 3
      %p178 = por %p176, %p177
      %p180 = scmp.ne.s32.totalorder %s165, %s179
      %p181 = scmp.eq.s32.totalorder %s38, 0
      %p182 = por %p180, %p181
      %s184 = sadd.s32 %s183, 1
      %p187 = scmp.eq.s32.totalorder %s32, 3
      %p188 = scmp.ne.s32.totalorder %s183, %s185
      %p189 = scmp.eq.s32.totalorder %s32, 0
      %p190 = por %p188, %p189
      %p191 = scmp.ne.s32.totalorder %s183, %s185
      %p192 = scmp.eq.s32.totalorder %s37, 3
      %p193 = por %p191, %p192
      %p194 = scmp.ne.s32.totalorder %s185, %s186
      %p195 = scmp.eq.s32.totalorder %s37, 0
      %p196 = por %p194, %p195
      %p197 = scmp.ne.s32.totalorder %s185, %s186
      %p198 = scmp.eq.s32.totalorder %s38, 3
      %p199 = por %p197, %p198
      %p201 = scmp.ne.s32.totalorder %s186, %s200
      %p202 = scmp.eq.s32.totalorder %s38, 0
      %p203 = por %p201, %p202
      %s205 = sadd.s32 %s204, 1
      %p208 = scmp.eq.s32.totalorder %s32, 3
      %p209 = scmp.ne.s32.totalorder %s204, %s206
      %p210 = scmp.eq.s32.totalorder %s32, 0
      %p211 = por %p209, %p210
      %p212 = scmp.ne.s32.totalorder %s204, %s206
      %p213 = scmp.eq.s32.totalorder %s37, 3
      %p214 = por %p212, %p213
      %p215 = scmp.ne.s32.totalorder %s206, %s207
      %p216 = scmp.eq.s32.totalorder %s37, 0
      %p217 = por %p215, %p216
      %p218 = scmp.ne.s32.totalorder %s206, %s207
      %p219 = scmp.eq.s32.totalorder %s38, 3
      %p220 = por %p218, %p219
      %p222 = scmp.ne.s32.totalorder %s207, %s221
      %p223 = scmp.eq.s32.totalorder %s38, 0
      %p224 = por %p222, %p223
      %s226 = sadd.s32 %s225, 1
      %p229 = scmp.eq.s32.totalorder %s32, 3
      %p230 = scmp.ne.s32.totalorder %s225, %s227
      %p231 = scmp.eq.s32.totalorder %s32, 0
      %p232 = por %p230, %p231
      %p233 = scmp.ne.s32.totalorder %s225, %s227
      %p234 = scmp.eq.s32.totalorder %s37, 3
      %p235 = por %p233, %p234
      %p236 = scmp.ne.s32.totalorder %s227, %s228
      %p237 = scmp.eq.s32.totalorder %s37, 0
      %p238 = por %p236, %p237
      %p239 = scmp.ne.s32.totalorder %s227, %s228
      %p240 = scmp.eq.s32.totalorder %s38, 3
      %p241 = por %p239, %p240
      %p243 = scmp.ne.s32.totalorder %s228, %s242
      %p244 = scmp.eq.s32.totalorder %s38, 0
      %p245 = por %p243, %p244
      %s247 = sadd.s32 %s246, 1
      %p250 = scmp.eq.s32.totalorder %s32, 3
      %p251 = scmp.ne.s32.totalorder %s246, %s248
      %p252 = scmp.eq.s32.totalorder %s32, 0
      %p253 = por %p251, %p252
      %p254 = scmp.ne.s32.totalorder %s246, %s248
      %p255 = scmp.eq.s32.totalorder %s37, 3
      %p256 = por %p254, %p255
      %p257 = scmp.ne.s32.totalorder %s248, %s249
      %p258 = scmp.eq.s32.totalorder %s37, 0
      %p259 = por %p257, %p258
      %p260 = scmp.ne.s32.totalorder %s248, %s249
      %p261 = scmp.eq.s32.totalorder %s38, 3
      %p262 = por %p260, %p261
      %p264 = scmp.ne.s32.totalorder %s249, %s263
      %p265 = scmp.eq.s32.totalorder %s38, 0
      %p266 = por %p264, %p265
      %s268 = sadd.s32 %s267, 1
      %p271 = scmp.eq.s32.totalorder %s32, 3
      %p272 = scmp.ne.s32.totalorder %s267, %s269
      %p273 = scmp.eq.s32.totalorder %s32, 0
      %p274 = por %p272, %p273
      %p275 = scmp.ne.s32.totalorder %s267, %s269
      %p276 = scmp.eq.s32.totalorder %s37, 3
      %p277 = por %p275, %p276
      %p278 = scmp.ne.s32.totalorder %s269, %s270
      %p279 = scmp.eq.s32.totalorder %s37, 0
      %p280 = por %p278, %p279
      %p281 = scmp.ne.s32.totalorder %s269, %s270
      %p282 = scmp.eq.s32.totalorder %s38, 3
      %p283 = por %p281, %p282
      %p285 = scmp.ne.s32.totalorder %s270, %s284
      %p286 = scmp.eq.s32.totalorder %s38, 0
      %p287 = por %p285, %p286
      %s289 = sadd.s32 %s288, 1
      %p292 = scmp.eq.s32.totalorder %s32, 3
      %p293 = scmp.ne.s32.totalorder %s288, %s290
      %p294 = scmp.eq.s32.totalorder %s32, 0
      %p295 = por %p293, %p294
      %p296 = scmp.ne.s32.totalorder %s288, %s290
      %p297 = scmp.eq.s32.totalorder %s37, 3
      %p298 = por %p296, %p297
      %p299 = scmp.ne.s32.totalorder %s290, %s291
      %p300 = scmp.eq.s32.totalorder %s37, 0
      %p301 = por %p299, %p300
      %p302 = scmp.ne.s32.totalorder %s290, %s291
      %p303 = scmp.eq.s32.totalorder %s38, 3
      %p304 = por %p302, %p303
      %p306 = scmp.ne.s32.totalorder %s291, %s305
      %p307 = scmp.eq.s32.totalorder %s38, 0
      %p308 = por %p306, %p307
      %s310 = sadd.s32 %s309, 1
      %p313 = scmp.eq.s32.totalorder %s32, 3
      %p314 = scmp.ne.s32.totalorder %s309, %s311
      %p315 = scmp.eq.s32.totalorder %s32, 0
      %p316 = por %p314, %p315
      %p317 = scmp.ne.s32.totalorder %s309, %s311
      %p318 = scmp.eq.s32.totalorder %s37, 3
      %p319 = por %p317, %p318
      %p320 = scmp.ne.s32.totalorder %s311, %s312
      %p321 = scmp.eq.s32.totalorder %s37, 0
      %p322 = por %p320, %p321
      %p323 = scmp.ne.s32.totalorder %s311, %s312
      %p324 = scmp.eq.s32.totalorder %s38, 3
      %p325 = por %p323, %p324
      %p327 = scmp.ne.s32.totalorder %s312, %s326
      %p328 = scmp.eq.s32.totalorder %s38, 0
      %p329 = por %p327, %p328
      %s331 = sadd.s32 %s330, 1
      %p334 = scmp.eq.s32.totalorder %s32, 3
      %p335 = scmp.ne.s32.totalorder %s330, %s332
      %p336 = scmp.eq.s32.totalorder %s32, 0
      %p337 = por %p335, %p336
      %p338 = scmp.ne.s32.totalorder %s330, %s332
      %p339 = scmp.eq.s32.totalorder %s37, 3
      %p340 = por %p338, %p339
      %p341 = scmp.ne.s32.totalorder %s332, %s333
      %p342 = scmp.eq.s32.totalorder %s37, 0
      %p343 = por %p341, %p342
      %p344 = scmp.ne.s32.totalorder %s332, %s333
      %p345 = scmp.eq.s32.totalorder %s38, 3
      %p346 = por %p344, %p345
      %p348 = scmp.ne.s32.totalorder %s333, %s347
      %p349 = scmp.eq.s32.totalorder %s38, 0
      %p350 = por %p348, %p349
      %s352 = sadd.s32 %s351, 1
      %p355 = scmp.eq.s32.totalorder %s32, 3
      %p356 = scmp.ne.s32.totalorder %s351, %s353
      %p357 = scmp.eq.s32.totalorder %s32, 0
      %p358 = por %p356, %p357
      %p359 = scmp.ne.s32.totalorder %s351, %s353
      %p360 = scmp.eq.s32.totalorder %s37, 3
      %p361 = por %p359, %p360
      %p362 = scmp.ne.s32.totalorder %s353, %s354
      %p363 = scmp.eq.s32.totalorder %s37, 0
      %p364 = por %p362, %p363
      %p365 = scmp.ne.s32.totalorder %s353, %s354
      %p366 = scmp.eq.s32.totalorder %s38, 3
      %p367 = por %p365, %p366
      %p369 = scmp.ne.s32.totalorder %s354, %s368
      %p370 = scmp.eq.s32.totalorder %s38, 0
      %p371 = por %p369, %p370
      %s373 = sadd.s32 %s372, 1
      %p376 = scmp.eq.s32.totalorder %s32, 3
      %p377 = scmp.ne.s32.totalorder %s372, %s374
      %p378 = scmp.eq.s32.totalorder %s32, 0
      %p379 = por %p377, %p378
      %p380 = scmp.ne.s32.totalorder %s372, %s374
      %p381 = scmp.eq.s32.totalorder %s37, 3
      %p382 = por %p380, %p381
      %p383 = scmp.ne.s32.totalorder %s374, %s375
      %p384 = scmp.eq.s32.totalorder %s37, 0
      %p385 = por %p383, %p384
      %p386 = scmp.ne.s32.totalorder %s374, %s375
      %p387 = scmp.eq.s32.totalorder %s38, 3
      %p388 = por %p386, %p387
      %p390 = scmp.ne.s32.totalorder %s375, %s389
      %p391 = scmp.eq.s32.totalorder %s38, 0
      %p392 = por %p390, %p391
      %s394 = sadd.s32 %s393, 1
      %p397 = scmp.eq.s32.totalorder %s32, 3
      %p398 = scmp.ne.s32.totalorder %s393, %s395
      %p399 = scmp.eq.s32.totalorder %s32, 0
      %p400 = por %p398, %p399
      %p401 = scmp.ne.s32.totalorder %s393, %s395
      %p402 = scmp.eq.s32.totalorder %s37, 3
      %p403 = por %p401, %p402
      %p404 = scmp.ne.s32.totalorder %s395, %s396
      %p405 = scmp.eq.s32.totalorder %s37, 0
      %p406 = por %p404, %p405
      %p407 = scmp.ne.s32.totalorder %s395, %s396
      %p408 = scmp.eq.s32.totalorder %s38, 3
      %p409 = por %p407, %p408
      %p411 = scmp.ne.s32.totalorder %s396, %s410
      %p412 = scmp.eq.s32.totalorder %s38, 0
      %p413 = por %p411, %p412
      %s414 = ssub.s32 %s39, %s51
      %s415 = ssub.s32 %s40, %s47
      %s416 = sor.u32 %s414, %s415
      %p417 = scmp.eq.s32.totalorder %s416, 0
      %s419 = sadd.s32 %s418, 1
      %s420 = scalar_select %p417, %s418, %s419
      %p423 = pneg %p417
      %p424 = scmp.eq.s32.totalorder %s32, 3
      %p425 = por %p423, %p424
      %p426 = scmp.ne.s32.totalorder %s418, %s421
      %p427 = scmp.eq.s32.totalorder %s32, 0
      %p428 = por %p426, %p427
      %p429 = scmp.ne.s32.totalorder %s418, %s421
      %p430 = scmp.eq.s32.totalorder %s37, 3
      %p431 = por %p429, %p430
      %p432 = scmp.ne.s32.totalorder %s421, %s422
      %p433 = scmp.eq.s32.totalorder %s37, 0
      %p434 = por %p432, %p433
      %p435 = scmp.ne.s32.totalorder %s421, %s422
      %p436 = scmp.eq.s32.totalorder %s38, 3
      %p437 = por %p435, %p436
      %p439 = scmp.ne.s32.totalorder %s422, %s438
      %p440 = scmp.eq.s32.totalorder %s38, 0
      %p441 = por %p439, %p440
      %p442 = scmp.le.s32.totalorder 1, %s32
      %p443 = scmp.lt.s32.totalorder %s32, 5
      %p444 = pnand %p442, %p443
      %p445 = pneg %p444
      // Predicated region
      $region9: #{tpu_custom_call.1} parent=5 // pred_check
        _
      $region10: #{tpu_custom_call.1} parent=5 // pred_check_branch
        %447 = sbr.rel (%p444) target = $region12
      $region11: #{tpu_custom_call.1} parent=5 // pred_region
        %s448 = ssub.s32 %s32, 1
        // Predicated region
        $region13: #{tpu_custom_call.1} parent=11 // pred_check
          %p449 = pneg %p91
        $region14: #{tpu_custom_call.1} parent=11 // pred_check_branch
          %451 = sbr.rel (%p449) target = $region16
        $region15: #{tpu_custom_call.1} parent=11 // pred_region
          %s453 = ssub.s32 4096, 4096
          %454 = vsyncadd [#allocation8], %s453
          %s455 = sshll.u32 [#allocation7], 4
          %s456 = int_to_ptr.vmem [resolvable:$true] %s455
          %461 = dma.hbm_to_vmem [thread:$0]  %s1, 4096, %s456, [#allocation8], 128, 128, 8
        $region16: #{tpu_custom_call.1} parent=11 // pred_fallthru
          _
        // Predicated region
        $region17: #{tpu_custom_call.1} parent=11 // pred_check
          %p462 = pneg %p112
        $region18: #{tpu_custom_call.1} parent=11 // pred_check_branch
          %464 = sbr.rel (%p462) target = $region20
        $region19: #{tpu_custom_call.1} parent=11 // pred_region
          _
        $region20: #{tpu_custom_call.1} parent=11 // pred_fallthru
          _
        // Predicated region
        $region21: #{tpu_custom_call.1} parent=11 // pred_check
          %p465 = pneg %p133
        $region22: #{tpu_custom_call.1} parent=11 // pred_check_branch
          %467 = sbr.rel (%p465) target = $region24
        $region23: #{tpu_custom_call.1} parent=11 // pred_region
          %s469 = ssub.s32 4096, 4096
          %470 = vsyncadd [#allocation8], %s469
          %s471 = sshll.u32 [#allocation9], 4
          %s472 = int_to_ptr.vmem [resolvable:$true] %s471
          %477 = dma.hbm_to_vmem [thread:$0]  %s3, 4096, %s472, [#allocation8], 128, 128, 8
        $region24: #{tpu_custom_call.1} parent=11 // pred_fallthru
          _
        // Predicated region
        $region25: #{tpu_custom_call.1} parent=11 // pred_check
          %p478 = pneg %p154
        $region26: #{tpu_custom_call.1} parent=11 // pred_check_branch
          %480 = sbr.rel (%p478) target = $region28
        $region27: #{tpu_custom_call.1} parent=11 // pred_region
          _
        $region28: #{tpu_custom_call.1} parent=11 // pred_fallthru
          _
        // Predicated region
        $region29: #{tpu_custom_call.1} parent=11 // pred_check
          %p481 = pneg %p175
        $region30: #{tpu_custom_call.1} parent=11 // pred_check_branch
          %483 = sbr.rel (%p481) target = $region32
        $region31: #{tpu_custom_call.1} parent=11 // pred_region
          %s485 = ssub.s32 4096, 4096
          %486 = vsyncadd [#allocation11], %s485
          %s487 = sshll.u32 [#allocation10], 4
          %s488 = int_to_ptr.vmem [resolvable:$true] %s487
          %493 = dma.hbm_to_vmem [thread:$0]  %s5, 4096, %s488, [#allocation11], 128, 128, 8
        $region32: #{tpu_custom_call.1} parent=11 // pred_fallthru
          _
        // Predicated region
        $region33: #{tpu_custom_call.1} parent=11 // pred_check
          %p494 = pneg %p196
        $region34: #{tpu_custom_call.1} parent=11 // pred_check_branch
          %496 = sbr.rel (%p494) target = $region36
        $region35: #{tpu_custom_call.1} parent=11 // pred_region
          _
        $region36: #{tpu_custom_call.1} parent=11 // pred_fallthru
          _
        // Predicated region
        $region37: #{tpu_custom_call.1} parent=11 // pred_check
          %p497 = pneg %p217
        $region38: #{tpu_custom_call.1} parent=11 // pred_check_branch
          %499 = sbr.rel (%p497) target = $region40
        $region39: #{tpu_custom_call.1} parent=11 // pred_region
          %s501 = ssub.s32 4096, 4096
          %502 = vsyncadd [#allocation11], %s501
          %s503 = sshll.u32 [#allocation12], 4
          %s504 = int_to_ptr.vmem [resolvable:$true] %s503
          %509 = dma.hbm_to_vmem [thread:$0]  %s7, 4096, %s504, [#allocation11], 128, 128, 8
        $region40: #{tpu_custom_call.1} parent=11 // pred_fallthru
          _
        // Predicated region
        $region41: #{tpu_custom_call.1} parent=11 // pred_check
          %p510 = pneg %p238
        $region42: #{tpu_custom_call.1} parent=11 // pred_check_branch
          %512 = sbr.rel (%p510) target = $region44
        $region43: #{tpu_custom_call.1} parent=11 // pred_region
          _
        $region44: #{tpu_custom_call.1} parent=11 // pred_fallthru
          _
        // Predicated region
        $region45: #{tpu_custom_call.1} parent=11 // pred_check
          %p513 = pneg %p259
        $region46: #{tpu_custom_call.1} parent=11 // pred_check_branch
          %515 = sbr.rel (%p513) target = $region48
        $region47: #{tpu_custom_call.1} parent=11 // pred_region
          _
        $region48: #{tpu_custom_call.1} parent=11 // pred_fallthru
          _
        // Predicated region
        $region49: #{tpu_custom_call.1} parent=11 // pred_check
          %p516 = pneg %p280
        $region50: #{tpu_custom_call.1} parent=11 // pred_check_branch
          %518 = sbr.rel (%p516) target = $region52
        $region51: #{tpu_custom_call.1} parent=11 // pred_region
          _
        $region52: #{tpu_custom_call.1} parent=11 // pred_fallthru
          _
        // Predicated region
        $region53: #{tpu_custom_call.1} parent=11 // pred_check
          %p519 = pneg %p301
        $region54: #{tpu_custom_call.1} parent=11 // pred_check_branch
          %521 = sbr.rel (%p519) target = $region56
        $region55: #{tpu_custom_call.1} parent=11 // pred_region
          %s523 = ssub.s32 8192, 8192
          %524 = vsyncadd [#allocation14], %s523
          %s525 = sshll.u32 [#allocation13], 4
          %s526 = int_to_ptr.vmem [resolvable:$true] %s525
          %531 = dma.hbm_to_vmem [thread:$0]  %s11, 8192, %s526, [#allocation14], 256, 256, 16
        $region56: #{tpu_custom_call.1} parent=11 // pred_fallthru
          _
        // Predicated region
        $region57: #{tpu_custom_call.1} parent=11 // pred_check
          %p532 = pneg %p322
        $region58: #{tpu_custom_call.1} parent=11 // pred_check_branch
          %534 = sbr.rel (%p532) target = $region60
        $region59: #{tpu_custom_call.1} parent=11 // pred_region
          _
        $region60: #{tpu_custom_call.1} parent=11 // pred_fallthru
          _
        // Predicated region
        $region61: #{tpu_custom_call.1} parent=11 // pred_check
          %p535 = pneg %p343
        $region62: #{tpu_custom_call.1} parent=11 // pred_check_branch
          %537 = sbr.rel (%p535) target = $region64
        $region63: #{tpu_custom_call.1} parent=11 // pred_region
          %s539 = ssub.s32 8192, 8192
          %540 = vsyncadd [#allocation14], %s539
          %s541 = sshll.u32 [#allocation15], 4
          %s542 = int_to_ptr.vmem [resolvable:$true] %s541
          %547 = dma.hbm_to_vmem [thread:$0]  %s13, 8192, %s542, [#allocation14], 128, 128, 8
        $region64: #{tpu_custom_call.1} parent=11 // pred_fallthru
          _
        // Predicated region
        $region65: #{tpu_custom_call.1} parent=11 // pred_check
          %p548 = pneg %p364
        $region66: #{tpu_custom_call.1} parent=11 // pred_check_branch
          %550 = sbr.rel (%p548) target = $region68
        $region67: #{tpu_custom_call.1} parent=11 // pred_region
          _
        $region68: #{tpu_custom_call.1} parent=11 // pred_fallthru
          _
        // Predicated region
        $region69: #{tpu_custom_call.1} parent=11 // pred_check
          %p551 = pneg %p385
        $region70: #{tpu_custom_call.1} parent=11 // pred_check_branch
          %553 = sbr.rel (%p551) target = $region72
        $region71: #{tpu_custom_call.1} parent=11 // pred_region
          _
        $region72: #{tpu_custom_call.1} parent=11 // pred_fallthru
          _
        // Predicated region
        $region73: #{tpu_custom_call.1} parent=11 // pred_check
          %p554 = pneg %p406
        $region74: #{tpu_custom_call.1} parent=11 // pred_check_branch
          %556 = sbr.rel (%p554) target = $region76
        $region75: #{tpu_custom_call.1} parent=11 // pred_region
          _
        $region76: #{tpu_custom_call.1} parent=11 // pred_fallthru
          _
      $region12: #{tpu_custom_call.1} parent=5 // pred_fallthru
        _
      %p557 = scmp.lt.s32.totalorder %s32, 4
      // Predicated region
      $region77: #{tpu_custom_call.1} parent=5 // pred_check
        %p558 = pneg %p557
      $region78: #{tpu_custom_call.1} parent=5 // pred_check_branch
        %560 = sbr.rel (%p558) target = $region80
      $region79: #{tpu_custom_call.1} parent=5 // pred_region
        // Predicated region
        $region81: #{tpu_custom_call.1} parent=79 // pred_check
          %p561 = pneg %p64
        $region82: #{tpu_custom_call.1} parent=79 // pred_check_branch
          %563 = sbr.rel (%p561) target = $region84
        $region83: #{tpu_custom_call.1} parent=79 // pred_region
          %s564 = sand.u32 %s54, 1
          %s565 = scalar_lea.sflag [#allocation5], %s564
          %s566 = sand.u32 %s54, 1
          %s567 = smul.addr %s566, 256
          %s568 = scalar_lea.vmem [#allocation4], %s567
          %s570 = ssub.s32 4096, 4096
          %571 = vsyncadd %s565, %s570
          %s572 = smul.addr %s39, 64
          %s573 = smul.addr %s572, 64
          %s574 = scalar_lea.hbm %s0, %s573
          %s575 = sshll.u32 %s568, 4
          %s576 = int_to_ptr.vmem [resolvable:$true] %s575
          %581 = dma.hbm_to_vmem [thread:$0]  %s574, 4096, %s576, %s565, 128, 128, 8
        $region84: #{tpu_custom_call.1} parent=79 // pred_fallthru
          _
      $region80: #{tpu_custom_call.1} parent=5 // pred_fallthru
        _
      %p582 = scmp.le.s32.totalorder 1, %s32
      %p583 = scmp.lt.s32.totalorder %s32, 5
      %p584 = pnand %p582, %p583
      %p585 = pneg %p584
      // Predicated region
      $region85: #{tpu_custom_call.1} parent=5 // pred_check
        _
      $region86: #{tpu_custom_call.1} parent=5 // pred_check_branch
        %587 = sbr.rel (%p584) target = $region88
      $region87: #{tpu_custom_call.1} parent=5 // pred_region
        %s588 = ssub.s32 %s32, 1
        %s589 = sand.u32 %s57, 1
        %s590 = scalar_lea.sflag [#allocation5], %s589
        %s591 = sand.u32 %s57, 1
        %s592 = smul.addr %s591, 256
        %s593 = scalar_lea.vmem [#allocation4], %s592
        // Predicated region
        $region89: #{tpu_custom_call.1} parent=87 // pred_check
          %p594 = pneg %p70
        $region90: #{tpu_custom_call.1} parent=87 // pred_check_branch
          %596 = sbr.rel (%p594) target = $region92
        $region91: #{tpu_custom_call.1} parent=87 // pred_region
          %597 = dma.done %s590, 4096
        $region92: #{tpu_custom_call.1} parent=87 // pred_fallthru
          _
        // Predicated region
        $region93: #{tpu_custom_call.1} parent=87 // pred_check
          %p598 = pneg %p91
        $region94: #{tpu_custom_call.1} parent=87 // pred_check_branch
          %600 = sbr.rel (%p598) target = $region96
        $region95: #{tpu_custom_call.1} parent=87 // pred_region
          %601 = dma.done [#allocation8], 4096
        $region96: #{tpu_custom_call.1} parent=87 // pred_fallthru
          _
        // Predicated region
        $region97: #{tpu_custom_call.1} parent=87 // pred_check
          %p602 = pneg %p133
        $region98: #{tpu_custom_call.1} parent=87 // pred_check_branch
          %604 = sbr.rel (%p602) target = $region100
        $region99: #{tpu_custom_call.1} parent=87 // pred_region
          %605 = dma.done [#allocation8], 4096
        $region100: #{tpu_custom_call.1} parent=87 // pred_fallthru
          _
        // Predicated region
        $region101: #{tpu_custom_call.1} parent=87 // pred_check
          %p606 = pneg %p175
        $region102: #{tpu_custom_call.1} parent=87 // pred_check_branch
          %608 = sbr.rel (%p606) target = $region104
        $region103: #{tpu_custom_call.1} parent=87 // pred_region
          %609 = dma.done [#allocation11], 4096
        $region104: #{tpu_custom_call.1} parent=87 // pred_fallthru
          _
        // Predicated region
        $region105: #{tpu_custom_call.1} parent=87 // pred_check
          %p610 = pneg %p217
        $region106: #{tpu_custom_call.1} parent=87 // pred_check_branch
          %612 = sbr.rel (%p610) target = $region108
        $region107: #{tpu_custom_call.1} parent=87 // pred_region
          %613 = dma.done [#allocation11], 4096
        $region108: #{tpu_custom_call.1} parent=87 // pred_fallthru
          _
        // Predicated region
        $region109: #{tpu_custom_call.1} parent=87 // pred_check
          %p614 = pneg %p301
        $region110: #{tpu_custom_call.1} parent=87 // pred_check_branch
          %616 = sbr.rel (%p614) target = $region112
        $region111: #{tpu_custom_call.1} parent=87 // pred_region
          %617 = dma.done [#allocation14], 8192
        $region112: #{tpu_custom_call.1} parent=87 // pred_fallthru
          _
        // Predicated region
        $region113: #{tpu_custom_call.1} parent=87 // pred_check
          %p618 = pneg %p343
        $region114: #{tpu_custom_call.1} parent=87 // pred_check_branch
          %620 = sbr.rel (%p618) target = $region116
        $region115: #{tpu_custom_call.1} parent=87 // pred_region
          %621 = dma.done [#allocation14], 8192
        $region116: #{tpu_custom_call.1} parent=87 // pred_fallthru
          _
        %s622 = sand.u32 %s57, 1
        %s623 = scalar_lea.sflag [#allocation5], %s622
        %s624 = sand.u32 %s57, 1
        %s625 = smul.addr %s624, 256
        %s626 = scalar_lea.vmem [#allocation4], %s625
        %p627 = pneg %p70
        %p628 = pneg %p67
        %p629 = pneg %p91
        %p630 = pneg %p88
        %p631 = pneg %p112
        %p632 = pneg %p109
        %p633 = pneg %p133
        %p634 = pneg %p130
        %p635 = pneg %p154
        %p636 = pneg %p151
        %p637 = pneg %p175
        %p638 = pneg %p172
        %p639 = pneg %p196
        %p640 = pneg %p193
        %p641 = pneg %p217
        %p642 = pneg %p214
        %p643 = pneg %p238
        %p644 = pneg %p235
        %p645 = pneg %p259
        %p646 = pneg %p256
        %p647 = pneg %p280
        %p648 = pneg %p277
        %p649 = pneg %p301
        %p650 = pneg %p298
        %p651 = pneg %p322
        %p652 = pneg %p319
        %p653 = pneg %p343
        %p654 = pneg %p340
        %p655 = pneg %p364
        %p656 = pneg %p361
        %p657 = pneg %p385
        %p658 = pneg %p382
        %p659 = pneg %p406
        %p660 = pneg %p403
        %p661 = pneg %p434
        %p662 = pneg %p431
        %s663 = sand.u32 %s421, 1
        %s664 = scalar_lea.sflag [#allocation6], %s663
        %s665 = sand.u32 %s421, 1
        %s666 = smul.addr %s665, 128
        %s667 = scalar_lea.vmem [#allocation16], %s666
        %s668 = smul.u32 16, %s42
        %p670 = scmp.eq.s32.totalorder %s42, 0
        // Predicated region
        $region117: #{tpu_custom_call.1} parent=87 // pred_check
          %p671 = pneg %p670
        $region118: #{tpu_custom_call.1} parent=87 // pred_check_branch
          %673 = sbr.rel (%p671) target = $region120
        $region119: #{tpu_custom_call.1} parent=87 // pred_region
          %v674 = vld [vmem:[%s593] sm:$0xff]
          %v675 = vld [vmem:[%s593 + $0x8] sm:$0xff]
          %v676 = vld [vmem:[%s593 + $0x10] sm:$0xff]
          %v677 = vld [vmem:[%s593 + $0x18] sm:$0xff]
          %v678 = vld [vmem:[%s593 + $0x20] sm:$0xff]
          %v679 = vld [vmem:[%s593 + $0x28] sm:$0xff]
          %v680 = vld [vmem:[%s593 + $0x30] sm:$0xff]
          %v681 = vld [vmem:[%s593 + $0x38] sm:$0xff]
          %v682 = vld [vmem:[%s593 + $0x40] sm:$0xff]
          %v683 = vld [vmem:[%s593 + $0x48] sm:$0xff]
          %v684 = vld [vmem:[%s593 + $0x50] sm:$0xff]
          %v685 = vld [vmem:[%s593 + $0x58] sm:$0xff]
          %v686 = vld [vmem:[%s593 + $0x60] sm:$0xff]
          %v687 = vld [vmem:[%s593 + $0x68] sm:$0xff]
          %v688 = vld [vmem:[%s593 + $0x70] sm:$0xff]
          %v689 = vld [vmem:[%s593 + $0x78] sm:$0xff]
          %v690 = vld [vmem:[%s593 + $0x80] sm:$0xff]
          %v691 = vld [vmem:[%s593 + $0x88] sm:$0xff]
          %v692 = vld [vmem:[%s593 + $0x90] sm:$0xff]
          %v693 = vld [vmem:[%s593 + $0x98] sm:$0xff]
          %v694 = vld [vmem:[%s593 + $0xa0] sm:$0xff]
          %v695 = vld [vmem:[%s593 + $0xa8] sm:$0xff]
          %v696 = vld [vmem:[%s593 + $0xb0] sm:$0xff]
          %v697 = vld [vmem:[%s593 + $0xb8] sm:$0xff]
          %v698 = vld [vmem:[%s593 + $0xc0] sm:$0xff]
          %v699 = vld [vmem:[%s593 + $0xc8] sm:$0xff]
          %v700 = vld [vmem:[%s593 + $0xd0] sm:$0xff]
          %v701 = vld [vmem:[%s593 + $0xd8] sm:$0xff]
          %v702 = vld [vmem:[%s593 + $0xe0] sm:$0xff]
          %v703 = vld [vmem:[%s593 + $0xe8] sm:$0xff]
          %v704 = vld [vmem:[%s593 + $0xf0] sm:$0xff]
          %v705 = vld [vmem:[%s593 + $0xf8] sm:$0xff]
          %v706 = vld [vmem:[#allocation9] sm:$0xff]
          %v707 = vld [vmem:[#allocation9 + $0x8] sm:$0xff]
          %v708 = vld [vmem:[#allocation9 + $0x10] sm:$0xff]
          %v709 = vld [vmem:[#allocation9 + $0x18] sm:$0xff]
          %v710 = vld [vmem:[#allocation9 + $0x20] sm:$0xff]
          %v711 = vld [vmem:[#allocation9 + $0x28] sm:$0xff]
          %v712 = vld [vmem:[#allocation9 + $0x30] sm:$0xff]
          %v713 = vld [vmem:[#allocation9 + $0x38] sm:$0xff]
          %v714 = vld [vmem:[#allocation9 + $0x40] sm:$0xff]
          %v715 = vld [vmem:[#allocation9 + $0x48] sm:$0xff]
          %v716 = vld [vmem:[#allocation9 + $0x50] sm:$0xff]
          %v717 = vld [vmem:[#allocation9 + $0x58] sm:$0xff]
          %v718 = vld [vmem:[#allocation9 + $0x60] sm:$0xff]
          %v719 = vld [vmem:[#allocation9 + $0x68] sm:$0xff]
          %v720 = vld [vmem:[#allocation9 + $0x70] sm:$0xff]
          %v721 = vld [vmem:[#allocation9 + $0x78] sm:$0xff]
          %v722 = vld [vmem:[#allocation9 + $0x80] sm:$0xff]
          %v723 = vld [vmem:[#allocation9 + $0x88] sm:$0xff]
          %v724 = vld [vmem:[#allocation9 + $0x90] sm:$0xff]
          %v725 = vld [vmem:[#allocation9 + $0x98] sm:$0xff]
          %v726 = vld [vmem:[#allocation9 + $0xa0] sm:$0xff]
          %v727 = vld [vmem:[#allocation9 + $0xa8] sm:$0xff]
          %v728 = vld [vmem:[#allocation9 + $0xb0] sm:$0xff]
          %v729 = vld [vmem:[#allocation9 + $0xb8] sm:$0xff]
          %v730 = vld [vmem:[#allocation9 + $0xc0] sm:$0xff]
          %v731 = vld [vmem:[#allocation9 + $0xc8] sm:$0xff]
          %v732 = vld [vmem:[#allocation9 + $0xd0] sm:$0xff]
          %v733 = vld [vmem:[#allocation9 + $0xd8] sm:$0xff]
          %v734 = vld [vmem:[#allocation9 + $0xe0] sm:$0xff]
          %v735 = vld [vmem:[#allocation9 + $0xe8] sm:$0xff]
          %v736 = vld [vmem:[#allocation9 + $0xf0] sm:$0xff]
          %v737 = vld [vmem:[#allocation9 + $0xf8] sm:$0xff]
          %v738 = vld [vmem:[%s4] sm:$0x3]
          %v740 = vlaneseq
          %v741 = vshrl.u32 %v740, 7
          %v742 = vsub.s32 0, %v741
          %v743 = vrot.slane %v738, %v742
          %v744 = vlaneseq
          %v745 = vshrl.u32 %v744, 7
          %v746 = vsub.s32 1, %v745
          %v747 = vrot.slane %v738, %v746
          %v782 = vunpack.c.l.b16 %v674
          %v783 = vunpack.c.h.b16 %v674
          %v784 = vunpack.c.l.b16 %v675
          %v785 = vunpack.c.h.b16 %v675
          %v786 = vunpack.c.l.b16 %v676
          %v787 = vunpack.c.h.b16 %v676
          %v788 = vunpack.c.l.b16 %v677
          %v789 = vunpack.c.h.b16 %v677
          %v790 = vunpack.c.l.b16 %v678
          %v791 = vunpack.c.h.b16 %v678
          %v792 = vunpack.c.l.b16 %v679
          %v793 = vunpack.c.h.b16 %v679
          %v794 = vunpack.c.l.b16 %v680
          %v795 = vunpack.c.h.b16 %v680
          %v796 = vunpack.c.l.b16 %v681
          %v797 = vunpack.c.h.b16 %v681
          %v798 = vunpack.c.l.b16 %v682
          %v799 = vunpack.c.h.b16 %v682
          %v800 = vunpack.c.l.b16 %v683
          %v801 = vunpack.c.h.b16 %v683
          %v802 = vunpack.c.l.b16 %v684
          %v803 = vunpack.c.h.b16 %v684
          %v804 = vunpack.c.l.b16 %v685
          %v805 = vunpack.c.h.b16 %v685
          %v806 = vunpack.c.l.b16 %v686
          %v807 = vunpack.c.h.b16 %v686
          %v808 = vunpack.c.l.b16 %v687
          %v809 = vunpack.c.h.b16 %v687
          %v810 = vunpack.c.l.b16 %v688
          %v811 = vunpack.c.h.b16 %v688
          %v812 = vunpack.c.l.b16 %v689
          %v813 = vunpack.c.h.b16 %v689
          %v814 = vunpack.c.l.b16 %v690
          %v815 = vunpack.c.h.b16 %v690
          %v816 = vunpack.c.l.b16 %v691
          %v817 = vunpack.c.h.b16 %v691
          %v818 = vunpack.c.l.b16 %v692
          %v819 = vunpack.c.h.b16 %v692
          %v820 = vunpack.c.l.b16 %v693
          %v821 = vunpack.c.h.b16 %v693
          %v822 = vunpack.c.l.b16 %v694
          %v823 = vunpack.c.h.b16 %v694
          %v824 = vunpack.c.l.b16 %v695
          %v825 = vunpack.c.h.b16 %v695
          %v826 = vunpack.c.l.b16 %v696
          %v827 = vunpack.c.h.b16 %v696
          %v828 = vunpack.c.l.b16 %v697
          %v829 = vunpack.c.h.b16 %v697
          %v830 = vunpack.c.l.b16 %v698
          %v831 = vunpack.c.h.b16 %v698
          %v832 = vunpack.c.l.b16 %v699
          %v833 = vunpack.c.h.b16 %v699
          %v834 = vunpack.c.l.b16 %v700
          %v835 = vunpack.c.h.b16 %v700
          %v836 = vunpack.c.l.b16 %v701
          %v837 = vunpack.c.h.b16 %v701
          %v838 = vunpack.c.l.b16 %v702
          %v839 = vunpack.c.h.b16 %v702
          %v840 = vunpack.c.l.b16 %v703
          %v841 = vunpack.c.h.b16 %v703
          %v842 = vunpack.c.l.b16 %v704
          %v843 = vunpack.c.h.b16 %v704
          %v844 = vunpack.c.l.b16 %v705
          %v845 = vunpack.c.h.b16 %v705
          %v846 = vpack.c.b16 %v784, %v782
          %v847 = vpack.c.b16 %v785, %v783
          %v848 = vpack.c.b16 %v788, %v786
          %v849 = vpack.c.b16 %v789, %v787
          %v850 = vpack.c.b16 %v792, %v790
          %v851 = vpack.c.b16 %v793, %v791
          %v852 = vpack.c.b16 %v796, %v794
          %v853 = vpack.c.b16 %v797, %v795
          %v854 = vpack.c.b16 %v800, %v798
          %v855 = vpack.c.b16 %v801, %v799
          %v856 = vpack.c.b16 %v804, %v802
          %v857 = vpack.c.b16 %v805, %v803
          %v858 = vpack.c.b16 %v808, %v806
          %v859 = vpack.c.b16 %v809, %v807
          %v860 = vpack.c.b16 %v812, %v810
          %v861 = vpack.c.b16 %v813, %v811
          %v862 = vpack.c.b16 %v816, %v814
          %v863 = vpack.c.b16 %v817, %v815
          %v864 = vpack.c.b16 %v820, %v818
          %v865 = vpack.c.b16 %v821, %v819
          %v866 = vpack.c.b16 %v824, %v822
          %v867 = vpack.c.b16 %v825, %v823
          %v868 = vpack.c.b16 %v828, %v826
          %v869 = vpack.c.b16 %v829, %v827
          %v870 = vpack.c.b16 %v832, %v830
          %v871 = vpack.c.b16 %v833, %v831
          %v872 = vpack.c.b16 %v836, %v834
          %v873 = vpack.c.b16 %v837, %v835
          %v874 = vpack.c.b16 %v840, %v838
          %v875 = vpack.c.b16 %v841, %v839
          %v876 = vpack.c.b16 %v844, %v842
          %v877 = vpack.c.b16 %v845, %v843
          %v942 = vunpack.c.l.b16 %v706
          %v943 = vunpack.c.h.b16 %v706
          %v944 = vunpack.c.l.b16 %v707
          %v945 = vunpack.c.h.b16 %v707
          %v946 = vunpack.c.l.b16 %v708
          %v947 = vunpack.c.h.b16 %v708
          %v948 = vunpack.c.l.b16 %v709
          %v949 = vunpack.c.h.b16 %v709
          %v950 = vunpack.c.l.b16 %v710
          %v951 = vunpack.c.h.b16 %v710
          %v952 = vunpack.c.l.b16 %v711
          %v953 = vunpack.c.h.b16 %v711
          %v954 = vunpack.c.l.b16 %v712
          %v955 = vunpack.c.h.b16 %v712
          %v956 = vunpack.c.l.b16 %v713
          %v957 = vunpack.c.h.b16 %v713
          %v958 = vunpack.c.l.b16 %v714
          %v959 = vunpack.c.h.b16 %v714
          %v960 = vunpack.c.l.b16 %v715
          %v961 = vunpack.c.h.b16 %v715
          %v962 = vunpack.c.l.b16 %v716
          %v963 = vunpack.c.h.b16 %v716
          %v964 = vunpack.c.l.b16 %v717
          %v965 = vunpack.c.h.b16 %v717
          %v966 = vunpack.c.l.b16 %v718
          %v967 = vunpack.c.h.b16 %v718
          %v968 = vunpack.c.l.b16 %v719
          %v969 = vunpack.c.h.b16 %v719
          %v970 = vunpack.c.l.b16 %v720
          %v971 = vunpack.c.h.b16 %v720
          %v972 = vunpack.c.l.b16 %v721
          %v973 = vunpack.c.h.b16 %v721
          %v974 = vunpack.c.l.b16 %v722
          %v975 = vunpack.c.h.b16 %v722
          %v976 = vunpack.c.l.b16 %v723
          %v977 = vunpack.c.h.b16 %v723
          %v978 = vunpack.c.l.b16 %v724
          %v979 = vunpack.c.h.b16 %v724
          %v980 = vunpack.c.l.b16 %v725
          %v981 = vunpack.c.h.b16 %v725
          %v982 = vunpack.c.l.b16 %v726
          %v983 = vunpack.c.h.b16 %v726
          %v984 = vunpack.c.l.b16 %v727
          %v985 = vunpack.c.h.b16 %v727
          %v986 = vunpack.c.l.b16 %v728
          %v987 = vunpack.c.h.b16 %v728
          %v988 = vunpack.c.l.b16 %v729
          %v989 = vunpack.c.h.b16 %v729
          %v990 = vunpack.c.l.b16 %v730
          %v991 = vunpack.c.h.b16 %v730
          %v992 = vunpack.c.l.b16 %v731
          %v993 = vunpack.c.h.b16 %v731
          %v994 = vunpack.c.l.b16 %v732
          %v995 = vunpack.c.h.b16 %v732
          %v996 = vunpack.c.l.b16 %v733
          %v997 = vunpack.c.h.b16 %v733
          %v998 = vunpack.c.l.b16 %v734
          %v999 = vunpack.c.h.b16 %v734
          %v1000 = vunpack.c.l.b16 %v735
          %v1001 = vunpack.c.h.b16 %v735
          %v1002 = vunpack.c.l.b16 %v736
          %v1003 = vunpack.c.h.b16 %v736
          %v1004 = vunpack.c.l.b16 %v737
          %v1005 = vunpack.c.h.b16 %v737
          %v1006 = vpack.c.b16 %v944, %v942
          %v1007 = vpack.c.b16 %v945, %v943
          %v1008 = vpack.c.b16 %v948, %v946
          %v1009 = vpack.c.b16 %v949, %v947
          %v1010 = vpack.c.b16 %v952, %v950
          %v1011 = vpack.c.b16 %v953, %v951
          %v1012 = vpack.c.b16 %v956, %v954
          %v1013 = vpack.c.b16 %v957, %v955
          %v1014 = vpack.c.b16 %v960, %v958
          %v1015 = vpack.c.b16 %v961, %v959
          %v1016 = vpack.c.b16 %v964, %v962
          %v1017 = vpack.c.b16 %v965, %v963
          %v1018 = vpack.c.b16 %v968, %v966
          %v1019 = vpack.c.b16 %v969, %v967
          %v1020 = vpack.c.b16 %v972, %v970
          %v1021 = vpack.c.b16 %v973, %v971
          %v1022 = vpack.c.b16 %v976, %v974
          %v1023 = vpack.c.b16 %v977, %v975
          %v1024 = vpack.c.b16 %v980, %v978
          %v1025 = vpack.c.b16 %v981, %v979
          %v1026 = vpack.c.b16 %v984, %v982
          %v1027 = vpack.c.b16 %v985, %v983
          %v1028 = vpack.c.b16 %v988, %v986
          %v1029 = vpack.c.b16 %v989, %v987
          %v1030 = vpack.c.b16 %v992, %v990
          %v1031 = vpack.c.b16 %v993, %v991
          %v1032 = vpack.c.b16 %v996, %v994
          %v1033 = vpack.c.b16 %v997, %v995
          %v1034 = vpack.c.b16 %v1000, %v998
          %v1035 = vpack.c.b16 %v1001, %v999
          %v1036 = vpack.c.b16 %v1004, %v1002
          %v1037 = vpack.c.b16 %v1005, %v1003
          %1070 = vmatprep.subr.bf16.mxu0 %v1007
          %1071 = vmatpush1.bf16.msra.mxu0 %v1006
          %1072 = vmatprep.subr.bf16.mxu0 %v1009
          %1073 = vmatpush1.bf16.msra.mxu0 %v1008
          %1074 = vmatprep.subr.bf16.mxu0 %v1011
          %1075 = vmatpush1.bf16.msra.mxu0 %v1010
          %1076 = vmatprep.subr.bf16.mxu0 %v1013
          %1077 = vmatpush1.bf16.msra.mxu0 %v1012
          %1078 = vmatprep.subr.bf16.mxu0 %v1015
          %1079 = vmatpush1.bf16.msra.mxu0 %v1014
          %1080 = vmatprep.subr.bf16.mxu0 %v1017
          %1081 = vmatpush1.bf16.msra.mxu0 %v1016
          %1082 = vmatprep.subr.bf16.mxu0 %v1019
          %1083 = vmatpush1.bf16.msra.mxu0 %v1018
          %1084 = vmatprep.subr.bf16.mxu0 %v1021
          %1085 = vmatpush1.bf16.msra.mxu0 %v1020
          %1086 = vmatprep.subr.bf16.mxu0 %v1023
          %1087 = vmatpush1.bf16.msra.mxu0 %v1022
          %1088 = vmatprep.subr.bf16.mxu0 %v1025
          %1089 = vmatpush1.bf16.msra.mxu0 %v1024
          %1090 = vmatprep.subr.bf16.mxu0 %v1027
          %1091 = vmatpush1.bf16.msra.mxu0 %v1026
          %1092 = vmatprep.subr.bf16.mxu0 %v1029
          %1093 = vmatpush1.bf16.msra.mxu0 %v1028
          %1094 = vmatprep.subr.bf16.mxu0 %v1031
          %1095 = vmatpush1.bf16.msra.mxu0 %v1030
          %1096 = vmatprep.subr.bf16.mxu0 %v1033
          %1097 = vmatpush1.bf16.msra.mxu0 %v1032
          %1098 = vmatprep.subr.bf16.mxu0 %v1035
          %1099 = vmatpush1.bf16.msra.mxu0 %v1034
          %1100 = vmatprep.subr.bf16.mxu0 %v1037
          %1101 = vmatpush1.bf16.msra.mxu0 %v1036
          %1102 = vmatprep.mubr.bf16.mxu0 %v847
          %1103 = vmatmul.mubr.bf16.gmra.mrb[0].mxu0 %v846
          %v1104 = vpop.f32.mrb[0].mxu0
          %v1105 = vadd.f32 %v743, %v1104
          %v1106 = vpop.f32.mrb[0].mxu0
          %v1107 = vadd.f32 %v747, %v1106
          %v1108 = vpop.f32.mrb[0].mxu0
          %v1109 = vadd.f32 %v743, %v1108
          %v1110 = vpop.f32.mrb[0].mxu0
          %v1111 = vadd.f32 %v747, %v1110
          %1112 = vmatprep.mubr.bf16.mxu0 %v849
          %1113 = vmatmul.mubr.bf16.gmra.mrb[0].mxu0 %v848
          %v1114 = vpop.f32.mrb[0].mxu0
          %v1115 = vadd.f32 %v743, %v1114
          %v1116 = vpop.f32.mrb[0].mxu0
          %v1117 = vadd.f32 %v747, %v1116
          %v1118 = vpop.f32.mrb[0].mxu0
          %v1119 = vadd.f32 %v743, %v1118
          %v1120 = vpop.f32.mrb[0].mxu0
          %v1121 = vadd.f32 %v747, %v1120
          %1122 = vmatprep.mubr.bf16.mxu0 %v851
          %1123 = vmatmul.mubr.bf16.gmra.mrb[0].mxu0 %v850
          %v1124 = vpop.f32.mrb[0].mxu0
          %v1125 = vadd.f32 %v743, %v1124
          %v1126 = vpop.f32.mrb[0].mxu0
          %v1127 = vadd.f32 %v747, %v1126
          %v1128 = vpop.f32.mrb[0].mxu0
          %v1129 = vadd.f32 %v743, %v1128
          %v1130 = vpop.f32.mrb[0].mxu0
          %v1131 = vadd.f32 %v747, %v1130
          %1132 = vmatprep.mubr.bf16.mxu0 %v853
          %1133 = vmatmul.mubr.bf16.gmra.mrb[0].mxu0 %v852
          %v1134 = vpop.f32.mrb[0].mxu0
          %v1135 = vadd.f32 %v743, %v1134
          %v1136 = vpop.f32.mrb[0].mxu0
          %v1137 = vadd.f32 %v747, %v1136
          %v1138 = vpop.f32.mrb[0].mxu0
          %v1139 = vadd.f32 %v743, %v1138
          %v1140 = vpop.f32.mrb[0].mxu0
          %v1141 = vadd.f32 %v747, %v1140
          %1142 = vmatprep.mubr.bf16.mxu0 %v855
          %1143 = vmatmul.mubr.bf16.gmra.mrb[0].mxu0 %v854
          %v1144 = vpop.f32.mrb[0].mxu0
          %v1145 = vadd.f32 %v743, %v1144
          %v1146 = vpop.f32.mrb[0].mxu0
          %v1147 = vadd.f32 %v747, %v1146
          %v1148 = vpop.f32.mrb[0].mxu0
          %v1149 = vadd.f32 %v743, %v1148
          %v1150 = vpop.f32.mrb[0].mxu0
          %v1151 = vadd.f32 %v747, %v1150
          %1152 = vmatprep.mubr.bf16.mxu0 %v857
          %1153 = vmatmul.mubr.bf16.gmra.mrb[0].mxu0 %v856
          %v1154 = vpop.f32.mrb[0].mxu0
          %v1155 = vadd.f32 %v743, %v1154
          %v1156 = vpop.f32.mrb[0].mxu0
          %v1157 = vadd.f32 %v747, %v1156
          %v1158 = vpop.f32.mrb[0].mxu0
          %v1159 = vadd.f32 %v743, %v1158
          %v1160 = vpop.f32.mrb[0].mxu0
          %v1161 = vadd.f32 %v747, %v1160
          %1162 = vmatprep.mubr.bf16.mxu0 %v859
          %1163 = vmatmul.mubr.bf16.gmra.mrb[0].mxu0 %v858
          %v1164 = vpop.f32.mrb[0].mxu0
          %v1165 = vadd.f32 %v743, %v1164
          %v1166 = vpop.f32.mrb[0].mxu0
          %v1167 = vadd.f32 %v747, %v1166
          %v1168 = vpop.f32.mrb[0].mxu0
          %v1169 = vadd.f32 %v743, %v1168
          %v1170 = vpop.f32.mrb[0].mxu0
          %v1171 = vadd.f32 %v747, %v1170
          %1172 = vmatprep.mubr.bf16.mxu0 %v861
          %1173 = vmatmul.mubr.bf16.gmra.mrb[0].mxu0 %v860
          %v1174 = vpop.f32.mrb[0].mxu0
          %v1175 = vadd.f32 %v743, %v1174
          %v1176 = vpop.f32.mrb[0].mxu0
          %v1177 = vadd.f32 %v747, %v1176
          %v1178 = vpop.f32.mrb[0].mxu0
          %v1179 = vadd.f32 %v743, %v1178
          %v1180 = vpop.f32.mrb[0].mxu0
          %v1181 = vadd.f32 %v747, %v1180
          %1182 = vmatprep.mubr.bf16.mxu0 %v863
          %1183 = vmatmul.mubr.bf16.gmra.mrb[0].mxu0 %v862
          %v1184 = vpop.f32.mrb[0].mxu0
          %v1185 = vadd.f32 %v743, %v1184
          %v1186 = vpop.f32.mrb[0].mxu0
          %v1187 = vadd.f32 %v747, %v1186
          %v1188 = vpop.f32.mrb[0].mxu0
          %v1189 = vadd.f32 %v743, %v1188
          %v1190 = vpop.f32.mrb[0].mxu0
          %v1191 = vadd.f32 %v747, %v1190
          %1192 = vmatprep.mubr.bf16.mxu0 %v865
          %1193 = vmatmul.mubr.bf16.gmra.mrb[0].mxu0 %v864
          %v1194 = vpop.f32.mrb[0].mxu0
          %v1195 = vadd.f32 %v743, %v1194
          %v1196 = vpop.f32.mrb[0].mxu0
          %v1197 = vadd.f32 %v747, %v1196
          %v1198 = vpop.f32.mrb[0].mxu0
          %v1199 = vadd.f32 %v743, %v1198
          %v1200 = vpop.f32.mrb[0].mxu0
          %v1201 = vadd.f32 %v747, %v1200
          %1202 = vmatprep.mubr.bf16.mxu0 %v867
          %1203 = vmatmul.mubr.bf16.gmra.mrb[0].mxu0 %v866
          %v1204 = vpop.f32.mrb[0].mxu0
          %v1205 = vadd.f32 %v743, %v1204
          %v1206 = vpop.f32.mrb[0].mxu0
          %v1207 = vadd.f32 %v747, %v1206
          %v1208 = vpop.f32.mrb[0].mxu0
          %v1209 = vadd.f32 %v743, %v1208
          %v1210 = vpop.f32.mrb[0].mxu0
          %v1211 = vadd.f32 %v747, %v1210
          %1212 = vmatprep.mubr.bf16.mxu0 %v869
          %1213 = vmatmul.mubr.bf16.gmra.mrb[0].mxu0 %v868
          %v1214 = vpop.f32.mrb[0].mxu0
          %v1215 = vadd.f32 %v743, %v1214
          %v1216 = vpop.f32.mrb[0].mxu0
          %v1217 = vadd.f32 %v747, %v1216
          %v1218 = vpop.f32.mrb[0].mxu0
          %v1219 = vadd.f32 %v743, %v1218
          %v1220 = vpop.f32.mrb[0].mxu0
          %v1221 = vadd.f32 %v747, %v1220
          %1222 = vmatprep.mubr.bf16.mxu0 %v871
          %1223 = vmatmul.mubr.bf16.gmra.mrb[0].mxu0 %v870
          %v1224 = vpop.f32.mrb[0].mxu0
          %v1225 = vadd.f32 %v743, %v1224
          %v1226 = vpop.f32.mrb[0].mxu0
          %v1227 = vadd.f32 %v747, %v1226
          %v1228 = vpop.f32.mrb[0].mxu0
          %v1229 = vadd.f32 %v743, %v1228
          %v1230 = vpop.f32.mrb[0].mxu0
          %v1231 = vadd.f32 %v747, %v1230
          %1232 = vmatprep.mubr.bf16.mxu0 %v873
          %1233 = vmatmul.mubr.bf16.gmra.mrb[0].mxu0 %v872
          %v1234 = vpop.f32.mrb[0].mxu0
          %v1235 = vadd.f32 %v743, %v1234
          %v1236 = vpop.f32.mrb[0].mxu0
          %v1237 = vadd.f32 %v747, %v1236
          %v1238 = vpop.f32.mrb[0].mxu0
          %v1239 = vadd.f32 %v743, %v1238
          %v1240 = vpop.f32.mrb[0].mxu0
          %v1241 = vadd.f32 %v747, %v1240
          %1242 = vmatprep.mubr.bf16.mxu0 %v875
          %1243 = vmatmul.mubr.bf16.gmra.mrb[0].mxu0 %v874
          %v1244 = vpop.f32.mrb[0].mxu0
          %v1245 = vadd.f32 %v743, %v1244
          %v1246 = vpop.f32.mrb[0].mxu0
          %v1247 = vadd.f32 %v747, %v1246
          %v1248 = vpop.f32.mrb[0].mxu0
          %v1249 = vadd.f32 %v743, %v1248
          %v1250 = vpop.f32.mrb[0].mxu0
          %v1251 = vadd.f32 %v747, %v1250
          %1252 = vmatprep.mubr.bf16.mxu0 %v877
          %1253 = vmatmul.mubr.bf16.gmra.mrb[0].mxu0 %v876
          %v1254 = vpop.f32.mrb[0].mxu0
          %v1255 = vadd.f32 %v743, %v1254
          %v1256 = vpop.f32.mrb[0].mxu0
          %v1257 = vadd.f32 %v747, %v1256
          %v1258 = vpop.f32.mrb[0].mxu0
          %v1259 = vadd.f32 %v743, %v1258
          %v1260 = vpop.f32.mrb[0].mxu0
          %v1261 = vadd.f32 %v747, %v1260
          %1262 = vdwg.mxu0
          %v1263 = vld [vmem:[#allocation10] sm:$0xff]
          %v1264 = vld [vmem:[#allocation10 + $0x8] sm:$0xff]
          %v1265 = vld [vmem:[#allocation10 + $0x10] sm:$0xff]
          %v1266 = vld [vmem:[#allocation10 + $0x18] sm:$0xff]
          %v1267 = vld [vmem:[#allocation10 + $0x20] sm:$0xff]
          %v1268 = vld [vmem:[#allocation10 + $0x28] sm:$0xff]
          %v1269 = vld [vmem:[#allocation10 + $0x30] sm:$0xff]
          %v1270 = vld [vmem:[#allocation10 + $0x38] sm:$0xff]
          %v1271 = vld [vmem:[#allocation10 + $0x40] sm:$0xff]
          %v1272 = vld [vmem:[#allocation10 + $0x48] sm:$0xff]
          %v1273 = vld [vmem:[#allocation10 + $0x50] sm:$0xff]
          %v1274 = vld [vmem:[#allocation10 + $0x58] sm:$0xff]
          %v1275 = vld [vmem:[#allocation10 + $0x60] sm:$0xff]
          %v1276 = vld [vmem:[#allocation10 + $0x68] sm:$0xff]
          %v1277 = vld [vmem:[#allocation10 + $0x70] sm:$0xff]
          %v1278 = vld [vmem:[#allocation10 + $0x78] sm:$0xff]
          %v1279 = vld [vmem:[#allocation10 + $0x80] sm:$0xff]
          %v1280 = vld [vmem:[#allocation10 + $0x88] sm:$0xff]
          %v1281 = vld [vmem:[#allocation10 + $0x90] sm:$0xff]
          %v1282 = vld [vmem:[#allocation10 + $0x98] sm:$0xff]
          %v1283 = vld [vmem:[#allocation10 + $0xa0] sm:$0xff]
          %v1284 = vld [vmem:[#allocation10 + $0xa8] sm:$0xff]
          %v1285 = vld [vmem:[#allocation10 + $0xb0] sm:$0xff]
          %v1286 = vld [vmem:[#allocation10 + $0xb8] sm:$0xff]
          %v1287 = vld [vmem:[#allocation10 + $0xc0] sm:$0xff]
          %v1288 = vld [vmem:[#allocation10 + $0xc8] sm:$0xff]
          %v1289 = vld [vmem:[#allocation10 + $0xd0] sm:$0xff]
          %v1290 = vld [vmem:[#allocation10 + $0xd8] sm:$0xff]
          %v1291 = vld [vmem:[#allocation10 + $0xe0] sm:$0xff]
          %v1292 = vld [vmem:[#allocation10 + $0xe8] sm:$0xff]
          %v1293 = vld [vmem:[#allocation10 + $0xf0] sm:$0xff]
          %v1294 = vld [vmem:[#allocation10 + $0xf8] sm:$0xff]
          %v1295 = vld [vmem:[%s6] sm:$0x3]
          %v1297 = vlaneseq
          %v1298 = vshrl.u32 %v1297, 7
          %v1299 = vsub.s32 0, %v1298
          %v1300 = vrot.slane %v1295, %v1299
          %v1301 = vlaneseq
          %v1302 = vshrl.u32 %v1301, 7
          %v1303 = vsub.s32 1, %v1302
          %v1304 = vrot.slane %v1295, %v1303
          %v1339 = vunpack.c.l.b16 %v1263
          %v1340 = vunpack.c.h.b16 %v1263
          %v1341 = vunpack.c.l.b16 %v1264
          %v1342 = vunpack.c.h.b16 %v1264
          %v1343 = vunpack.c.l.b16 %v1265
          %v1344 = vunpack.c.h.b16 %v1265
          %v1345 = vunpack.c.l.b16 %v1266
          %v1346 = vunpack.c.h.b16 %v1266
          %v1347 = vunpack.c.l.b16 %v1267
          %v1348 = vunpack.c.h.b16 %v1267
          %v1349 = vunpack.c.l.b16 %v1268
          %v1350 = vunpack.c.h.b16 %v1268
          %v1351 = vunpack.c.l.b16 %v1269
          %v1352 = vunpack.c.h.b16 %v1269
          %v1353 = vunpack.c.l.b16 %v1270
          %v1354 = vunpack.c.h.b16 %v1270
          %v1355 = vunpack.c.l.b16 %v1271
          %v1356 = vunpack.c.h.b16 %v1271
          %v1357 = vunpack.c.l.b16 %v1272
          %v1358 = vunpack.c.h.b16 %v1272
          %v1359 = vunpack.c.l.b16 %v1273
          %v1360 = vunpack.c.h.b16 %v1273
          %v1361 = vunpack.c.l.b16 %v1274
          %v1362 = vunpack.c.h.b16 %v1274
          %v1363 = vunpack.c.l.b16 %v1275
          %v1364 = vunpack.c.h.b16 %v1275
          %v1365 = vunpack.c.l.b16 %v1276
          %v1366 = vunpack.c.h.b16 %v1276
          %v1367 = vunpack.c.l.b16 %v1277
          %v1368 = vunpack.c.h.b16 %v1277
          %v1369 = vunpack.c.l.b16 %v1278
          %v1370 = vunpack.c.h.b16 %v1278
          %v1371 = vunpack.c.l.b16 %v1279
          %v1372 = vunpack.c.h.b16 %v1279
          %v1373 = vunpack.c.l.b16 %v1280
          %v1374 = vunpack.c.h.b16 %v1280
          %v1375 = vunpack.c.l.b16 %v1281
          %v1376 = vunpack.c.h.b16 %v1281
          %v1377 = vunpack.c.l.b16 %v1282
          %v1378 = vunpack.c.h.b16 %v1282
          %v1379 = vunpack.c.l.b16 %v1283
          %v1380 = vunpack.c.h.b16 %v1283
          %v1381 = vunpack.c.l.b16 %v1284
          %v1382 = vunpack.c.h.b16 %v1284
          %v1383 = vunpack.c.l.b16 %v1285
          %v1384 = vunpack.c.h.b16 %v1285
          %v1385 = vunpack.c.l.b16 %v1286
          %v1386 = vunpack.c.h.b16 %v1286
          %v1387 = vunpack.c.l.b16 %v1287
          %v1388 = vunpack.c.h.b16 %v1287
          %v1389 = vunpack.c.l.b16 %v1288
          %v1390 = vunpack.c.h.b16 %v1288
          %v1391 = vunpack.c.l.b16 %v1289
          %v1392 = vunpack.c.h.b16 %v1289
          %v1393 = vunpack.c.l.b16 %v1290
          %v1394 = vunpack.c.h.b16 %v1290
          %v1395 = vunpack.c.l.b16 %v1291
          %v1396 = vunpack.c.h.b16 %v1291
          %v1397 = vunpack.c.l.b16 %v1292
          %v1398 = vunpack.c.h.b16 %v1292
          %v1399 = vunpack.c.l.b16 %v1293
          %v1400 = vunpack.c.h.b16 %v1293
          %v1401 = vunpack.c.l.b16 %v1294
          %v1402 = vunpack.c.h.b16 %v1294
          %v1403 = vpack.c.b16 %v1341, %v1339
          %v1404 = vpack.c.b16 %v1342, %v1340
          %v1405 = vpack.c.b16 %v1345, %v1343
          %v1406 = vpack.c.b16 %v1346, %v1344
          %v1407 = vpack.c.b16 %v1349, %v1347
          %v1408 = vpack.c.b16 %v1350, %v1348
          %v1409 = vpack.c.b16 %v1353, %v1351
          %v1410 = vpack.c.b16 %v1354, %v1352
          %v1411 = vpack.c.b16 %v1357, %v1355
          %v1412 = vpack.c.b16 %v1358, %v1356
          %v1413 = vpack.c.b16 %v1361, %v1359
          %v1414 = vpack.c.b16 %v1362, %v1360
          %v1415 = vpack.c.b16 %v1365, %v1363
          %v1416 = vpack.c.b16 %v1366, %v1364
          %v1417 = vpack.c.b16 %v1369, %v1367
          %v1418 = vpack.c.b16 %v1370, %v1368
          %v1419 = vpack.c.b16 %v1373, %v1371
          %v1420 = vpack.c.b16 %v1374, %v1372
          %v1421 = vpack.c.b16 %v1377, %v1375
          %v1422 = vpack.c.b16 %v1378, %v1376
          %v1423 = vpack.c.b16 %v1381, %v1379
          %v1424 = vpack.c.b16 %v1382, %v1380
          %v1425 = vpack.c.b16 %v1385, %v1383
          %v1426 = vpack.c.b16 %v1386, %v1384
          %v1427 = vpack.c.b16 %v1389, %v1387
          %v1428 = vpack.c.b16 %v1390, %v1388
          %v1429 = vpack.c.b16 %v1393, %v1391
          %v1430 = vpack.c.b16 %v1394, %v1392
          %v1431 = vpack.c.b16 %v1397, %v1395
          %v1432 = vpack.c.b16 %v1398, %v1396
          %v1433 = vpack.c.b16 %v1401, %v1399
          %v1434 = vpack.c.b16 %v1402, %v1400
          %1467 = vmatprep.subr.bf16.mxu0 %v1404
          %1468 = vmatpush1.bf16.msra.mxu0 %v1403
          %1469 = vmatprep.subr.bf16.mxu0 %v1406
          %1470 = vmatpush1.bf16.msra.mxu0 %v1405
          %1471 = vmatprep.subr.bf16.mxu0 %v1408
          %1472 = vmatpush1.bf16.msra.mxu0 %v1407
          %1473 = vmatprep.subr.bf16.mxu0 %v1410
          %1474 = vmatpush1.bf16.msra.mxu0 %v1409
          %1475 = vmatprep.subr.bf16.mxu0 %v1412
          %1476 = vmatpush1.bf16.msra.mxu0 %v1411
          %1477 = vmatprep.subr.bf16.mxu0 %v1414
          %1478 = vmatpush1.bf16.msra.mxu0 %v1413
          %1479 = vmatprep.subr.bf16.mxu0 %v1416
          %1480 = vmatpush1.bf16.msra.mxu0 %v1415
          %1481 = vmatprep.subr.bf16.mxu0 %v1418
          %1482 = vmatpush1.bf16.msra.mxu0 %v1417
          %1483 = vmatprep.subr.bf16.mxu0 %v1420
          %1484 = vmatpush1.bf16.msra.mxu0 %v1419
          %1485 = vmatprep.subr.bf16.mxu0 %v1422
          %1486 = vmatpush1.bf16.msra.mxu0 %v1421
          %1487 = vmatprep.subr.bf16.mxu0 %v1424
          %1488 = vmatpush1.bf16.msra.mxu0 %v1423
          %1489 = vmatprep.subr.bf16.mxu0 %v1426
          %1490 = vmatpush1.bf16.msra.mxu0 %v1425
          %1491 = vmatprep.subr.bf16.mxu0 %v1428
          %1492 = vmatpush1.bf16.msra.mxu0 %v1427
          %1493 = vmatprep.subr.bf16.mxu0 %v1430
          %1494 = vmatpush1.bf16.msra.mxu0 %v1429
          %1495 = vmatprep.subr.bf16.mxu0 %v1432
          %1496 = vmatpush1.bf16.msra.mxu0 %v1431
          %1497 = vmatprep.subr.bf16.mxu0 %v1434
          %1498 = vmatpush1.bf16.msra.mxu0 %v1433
          %1499 = vmatprep.mubr.bf16.mxu0 %v847
          %1500 = vmatmul.mubr.bf16.gmra.mrb[0].mxu0 %v846
          %v1501 = vpop.f32.mrb[0].mxu0
          %v1502 = vadd.f32 %v1300, %v1501
          %v1503 = vpop.f32.mrb[0].mxu0
          %v1504 = vadd.f32 %v1304, %v1503
          %v1505 = vpop.f32.mrb[0].mxu0
          %v1506 = vadd.f32 %v1300, %v1505
          %v1507 = vpop.f32.mrb[0].mxu0
          %v1508 = vadd.f32 %v1304, %v1507
          %1509 = vmatprep.mubr.bf16.mxu0 %v849
          %1510 = vmatmul.mubr.bf16.gmra.mrb[0].mxu0 %v848
          %v1511 = vpop.f32.mrb[0].mxu0
          %v1512 = vadd.f32 %v1300, %v1511
          %v1513 = vpop.f32.mrb[0].mxu0
          %v1514 = vadd.f32 %v1304, %v1513
          %v1515 = vpop.f32.mrb[0].mxu0
          %v1516 = vadd.f32 %v1300, %v1515
          %v1517 = vpop.f32.mrb[0].mxu0
          %v1518 = vadd.f32 %v1304, %v1517
          %1519 = vmatprep.mubr.bf16.mxu0 %v851
          %1520 = vmatmul.mubr.bf16.gmra.mrb[0].mxu0 %v850
          %v1521 = vpop.f32.mrb[0].mxu0
          %v1522 = vadd.f32 %v1300, %v1521
          %v1523 = vpop.f32.mrb[0].mxu0
          %v1524 = vadd.f32 %v1304, %v1523
          %v1525 = vpop.f32.mrb[0].mxu0
          %v1526 = vadd.f32 %v1300, %v1525
          %v1527 = vpop.f32.mrb[0].mxu0
          %v1528 = vadd.f32 %v1304, %v1527
          %1529 = vmatprep.mubr.bf16.mxu0 %v853
          %1530 = vmatmul.mubr.bf16.gmra.mrb[0].mxu0 %v852
          %v1531 = vpop.f32.mrb[0].mxu0
          %v1532 = vadd.f32 %v1300, %v1531
          %v1533 = vpop.f32.mrb[0].mxu0
          %v1534 = vadd.f32 %v1304, %v1533
          %v1535 = vpop.f32.mrb[0].mxu0
          %v1536 = vadd.f32 %v1300, %v1535
          %v1537 = vpop.f32.mrb[0].mxu0
          %v1538 = vadd.f32 %v1304, %v1537
          %1539 = vmatprep.mubr.bf16.mxu0 %v855
          %1540 = vmatmul.mubr.bf16.gmra.mrb[0].mxu0 %v854
          %v1541 = vpop.f32.mrb[0].mxu0
          %v1542 = vadd.f32 %v1300, %v1541
          %v1543 = vpop.f32.mrb[0].mxu0
          %v1544 = vadd.f32 %v1304, %v1543
          %v1545 = vpop.f32.mrb[0].mxu0
          %v1546 = vadd.f32 %v1300, %v1545
          %v1547 = vpop.f32.mrb[0].mxu0
          %v1548 = vadd.f32 %v1304, %v1547
          %1549 = vmatprep.mubr.bf16.mxu0 %v857
          %1550 = vmatmul.mubr.bf16.gmra.mrb[0].mxu0 %v856
          %v1551 = vpop.f32.mrb[0].mxu0
          %v1552 = vadd.f32 %v1300, %v1551
          %v1553 = vpop.f32.mrb[0].mxu0
          %v1554 = vadd.f32 %v1304, %v1553
          %v1555 = vpop.f32.mrb[0].mxu0
          %v1556 = vadd.f32 %v1300, %v1555
          %v1557 = vpop.f32.mrb[0].mxu0
          %v1558 = vadd.f32 %v1304, %v1557
          %1559 = vmatprep.mubr.bf16.mxu0 %v859
          %1560 = vmatmul.mubr.bf16.gmra.mrb[0].mxu0 %v858
          %v1561 = vpop.f32.mrb[0].mxu0
          %v1562 = vadd.f32 %v1300, %v1561
          %v1563 = vpop.f32.mrb[0].mxu0
          %v1564 = vadd.f32 %v1304, %v1563
          %v1565 = vpop.f32.mrb[0].mxu0
          %v1566 = vadd.f32 %v1300, %v1565
          %v1567 = vpop.f32.mrb[0].mxu0
          %v1568 = vadd.f32 %v1304, %v1567
          %1569 = vmatprep.mubr.bf16.mxu0 %v861
          %1570 = vmatmul.mubr.bf16.gmra.mrb[0].mxu0 %v860
          %v1571 = vpop.f32.mrb[0].mxu0
          %v1572 = vadd.f32 %v1300, %v1571
          %v1573 = vpop.f32.mrb[0].mxu0
          %v1574 = vadd.f32 %v1304, %v1573
          %v1575 = vpop.f32.mrb[0].mxu0
          %v1576 = vadd.f32 %v1300, %v1575
          %v1577 = vpop.f32.mrb[0].mxu0
          %v1578 = vadd.f32 %v1304, %v1577
          %1579 = vmatprep.mubr.bf16.mxu0 %v863
          %1580 = vmatmul.mubr.bf16.gmra.mrb[0].mxu0 %v862
          %v1581 = vpop.f32.mrb[0].mxu0
          %v1582 = vadd.f32 %v1300, %v1581
          %v1583 = vpop.f32.mrb[0].mxu0
          %v1584 = vadd.f32 %v1304, %v1583
          %v1585 = vpop.f32.mrb[0].mxu0
          %v1586 = vadd.f32 %v1300, %v1585
          %v1587 = vpop.f32.mrb[0].mxu0
          %v1588 = vadd.f32 %v1304, %v1587
          %1589 = vmatprep.mubr.bf16.mxu0 %v865
          %1590 = vmatmul.mubr.bf16.gmra.mrb[0].mxu0 %v864
          %v1591 = vpop.f32.mrb[0].mxu0
          %v1592 = vadd.f32 %v1300, %v1591
          %v1593 = vpop.f32.mrb[0].mxu0
          %v1594 = vadd.f32 %v1304, %v1593
          %v1595 = vpop.f32.mrb[0].mxu0
          %v1596 = vadd.f32 %v1300, %v1595
          %v1597 = vpop.f32.mrb[0].mxu0
          %v1598 = vadd.f32 %v1304, %v1597
          %1599 = vmatprep.mubr.bf16.mxu0 %v867
          %1600 = vmatmul.mubr.bf16.gmra.mrb[0].mxu0 %v866
          %v1601 = vpop.f32.mrb[0].mxu0
          %v1602 = vadd.f32 %v1300, %v1601
          %v1603 = vpop.f32.mrb[0].mxu0
          %v1604 = vadd.f32 %v1304, %v1603
          %v1605 = vpop.f32.mrb[0].mxu0
          %v1606 = vadd.f32 %v1300, %v1605
          %v1607 = vpop.f32.mrb[0].mxu0
          %v1608 = vadd.f32 %v1304, %v1607
          %1609 = vmatprep.mubr.bf16.mxu0 %v869
          %1610 = vmatmul.mubr.bf16.gmra.mrb[0].mxu0 %v868
          %v1611 = vpop.f32.mrb[0].mxu0
          %v1612 = vadd.f32 %v1300, %v1611
          %v1613 = vpop.f32.mrb[0].mxu0
          %v1614 = vadd.f32 %v1304, %v1613
          %v1615 = vpop.f32.mrb[0].mxu0
          %v1616 = vadd.f32 %v1300, %v1615
          %v1617 = vpop.f32.mrb[0].mxu0
          %v1618 = vadd.f32 %v1304, %v1617
          %1619 = vmatprep.mubr.bf16.mxu0 %v871
          %1620 = vmatmul.mubr.bf16.gmra.mrb[0].mxu0 %v870
          %v1621 = vpop.f32.mrb[0].mxu0
          %v1622 = vadd.f32 %v1300, %v1621
          %v1623 = vpop.f32.mrb[0].mxu0
          %v1624 = vadd.f32 %v1304, %v1623
          %v1625 = vpop.f32.mrb[0].mxu0
          %v1626 = vadd.f32 %v1300, %v1625
          %v1627 = vpop.f32.mrb[0].mxu0
          %v1628 = vadd.f32 %v1304, %v1627
          %1629 = vmatprep.mubr.bf16.mxu0 %v873
          %1630 = vmatmul.mubr.bf16.gmra.mrb[0].mxu0 %v872
          %v1631 = vpop.f32.mrb[0].mxu0
          %v1632 = vadd.f32 %v1300, %v1631
          %v1633 = vpop.f32.mrb[0].mxu0
          %v1634 = vadd.f32 %v1304, %v1633
          %v1635 = vpop.f32.mrb[0].mxu0
          %v1636 = vadd.f32 %v1300, %v1635
          %v1637 = vpop.f32.mrb[0].mxu0
          %v1638 = vadd.f32 %v1304, %v1637
          %1639 = vmatprep.mubr.bf16.mxu0 %v875
          %1640 = vmatmul.mubr.bf16.gmra.mrb[0].mxu0 %v874
          %v1641 = vpop.f32.mrb[0].mxu0
          %v1642 = vadd.f32 %v1300, %v1641
          %v1643 = vpop.f32.mrb[0].mxu0
          %v1644 = vadd.f32 %v1304, %v1643
          %v1645 = vpop.f32.mrb[0].mxu0
          %v1646 = vadd.f32 %v1300, %v1645
          %v1647 = vpop.f32.mrb[0].mxu0
          %v1648 = vadd.f32 %v1304, %v1647
          %1649 = vmatprep.mubr.bf16.mxu0 %v877
          %1650 = vmatmul.mubr.bf16.gmra.mrb[0].mxu0 %v876
          %v1651 = vpop.f32.mrb[0].mxu0
          %v1652 = vadd.f32 %v1300, %v1651
          %v1653 = vpop.f32.mrb[0].mxu0
          %v1654 = vadd.f32 %v1304, %v1653
          %v1655 = vpop.f32.mrb[0].mxu0
          %v1656 = vadd.f32 %v1300, %v1655
          %v1657 = vpop.f32.mrb[0].mxu0
          %v1658 = vadd.f32 %v1304, %v1657
          %1659 = vdwg.mxu0
          %1660 = vxpose.xlu0.b32.start [1/16] %v1105, 128
          %1661 = vxpose.xlu0.b32.cont [2/16] %v1109, 128
          %1662 = vxpose.xlu0.b32.cont [3/16] %v1115, 128
          %1663 = vxpose.xlu0.b32.cont [4/16] %v1119, 128
          %1664 = vxpose.xlu0.b32.cont [5/16] %v1125, 128
          %1665 = vxpose.xlu0.b32.cont [6/16] %v1129, 128
          %1666 = vxpose.xlu0.b32.cont [7/16] %v1135, 128
          %1667 = vxpose.xlu0.b32.cont [8/16] %v1139, 128
          %1668 = vxpose.xlu0.b32.cont [9/16] %v1145, 128
          %1669 = vxpose.xlu0.b32.cont [10/16] %v1149, 128
          %1670 = vxpose.xlu0.b32.cont [11/16] %v1155, 128
          %1671 = vxpose.xlu0.b32.cont [12/16] %v1159, 128
          %1672 = vxpose.xlu0.b32.cont [13/16] %v1165, 128
          %1673 = vxpose.xlu0.b32.cont [14/16] %v1169, 128
          %1674 = vxpose.xlu0.b32.cont [15/16] %v1175, 128
          %1675 = vxpose.xlu0.b32.end [16/16] %v1179, 128
          %v1676 = vpop.trf.xlu0
          %v1677 = vpop.trf.xlu0
          %v1678 = vpop.trf.xlu0
          %v1679 = vpop.trf.xlu0
          %v1680 = vpop.trf.xlu0
          %v1681 = vpop.trf.xlu0
          %v1682 = vpop.trf.xlu0
          %v1683 = vpop.trf.xlu0
          %v1684 = vpop.trf.xlu0
          %v1685 = vpop.trf.xlu0
          %v1686 = vpop.trf.xlu0
          %v1687 = vpop.trf.xlu0
          %v1688 = vpop.trf.xlu0
          %v1689 = vpop.trf.xlu0
          %v1690 = vpop.trf.xlu0
          %v1691 = vpop.trf.xlu0
          %1692 = vxpose.xlu0.b32.start [1/16] %v1107, 128
          %1693 = vxpose.xlu0.b32.cont [2/16] %v1111, 128
          %1694 = vxpose.xlu0.b32.cont [3/16] %v1117, 128
          %1695 = vxpose.xlu0.b32.cont [4/16] %v1121, 128
          %1696 = vxpose.xlu0.b32.cont [5/16] %v1127, 128
          %1697 = vxpose.xlu0.b32.cont [6/16] %v1131, 128
          %1698 = vxpose.xlu0.b32.cont [7/16] %v1137, 128
          %1699 = vxpose.xlu0.b32.cont [8/16] %v1141, 128
          %1700 = vxpose.xlu0.b32.cont [9/16] %v1147, 128
          %1701 = vxpose.xlu0.b32.cont [10/16] %v1151, 128
          %1702 = vxpose.xlu0.b32.cont [11/16] %v1157, 128
          %1703 = vxpose.xlu0.b32.cont [12/16] %v1161, 128
          %1704 = vxpose.xlu0.b32.cont [13/16] %v1167, 128
          %1705 = vxpose.xlu0.b32.cont [14/16] %v1171, 128
          %1706 = vxpose.xlu0.b32.cont [15/16] %v1177, 128
          %1707 = vxpose.xlu0.b32.end [16/16] %v1181, 128
          %v1708 = vpop.trf.xlu0
          %v1709 = vpop.trf.xlu0
          %v1710 = vpop.trf.xlu0
          %v1711 = vpop.trf.xlu0
          %v1712 = vpop.trf.xlu0
          %v1713 = vpop.trf.xlu0
          %v1714 = vpop.trf.xlu0
          %v1715 = vpop.trf.xlu0
          %v1716 = vpop.trf.xlu0
          %v1717 = vpop.trf.xlu0
          %v1718 = vpop.trf.xlu0
          %v1719 = vpop.trf.xlu0
          %v1720 = vpop.trf.xlu0
          %v1721 = vpop.trf.xlu0
          %v1722 = vpop.trf.xlu0
          %v1723 = vpop.trf.xlu0
          %1724 = vxpose.xlu0.b32.start [1/16] %v1185, 128
          %1725 = vxpose.xlu0.b32.cont [2/16] %v1189, 128
          %1726 = vxpose.xlu0.b32.cont [3/16] %v1195, 128
          %1727 = vxpose.xlu0.b32.cont [4/16] %v1199, 128
          %1728 = vxpose.xlu0.b32.cont [5/16] %v1205, 128
          %1729 = vxpose.xlu0.b32.cont [6/16] %v1209, 128
          %1730 = vxpose.xlu0.b32.cont [7/16] %v1215, 128
          %1731 = vxpose.xlu0.b32.cont [8/16] %v1219, 128
          %1732 = vxpose.xlu0.b32.cont [9/16] %v1225, 128
          %1733 = vxpose.xlu0.b32.cont [10/16] %v1229, 128
          %1734 = vxpose.xlu0.b32.cont [11/16] %v1235, 128
          %1735 = vxpose.xlu0.b32.cont [12/16] %v1239, 128
          %1736 = vxpose.xlu0.b32.cont [13/16] %v1245, 128
          %1737 = vxpose.xlu0.b32.cont [14/16] %v1249, 128
          %1738 = vxpose.xlu0.b32.cont [15/16] %v1255, 128
          %1739 = vxpose.xlu0.b32.end [16/16] %v1259, 128
          %v1740 = vpop.trf.xlu0
          %v1741 = vpop.trf.xlu0
          %v1742 = vpop.trf.xlu0
          %v1743 = vpop.trf.xlu0
          %v1744 = vpop.trf.xlu0
          %v1745 = vpop.trf.xlu0
          %v1746 = vpop.trf.xlu0
          %v1747 = vpop.trf.xlu0
          %v1748 = vpop.trf.xlu0
          %v1749 = vpop.trf.xlu0
          %v1750 = vpop.trf.xlu0
          %v1751 = vpop.trf.xlu0
          %v1752 = vpop.trf.xlu0
          %v1753 = vpop.trf.xlu0
          %v1754 = vpop.trf.xlu0
          %v1755 = vpop.trf.xlu0
          %1756 = vxpose.xlu0.b32.start [1/16] %v1187, 128
          %1757 = vxpose.xlu0.b32.cont [2/16] %v1191, 128
          %1758 = vxpose.xlu0.b32.cont [3/16] %v1197, 128
          %1759 = vxpose.xlu0.b32.cont [4/16] %v1201, 128
          %1760 = vxpose.xlu0.b32.cont [5/16] %v1207, 128
          %1761 = vxpose.xlu0.b32.cont [6/16] %v1211, 128
          %1762 = vxpose.xlu0.b32.cont [7/16] %v1217, 128
          %1763 = vxpose.xlu0.b32.cont [8/16] %v1221, 128
          %1764 = vxpose.xlu0.b32.cont [9/16] %v1227, 128
          %1765 = vxpose.xlu0.b32.cont [10/16] %v1231, 128
          %1766 = vxpose.xlu0.b32.cont [11/16] %v1237, 128
          %1767 = vxpose.xlu0.b32.cont [12/16] %v1241, 128
          %1768 = vxpose.xlu0.b32.cont [13/16] %v1247, 128
          %1769 = vxpose.xlu0.b32.cont [14/16] %v1251, 128
          %1770 = vxpose.xlu0.b32.cont [15/16] %v1257, 128
          %1771 = vxpose.xlu0.b32.end [16/16] %v1261, 128
          %v1772 = vpop.trf.xlu0
          %v1773 = vpop.trf.xlu0
          %v1774 = vpop.trf.xlu0
          %v1775 = vpop.trf.xlu0
          %v1776 = vpop.trf.xlu0
          %v1777 = vpop.trf.xlu0
          %v1778 = vpop.trf.xlu0
          %v1779 = vpop.trf.xlu0
          %v1780 = vpop.trf.xlu0
          %v1781 = vpop.trf.xlu0
          %v1782 = vpop.trf.xlu0
          %v1783 = vpop.trf.xlu0
          %v1784 = vpop.trf.xlu0
          %v1785 = vpop.trf.xlu0
          %v1786 = vpop.trf.xlu0
          %v1787 = vpop.trf.xlu0
          %v1788 = vpack.c.bf16 %v1677, %v1676
          %v1789 = vpack.c.bf16 %v1741, %v1740
          %v1790 = vpack.c.bf16 %v1679, %v1678
          %v1791 = vpack.c.bf16 %v1743, %v1742
          %v1792 = vpack.c.bf16 %v1681, %v1680
          %v1793 = vpack.c.bf16 %v1745, %v1744
          %v1794 = vpack.c.bf16 %v1683, %v1682
          %v1795 = vpack.c.bf16 %v1747, %v1746
          %v1796 = vpack.c.bf16 %v1685, %v1684
          %v1797 = vpack.c.bf16 %v1749, %v1748
          %v1798 = vpack.c.bf16 %v1687, %v1686
          %v1799 = vpack.c.bf16 %v1751, %v1750
          %v1800 = vpack.c.bf16 %v1689, %v1688
          %v1801 = vpack.c.bf16 %v1753, %v1752
          %v1802 = vpack.c.bf16 %v1691, %v1690
          %v1803 = vpack.c.bf16 %v1755, %v1754
          %v1804 = vpack.c.bf16 %v1709, %v1708
          %v1805 = vpack.c.bf16 %v1773, %v1772
          %v1806 = vpack.c.bf16 %v1711, %v1710
          %v1807 = vpack.c.bf16 %v1775, %v1774
          %v1808 = vpack.c.bf16 %v1713, %v1712
          %v1809 = vpack.c.bf16 %v1777, %v1776
          %v1810 = vpack.c.bf16 %v1715, %v1714
          %v1811 = vpack.c.bf16 %v1779, %v1778
          %v1812 = vpack.c.bf16 %v1717, %v1716
          %v1813 = vpack.c.bf16 %v1781, %v1780
          %v1814 = vpack.c.bf16 %v1719, %v1718
          %v1815 = vpack.c.bf16 %v1783, %v1782
          %v1816 = vpack.c.bf16 %v1721, %v1720
          %v1817 = vpack.c.bf16 %v1785, %v1784
          %v1818 = vpack.c.bf16 %v1723, %v1722
          %v1819 = vpack.c.bf16 %v1787, %v1786
          %1820 = vst [vmem:[#allocation2] sm:$0xff] %v1788
          %1821 = vst [vmem:[#allocation2 + $0x8] sm:$0xff] %v1789
          %1822 = vst [vmem:[#allocation2 + $0x10] sm:$0xff] %v1790
          %1823 = vst [vmem:[#allocation2 + $0x18] sm:$0xff] %v1791
          %1824 = vst [vmem:[#allocation2 + $0x20] sm:$0xff] %v1792
          %1825 = vst [vmem:[#allocation2 + $0x28] sm:$0xff] %v1793
          %1826 = vst [vmem:[#allocation2 + $0x30] sm:$0xff] %v1794
          %1827 = vst [vmem:[#allocation2 + $0x38] sm:$0xff] %v1795
          %1828 = vst [vmem:[#allocation2 + $0x40] sm:$0xff] %v1796
          %1829 = vst [vmem:[#allocation2 + $0x48] sm:$0xff] %v1797
          %1830 = vst [vmem:[#allocation2 + $0x50] sm:$0xff] %v1798
          %1831 = vst [vmem:[#allocation2 + $0x58] sm:$0xff] %v1799
          %1832 = vst [vmem:[#allocation2 + $0x60] sm:$0xff] %v1800
          %1833 = vst [vmem:[#allocation2 + $0x68] sm:$0xff] %v1801
          %1834 = vst [vmem:[#allocation2 + $0x70] sm:$0xff] %v1802
          %1835 = vst [vmem:[#allocation2 + $0x78] sm:$0xff] %v1803
          %1836 = vst [vmem:[#allocation2 + $0x80] sm:$0xff] %v1804
          %1837 = vst [vmem:[#allocation2 + $0x88] sm:$0xff] %v1805
          %1838 = vst [vmem:[#allocation2 + $0x90] sm:$0xff] %v1806
          %1839 = vst [vmem:[#allocation2 + $0x98] sm:$0xff] %v1807
          %1840 = vst [vmem:[#allocation2 + $0xa0] sm:$0xff] %v1808
          %1841 = vst [vmem:[#allocation2 + $0xa8] sm:$0xff] %v1809
          %1842 = vst [vmem:[#allocation2 + $0xb0] sm:$0xff] %v1810
          %1843 = vst [vmem:[#allocation2 + $0xb8] sm:$0xff] %v1811
          %1844 = vst [vmem:[#allocation2 + $0xc0] sm:$0xff] %v1812
          %1845 = vst [vmem:[#allocation2 + $0xc8] sm:$0xff] %v1813
          %1846 = vst [vmem:[#allocation2 + $0xd0] sm:$0xff] %v1814
          %1847 = vst [vmem:[#allocation2 + $0xd8] sm:$0xff] %v1815
          %1848 = vst [vmem:[#allocation2 + $0xe0] sm:$0xff] %v1816
          %1849 = vst [vmem:[#allocation2 + $0xe8] sm:$0xff] %v1817
          %1850 = vst [vmem:[#allocation2 + $0xf0] sm:$0xff] %v1818
          %1851 = vst [vmem:[#allocation2 + $0xf8] sm:$0xff] %v1819
          %v1852 = vpack.c.bf16 %v1506, %v1502
          %v1853 = vpack.c.bf16 %v1508, %v1504
          %v1854 = vpack.c.bf16 %v1516, %v1512
          %v1855 = vpack.c.bf16 %v1518, %v1514
          %v1856 = vpack.c.bf16 %v1526, %v1522
          %v1857 = vpack.c.bf16 %v1528, %v1524
          %v1858 = vpack.c.bf16 %v1536, %v1532
          %v1859 = vpack.c.bf16 %v1538, %v1534
          %v1860 = vpack.c.bf16 %v1546, %v1542
          %v1861 = vpack.c.bf16 %v1548, %v1544
          %v1862 = vpack.c.bf16 %v1556, %v1552
          %v1863 = vpack.c.bf16 %v1558, %v1554
          %v1864 = vpack.c.bf16 %v1566, %v1562
          %v1865 = vpack.c.bf16 %v1568, %v1564
          %v1866 = vpack.c.bf16 %v1576, %v1572
          %v1867 = vpack.c.bf16 %v1578, %v1574
          %v1868 = vpack.c.bf16 %v1586, %v1582
          %v1869 = vpack.c.bf16 %v1588, %v1584
          %v1870 = vpack.c.bf16 %v1596, %v1592
          %v1871 = vpack.c.bf16 %v1598, %v1594
          %v1872 = vpack.c.bf16 %v1606, %v1602
          %v1873 = vpack.c.bf16 %v1608, %v1604
          %v1874 = vpack.c.bf16 %v1616, %v1612
          %v1875 = vpack.c.bf16 %v1618, %v1614
          %v1876 = vpack.c.bf16 %v1626, %v1622
          %v1877 = vpack.c.bf16 %v1628, %v1624
          %v1878 = vpack.c.bf16 %v1636, %v1632
          %v1879 = vpack.c.bf16 %v1638, %v1634
          %v1880 = vpack.c.bf16 %v1646, %v1642
          %v1881 = vpack.c.bf16 %v1648, %v1644
          %v1882 = vpack.c.bf16 %v1656, %v1652
          %v1883 = vpack.c.bf16 %v1658, %v1654
          %1884 = vst [vmem:[#allocation3] sm:$0xff] %v1852
          %1885 = vst [vmem:[#allocation3 + $0x8] sm:$0xff] %v1853
          %1886 = vst [vmem:[#allocation3 + $0x10] sm:$0xff] %v1854
          %1887 = vst [vmem:[#allocation3 + $0x18] sm:$0xff] %v1855
          %1888 = vst [vmem:[#allocation3 + $0x20] sm:$0xff] %v1856
          %1889 = vst [vmem:[#allocation3 + $0x28] sm:$0xff] %v1857
          %1890 = vst [vmem:[#allocation3 + $0x30] sm:$0xff] %v1858
          %1891 = vst [vmem:[#allocation3 + $0x38] sm:$0xff] %v1859
          %1892 = vst [vmem:[#allocation3 + $0x40] sm:$0xff] %v1860
          %1893 = vst [vmem:[#allocation3 + $0x48] sm:$0xff] %v1861
          %1894 = vst [vmem:[#allocation3 + $0x50] sm:$0xff] %v1862
          %1895 = vst [vmem:[#allocation3 + $0x58] sm:$0xff] %v1863
          %1896 = vst [vmem:[#allocation3 + $0x60] sm:$0xff] %v1864
          %1897 = vst [vmem:[#allocation3 + $0x68] sm:$0xff] %v1865
          %1898 = vst [vmem:[#allocation3 + $0x70] sm:$0xff] %v1866
          %1899 = vst [vmem:[#allocation3 + $0x78] sm:$0xff] %v1867
          %1900 = vst [vmem:[#allocation3 + $0x80] sm:$0xff] %v1868
          %1901 = vst [vmem:[#allocation3 + $0x88] sm:$0xff] %v1869
          %1902 = vst [vmem:[#allocation3 + $0x90] sm:$0xff] %v1870
          %1903 = vst [vmem:[#allocation3 + $0x98] sm:$0xff] %v1871
          %1904 = vst [vmem:[#allocation3 + $0xa0] sm:$0xff] %v1872
          %1905 = vst [vmem:[#allocation3 + $0xa8] sm:$0xff] %v1873
          %1906 = vst [vmem:[#allocation3 + $0xb0] sm:$0xff] %v1874
          %1907 = vst [vmem:[#allocation3 + $0xb8] sm:$0xff] %v1875
          %1908 = vst [vmem:[#allocation3 + $0xc0] sm:$0xff] %v1876
          %1909 = vst [vmem:[#allocation3 + $0xc8] sm:$0xff] %v1877
          %1910 = vst [vmem:[#allocation3 + $0xd0] sm:$0xff] %v1878
          %1911 = vst [vmem:[#allocation3 + $0xd8] sm:$0xff] %v1879
          %1912 = vst [vmem:[#allocation3 + $0xe0] sm:$0xff] %v1880
          %1913 = vst [vmem:[#allocation3 + $0xe8] sm:$0xff] %v1881
          %1914 = vst [vmem:[#allocation3 + $0xf0] sm:$0xff] %v1882
          %1915 = vst [vmem:[#allocation3 + $0xf8] sm:$0xff] %v1883
        $region120: #{tpu_custom_call.1} parent=87 // pred_fallthru
          _
        %s1916 = smul.u32 %s42, 128
        %s1917 = sshra.s32 %s1916, 3
        %s1918 = sand.u32 %s1916, 7
        %s1919 = smul.u32 %s1917, 2
        %s1920 = smul.addr %s1919, 4
        %s1921 = scalar_lea.vmem %s593, %s1920 [#allocation4]
        %v1922 = vld [vmem:[%s1921] sm:$0xff]
        %v1923 = vld [vmem:[%s1921 + $0x8] sm:$0xff]
        %v1924 = vld [vmem:[%s1921 + $0x10] sm:$0xff]
        %v1925 = vld [vmem:[%s1921 + $0x18] sm:$0xff]
        %v1926 = vld [vmem:[%s1921 + $0x20] sm:$0xff]
        %v1927 = vld [vmem:[%s1921 + $0x28] sm:$0xff]
        %v1928 = vld [vmem:[%s1921 + $0x30] sm:$0xff]
        %v1929 = vld [vmem:[%s1921 + $0x38] sm:$0xff]
        %v1930 = vld [vmem:[%s1921 + $0x40] sm:$0xff]
        %v1931 = vld [vmem:[%s1921 + $0x48] sm:$0xff]
        %v1932 = vld [vmem:[%s1921 + $0x50] sm:$0xff]
        %v1933 = vld [vmem:[%s1921 + $0x58] sm:$0xff]
        %v1934 = vld [vmem:[%s1921 + $0x60] sm:$0xff]
        %v1935 = vld [vmem:[%s1921 + $0x68] sm:$0xff]
        %v1936 = vld [vmem:[%s1921 + $0x70] sm:$0xff]
        %v1937 = vld [vmem:[%s1921 + $0x78] sm:$0xff]
        %v1938 = vld [vmem:[#allocation7] sm:$0xff]
        %v1939 = vld [vmem:[#allocation7 + $0x8] sm:$0xff]
        %v1940 = vld [vmem:[#allocation7 + $0x10] sm:$0xff]
        %v1941 = vld [vmem:[#allocation7 + $0x18] sm:$0xff]
        %v1942 = vld [vmem:[#allocation7 + $0x20] sm:$0xff]
        %v1943 = vld [vmem:[#allocation7 + $0x28] sm:$0xff]
        %v1944 = vld [vmem:[#allocation7 + $0x30] sm:$0xff]
        %v1945 = vld [vmem:[#allocation7 + $0x38] sm:$0xff]
        %v1946 = vld [vmem:[#allocation7 + $0x40] sm:$0xff]
        %v1947 = vld [vmem:[#allocation7 + $0x48] sm:$0xff]
        %v1948 = vld [vmem:[#allocation7 + $0x50] sm:$0xff]
        %v1949 = vld [vmem:[#allocation7 + $0x58] sm:$0xff]
        %v1950 = vld [vmem:[#allocation7 + $0x60] sm:$0xff]
        %v1951 = vld [vmem:[#allocation7 + $0x68] sm:$0xff]
        %v1952 = vld [vmem:[#allocation7 + $0x70] sm:$0xff]
        %v1953 = vld [vmem:[#allocation7 + $0x78] sm:$0xff]
        %v1954 = vld [vmem:[#allocation7 + $0x80] sm:$0xff]
        %v1955 = vld [vmem:[#allocation7 + $0x88] sm:$0xff]
        %v1956 = vld [vmem:[#allocation7 + $0x90] sm:$0xff]
        %v1957 = vld [vmem:[#allocation7 + $0x98] sm:$0xff]
        %v1958 = vld [vmem:[#allocation7 + $0xa0] sm:$0xff]
        %v1959 = vld [vmem:[#allocation7 + $0xa8] sm:$0xff]
        %v1960 = vld [vmem:[#allocation7 + $0xb0] sm:$0xff]
        %v1961 = vld [vmem:[#allocation7 + $0xb8] sm:$0xff]
        %v1962 = vld [vmem:[#allocation7 + $0xc0] sm:$0xff]
        %v1963 = vld [vmem:[#allocation7 + $0xc8] sm:$0xff]
        %v1964 = vld [vmem:[#allocation7 + $0xd0] sm:$0xff]
        %v1965 = vld [vmem:[#allocation7 + $0xd8] sm:$0xff]
        %v1966 = vld [vmem:[#allocation7 + $0xe0] sm:$0xff]
        %v1967 = vld [vmem:[#allocation7 + $0xe8] sm:$0xff]
        %v1968 = vld [vmem:[#allocation7 + $0xf0] sm:$0xff]
        %v1969 = vld [vmem:[#allocation7 + $0xf8] sm:$0xff]
        %v1970 = vld [vmem:[%s2] sm:$0x3]
        %v1972 = vlaneseq
        %v1973 = vshrl.u32 %v1972, 7
        %v1974 = vsub.s32 0, %v1973
        %v1975 = vrot.slane %v1970, %v1974
        %v1976 = vlaneseq
        %v1977 = vshrl.u32 %v1976, 7
        %v1978 = vsub.s32 1, %v1977
        %v1979 = vrot.slane %v1970, %v1978
        %v1998 = vunpack.c.l.b16 %v1922
        %v1999 = vunpack.c.h.b16 %v1922
        %v2000 = vunpack.c.l.b16 %v1923
        %v2001 = vunpack.c.h.b16 %v1923
        %v2002 = vunpack.c.l.b16 %v1924
        %v2003 = vunpack.c.h.b16 %v1924
        %v2004 = vunpack.c.l.b16 %v1925
        %v2005 = vunpack.c.h.b16 %v1925
        %v2006 = vunpack.c.l.b16 %v1926
        %v2007 = vunpack.c.h.b16 %v1926
        %v2008 = vunpack.c.l.b16 %v1927
        %v2009 = vunpack.c.h.b16 %v1927
        %v2010 = vunpack.c.l.b16 %v1928
        %v2011 = vunpack.c.h.b16 %v1928
        %v2012 = vunpack.c.l.b16 %v1929
        %v2013 = vunpack.c.h.b16 %v1929
        %v2014 = vunpack.c.l.b16 %v1930
        %v2015 = vunpack.c.h.b16 %v1930
        %v2016 = vunpack.c.l.b16 %v1931
        %v2017 = vunpack.c.h.b16 %v1931
        %v2018 = vunpack.c.l.b16 %v1932
        %v2019 = vunpack.c.h.b16 %v1932
        %v2020 = vunpack.c.l.b16 %v1933
        %v2021 = vunpack.c.h.b16 %v1933
        %v2022 = vunpack.c.l.b16 %v1934
        %v2023 = vunpack.c.h.b16 %v1934
        %v2024 = vunpack.c.l.b16 %v1935
        %v2025 = vunpack.c.h.b16 %v1935
        %v2026 = vunpack.c.l.b16 %v1936
        %v2027 = vunpack.c.h.b16 %v1936
        %v2028 = vunpack.c.l.b16 %v1937
        %v2029 = vunpack.c.h.b16 %v1937
        %v2030 = vpack.c.b16 %v2000, %v1998
        %v2031 = vpack.c.b16 %v2001, %v1999
        %v2032 = vpack.c.b16 %v2004, %v2002
        %v2033 = vpack.c.b16 %v2005, %v2003
        %v2034 = vpack.c.b16 %v2008, %v2006
        %v2035 = vpack.c.b16 %v2009, %v2007
        %v2036 = vpack.c.b16 %v2012, %v2010
        %v2037 = vpack.c.b16 %v2013, %v2011
        %v2038 = vpack.c.b16 %v2016, %v2014
        %v2039 = vpack.c.b16 %v2017, %v2015
        %v2040 = vpack.c.b16 %v2020, %v2018
        %v2041 = vpack.c.b16 %v2021, %v2019
        %v2042 = vpack.c.b16 %v2024, %v2022
        %v2043 = vpack.c.b16 %v2025, %v2023
        %v2044 = vpack.c.b16 %v2028, %v2026
        %v2045 = vpack.c.b16 %v2029, %v2027
        %v2094 = vunpack.c.l.b16 %v1938
        %v2095 = vunpack.c.h.b16 %v1938
        %v2096 = vunpack.c.l.b16 %v1939
        %v2097 = vunpack.c.h.b16 %v1939
        %v2098 = vunpack.c.l.b16 %v1940
        %v2099 = vunpack.c.h.b16 %v1940
        %v2100 = vunpack.c.l.b16 %v1941
        %v2101 = vunpack.c.h.b16 %v1941
        %v2102 = vunpack.c.l.b16 %v1942
        %v2103 = vunpack.c.h.b16 %v1942
        %v2104 = vunpack.c.l.b16 %v1943
        %v2105 = vunpack.c.h.b16 %v1943
        %v2106 = vunpack.c.l.b16 %v1944
        %v2107 = vunpack.c.h.b16 %v1944
        %v2108 = vunpack.c.l.b16 %v1945
        %v2109 = vunpack.c.h.b16 %v1945
        %v2110 = vunpack.c.l.b16 %v1946
        %v2111 = vunpack.c.h.b16 %v1946
        %v2112 = vunpack.c.l.b16 %v1947
        %v2113 = vunpack.c.h.b16 %v1947
        %v2114 = vunpack.c.l.b16 %v1948
        %v2115 = vunpack.c.h.b16 %v1948
        %v2116 = vunpack.c.l.b16 %v1949
        %v2117 = vunpack.c.h.b16 %v1949
        %v2118 = vunpack.c.l.b16 %v1950
        %v2119 = vunpack.c.h.b16 %v1950
        %v2120 = vunpack.c.l.b16 %v1951
        %v2121 = vunpack.c.h.b16 %v1951
        %v2122 = vunpack.c.l.b16 %v1952
        %v2123 = vunpack.c.h.b16 %v1952
        %v2124 = vunpack.c.l.b16 %v1953
        %v2125 = vunpack.c.h.b16 %v1953
        %v2126 = vunpack.c.l.b16 %v1954
        %v2127 = vunpack.c.h.b16 %v1954
        %v2128 = vunpack.c.l.b16 %v1955
        %v2129 = vunpack.c.h.b16 %v1955
        %v2130 = vunpack.c.l.b16 %v1956
        %v2131 = vunpack.c.h.b16 %v1956
        %v2132 = vunpack.c.l.b16 %v1957
        %v2133 = vunpack.c.h.b16 %v1957
        %v2134 = vunpack.c.l.b16 %v1958
        %v2135 = vunpack.c.h.b16 %v1958
        %v2136 = vunpack.c.l.b16 %v1959
        %v2137 = vunpack.c.h.b16 %v1959
        %v2138 = vunpack.c.l.b16 %v1960
        %v2139 = vunpack.c.h.b16 %v1960
        %v2140 = vunpack.c.l.b16 %v1961
        %v2141 = vunpack.c.h.b16 %v1961
        %v2142 = vunpack.c.l.b16 %v1962
        %v2143 = vunpack.c.h.b16 %v1962
        %v2144 = vunpack.c.l.b16 %v1963
        %v2145 = vunpack.c.h.b16 %v1963
        %v2146 = vunpack.c.l.b16 %v1964
        %v2147 = vunpack.c.h.b16 %v1964
        %v2148 = vunpack.c.l.b16 %v1965
        %v2149 = vunpack.c.h.b16 %v1965
        %v2150 = vunpack.c.l.b16 %v1966
        %v2151 = vunpack.c.h.b16 %v1966
        %v2152 = vunpack.c.l.b16 %v1967
        %v2153 = vunpack.c.h.b16 %v1967
        %v2154 = vunpack.c.l.b16 %v1968
        %v2155 = vunpack.c.h.b16 %v1968
        %v2156 = vunpack.c.l.b16 %v1969
        %v2157 = vunpack.c.h.b16 %v1969
        %v2158 = vpack.c.b16 %v2096, %v2094
        %v2159 = vpack.c.b16 %v2097, %v2095
        %v2160 = vpack.c.b16 %v2100, %v2098
        %v2161 = vpack.c.b16 %v2101, %v2099
        %v2162 = vpack.c.b16 %v2104, %v2102
        %v2163 = vpack.c.b16 %v2105, %v2103
        %v2164 = vpack.c.b16 %v2108, %v2106
        %v2165 = vpack.c.b16 %v2109, %v2107
        %v2166 = vpack.c.b16 %v2112, %v2110
        %v2167 = vpack.c.b16 %v2113, %v2111
        %v2168 = vpack.c.b16 %v2116, %v2114
        %v2169 = vpack.c.b16 %v2117, %v2115
        %v2170 = vpack.c.b16 %v2120, %v2118
        %v2171 = vpack.c.b16 %v2121, %v2119
        %v2172 = vpack.c.b16 %v2124, %v2122
        %v2173 = vpack.c.b16 %v2125, %v2123
        %v2174 = vpack.c.b16 %v2128, %v2126
        %v2175 = vpack.c.b16 %v2129, %v2127
        %v2176 = vpack.c.b16 %v2132, %v2130
        %v2177 = vpack.c.b16 %v2133, %v2131
        %v2178 = vpack.c.b16 %v2136, %v2134
        %v2179 = vpack.c.b16 %v2137, %v2135
        %v2180 = vpack.c.b16 %v2140, %v2138
        %v2181 = vpack.c.b16 %v2141, %v2139
        %v2182 = vpack.c.b16 %v2144, %v2142
        %v2183 = vpack.c.b16 %v2145, %v2143
        %v2184 = vpack.c.b16 %v2148, %v2146
        %v2185 = vpack.c.b16 %v2149, %v2147
        %v2186 = vpack.c.b16 %v2152, %v2150
        %v2187 = vpack.c.b16 %v2153, %v2151
        %v2188 = vpack.c.b16 %v2156, %v2154
        %v2189 = vpack.c.b16 %v2157, %v2155
        %2222 = vmatprep.subr.bf16.mxu0 %v2159
        %2223 = vmatpush1.bf16.msra.mxu0 %v2158
        %2224 = vmatprep.subr.bf16.mxu0 %v2161
        %2225 = vmatpush1.bf16.msra.mxu0 %v2160
        %2226 = vmatprep.subr.bf16.mxu0 %v2163
        %2227 = vmatpush1.bf16.msra.mxu0 %v2162
        %2228 = vmatprep.subr.bf16.mxu0 %v2165
        %2229 = vmatpush1.bf16.msra.mxu0 %v2164
        %2230 = vmatprep.subr.bf16.mxu0 %v2167
        %2231 = vmatpush1.bf16.msra.mxu0 %v2166
        %2232 = vmatprep.subr.bf16.mxu0 %v2169
        %2233 = vmatpush1.bf16.msra.mxu0 %v2168
        %2234 = vmatprep.subr.bf16.mxu0 %v2171
        %2235 = vmatpush1.bf16.msra.mxu0 %v2170
        %2236 = vmatprep.subr.bf16.mxu0 %v2173
        %2237 = vmatpush1.bf16.msra.mxu0 %v2172
        %2238 = vmatprep.subr.bf16.mxu0 %v2175
        %2239 = vmatpush1.bf16.msra.mxu0 %v2174
        %2240 = vmatprep.subr.bf16.mxu0 %v2177
        %2241 = vmatpush1.bf16.msra.mxu0 %v2176
        %2242 = vmatprep.subr.bf16.mxu0 %v2179
        %2243 = vmatpush1.bf16.msra.mxu0 %v2178
        %2244 = vmatprep.subr.bf16.mxu0 %v2181
        %2245 = vmatpush1.bf16.msra.mxu0 %v2180
        %2246 = vmatprep.subr.bf16.mxu0 %v2183
        %2247 = vmatpush1.bf16.msra.mxu0 %v2182
        %2248 = vmatprep.subr.bf16.mxu0 %v2185
        %2249 = vmatpush1.bf16.msra.mxu0 %v2184
        %2250 = vmatprep.subr.bf16.mxu0 %v2187
        %2251 = vmatpush1.bf16.msra.mxu0 %v2186
        %2252 = vmatprep.subr.bf16.mxu0 %v2189
        %2253 = vmatpush1.bf16.msra.mxu0 %v2188
        %2254 = vmatprep.mubr.bf16.mxu0 %v2031
        %2255 = vmatmul.mubr.bf16.gmra.mrb[0].mxu0 %v2030
        %v2256 = vpop.f32.mrb[0].mxu0
        %v2257 = vadd.f32 %v1975, %v2256
        %v2258 = vpop.f32.mrb[0].mxu0
        %v2259 = vadd.f32 %v1979, %v2258
        %v2260 = vpop.f32.mrb[0].mxu0
        %v2261 = vadd.f32 %v1975, %v2260
        %v2262 = vpop.f32.mrb[0].mxu0
        %v2263 = vadd.f32 %v1979, %v2262
        %2264 = vmatprep.mubr.bf16.mxu0 %v2033
        %2265 = vmatmul.mubr.bf16.gmra.mrb[0].mxu0 %v2032
        %v2266 = vpop.f32.mrb[0].mxu0
        %v2267 = vadd.f32 %v1975, %v2266
        %v2268 = vpop.f32.mrb[0].mxu0
        %v2269 = vadd.f32 %v1979, %v2268
        %v2270 = vpop.f32.mrb[0].mxu0
        %v2271 = vadd.f32 %v1975, %v2270
        %v2272 = vpop.f32.mrb[0].mxu0
        %v2273 = vadd.f32 %v1979, %v2272
        %2274 = vmatprep.mubr.bf16.mxu0 %v2035
        %2275 = vmatmul.mubr.bf16.gmra.mrb[0].mxu0 %v2034
        %v2276 = vpop.f32.mrb[0].mxu0
        %v2277 = vadd.f32 %v1975, %v2276
        %v2278 = vpop.f32.mrb[0].mxu0
        %v2279 = vadd.f32 %v1979, %v2278
        %v2280 = vpop.f32.mrb[0].mxu0
        %v2281 = vadd.f32 %v1975, %v2280
        %v2282 = vpop.f32.mrb[0].mxu0
        %v2283 = vadd.f32 %v1979, %v2282
        %2284 = vmatprep.mubr.bf16.mxu0 %v2037
        %2285 = vmatmul.mubr.bf16.gmra.mrb[0].mxu0 %v2036
        %v2286 = vpop.f32.mrb[0].mxu0
        %v2287 = vadd.f32 %v1975, %v2286
        %v2288 = vpop.f32.mrb[0].mxu0
        %v2289 = vadd.f32 %v1979, %v2288
        %v2290 = vpop.f32.mrb[0].mxu0
        %v2291 = vadd.f32 %v1975, %v2290
        %v2292 = vpop.f32.mrb[0].mxu0
        %v2293 = vadd.f32 %v1979, %v2292
        %2294 = vmatprep.mubr.bf16.mxu0 %v2039
        %2295 = vmatmul.mubr.bf16.gmra.mrb[0].mxu0 %v2038
        %v2296 = vpop.f32.mrb[0].mxu0
        %v2297 = vadd.f32 %v1975, %v2296
        %v2298 = vpop.f32.mrb[0].mxu0
        %v2299 = vadd.f32 %v1979, %v2298
        %v2300 = vpop.f32.mrb[0].mxu0
        %v2301 = vadd.f32 %v1975, %v2300
        %v2302 = vpop.f32.mrb[0].mxu0
        %v2303 = vadd.f32 %v1979, %v2302
        %2304 = vmatprep.mubr.bf16.mxu0 %v2041
        %2305 = vmatmul.mubr.bf16.gmra.mrb[0].mxu0 %v2040
        %v2306 = vpop.f32.mrb[0].mxu0
        %v2307 = vadd.f32 %v1975, %v2306
        %v2308 = vpop.f32.mrb[0].mxu0
        %v2309 = vadd.f32 %v1979, %v2308
        %v2310 = vpop.f32.mrb[0].mxu0
        %v2311 = vadd.f32 %v1975, %v2310
        %v2312 = vpop.f32.mrb[0].mxu0
        %v2313 = vadd.f32 %v1979, %v2312
        %2314 = vmatprep.mubr.bf16.mxu0 %v2043
        %2315 = vmatmul.mubr.bf16.gmra.mrb[0].mxu0 %v2042
        %v2316 = vpop.f32.mrb[0].mxu0
        %v2317 = vadd.f32 %v1975, %v2316
        %v2318 = vpop.f32.mrb[0].mxu0
        %v2319 = vadd.f32 %v1979, %v2318
        %v2320 = vpop.f32.mrb[0].mxu0
        %v2321 = vadd.f32 %v1975, %v2320
        %v2322 = vpop.f32.mrb[0].mxu0
        %v2323 = vadd.f32 %v1979, %v2322
        %2324 = vmatprep.mubr.bf16.mxu0 %v2045
        %2325 = vmatmul.mubr.bf16.gmra.mrb[0].mxu0 %v2044
        %v2326 = vpop.f32.mrb[0].mxu0
        %v2327 = vadd.f32 %v1975, %v2326
        %v2328 = vpop.f32.mrb[0].mxu0
        %v2329 = vadd.f32 %v1979, %v2328
        %v2330 = vpop.f32.mrb[0].mxu0
        %v2331 = vadd.f32 %v1975, %v2330
        %v2332 = vpop.f32.mrb[0].mxu0
        %v2333 = vadd.f32 %v1979, %v2332
        %2334 = vdwg.mxu0
        %v2335 = vpack.c.bf16 %v2261, %v2257
        %v2336 = vpack.c.bf16 %v2263, %v2259
        %v2337 = vpack.c.bf16 %v2271, %v2267
        %v2338 = vpack.c.bf16 %v2273, %v2269
        %v2339 = vpack.c.bf16 %v2281, %v2277
        %v2340 = vpack.c.bf16 %v2283, %v2279
        %v2341 = vpack.c.bf16 %v2291, %v2287
        %v2342 = vpack.c.bf16 %v2293, %v2289
        %v2343 = vpack.c.bf16 %v2301, %v2297
        %v2344 = vpack.c.bf16 %v2303, %v2299
        %v2345 = vpack.c.bf16 %v2311, %v2307
        %v2346 = vpack.c.bf16 %v2313, %v2309
        %v2347 = vpack.c.bf16 %v2321, %v2317
        %v2348 = vpack.c.bf16 %v2323, %v2319
        %v2349 = vpack.c.bf16 %v2331, %v2327
        %v2350 = vpack.c.bf16 %v2333, %v2329
        %v2351 = vld [vmem:[#allocation2] sm:$0xff]
        %v2352 = vld [vmem:[#allocation2 + $0x8] sm:$0xff]
        %v2353 = vld [vmem:[#allocation2 + $0x10] sm:$0xff]
        %v2354 = vld [vmem:[#allocation2 + $0x18] sm:$0xff]
        %v2355 = vld [vmem:[#allocation2 + $0x20] sm:$0xff]
        %v2356 = vld [vmem:[#allocation2 + $0x28] sm:$0xff]
        %v2357 = vld [vmem:[#allocation2 + $0x30] sm:$0xff]
        %v2358 = vld [vmem:[#allocation2 + $0x38] sm:$0xff]
        %v2359 = vld [vmem:[#allocation2 + $0x40] sm:$0xff]
        %v2360 = vld [vmem:[#allocation2 + $0x48] sm:$0xff]
        %v2361 = vld [vmem:[#allocation2 + $0x50] sm:$0xff]
        %v2362 = vld [vmem:[#allocation2 + $0x58] sm:$0xff]
        %v2363 = vld [vmem:[#allocation2 + $0x60] sm:$0xff]
        %v2364 = vld [vmem:[#allocation2 + $0x68] sm:$0xff]
        %v2365 = vld [vmem:[#allocation2 + $0x70] sm:$0xff]
        %v2366 = vld [vmem:[#allocation2 + $0x78] sm:$0xff]
        %v2367 = vld [vmem:[#allocation3] sm:$0xff]
        %v2368 = vld [vmem:[#allocation3 + $0x10] sm:$0xff]
        %v2369 = vld [vmem:[#allocation3 + $0x20] sm:$0xff]
        %v2370 = vld [vmem:[#allocation3 + $0x30] sm:$0xff]
        %v2371 = vld [vmem:[#allocation3 + $0x40] sm:$0xff]
        %v2372 = vld [vmem:[#allocation3 + $0x50] sm:$0xff]
        %v2373 = vld [vmem:[#allocation3 + $0x60] sm:$0xff]
        %v2374 = vld [vmem:[#allocation3 + $0x70] sm:$0xff]
        %v2375 = vld [vmem:[#allocation3 + $0x80] sm:$0xff]
        %v2376 = vld [vmem:[#allocation3 + $0x90] sm:$0xff]
        %v2377 = vld [vmem:[#allocation3 + $0xa0] sm:$0xff]
        %v2378 = vld [vmem:[#allocation3 + $0xb0] sm:$0xff]
        %v2379 = vld [vmem:[#allocation3 + $0xc0] sm:$0xff]
        %v2380 = vld [vmem:[#allocation3 + $0xd0] sm:$0xff]
        %v2381 = vld [vmem:[#allocation3 + $0xe0] sm:$0xff]
        %v2382 = vld [vmem:[#allocation3 + $0xf0] sm:$0xff]
        %2383 = vmatprep.subr.bf16.mxu0 %v2352
        %2384 = vmatpush1.bf16.msra.mxu0 %v2351
        %2385 = vmatprep.subr.bf16.mxu0 %v2354
        %2386 = vmatpush1.bf16.msra.mxu0 %v2353
        %2387 = vmatprep.subr.bf16.mxu0 %v2356
        %2388 = vmatpush1.bf16.msra.mxu0 %v2355
        %2389 = vmatprep.subr.bf16.mxu0 %v2358
        %2390 = vmatpush1.bf16.msra.mxu0 %v2357
        %2391 = vmatprep.subr.bf16.mxu0 %v2360
        %2392 = vmatpush1.bf16.msra.mxu0 %v2359
        %2393 = vmatprep.subr.bf16.mxu0 %v2362
        %2394 = vmatpush1.bf16.msra.mxu0 %v2361
        %2395 = vmatprep.subr.bf16.mxu0 %v2364
        %2396 = vmatpush1.bf16.msra.mxu0 %v2363
        %2397 = vmatprep.subr.bf16.mxu0 %v2366
        %2398 = vmatpush1.bf16.msra.mxu0 %v2365
        %2399 = vmatprep.subr.bf16.mxu0 0
        %2400 = vmatpush1.bf16.msra.mxu0 0
        %2401 = vmatprep.subr.bf16.mxu0 0
        %2402 = vmatpush1.bf16.msra.mxu0 0
        %2403 = vmatprep.subr.bf16.mxu0 0
        %2404 = vmatpush1.bf16.msra.mxu0 0
        %2405 = vmatprep.subr.bf16.mxu0 0
        %2406 = vmatpush1.bf16.msra.mxu0 0
        %2407 = vmatprep.subr.bf16.mxu0 0
        %2408 = vmatpush1.bf16.msra.mxu0 0
        %2409 = vmatprep.subr.bf16.mxu0 0
        %2410 = vmatpush1.bf16.msra.mxu0 0
        %2411 = vmatprep.subr.bf16.mxu0 0
        %2412 = vmatpush1.bf16.msra.mxu0 0
        %2413 = vmatprep.subr.bf16.mxu0 0
        %2414 = vmatpush1.bf16.msra.mxu0 0
        %2415 = vmatprep.mubr.bf16.mxu0 0
        %2416 = vmatmul.mubr.bf16.gmra.mrb[0].mxu0 %v2335
        %v2417 = vpop.f32.mrb[0].mxu0
        %v2418 = vadd.f32 0.0, %v2417
        %v2419 = vpop.f32.mrb[0].mxu0
        %v2420 = vadd.f32 0.0, %v2419
        %v2421 = vpop.f32.mrb[0].mxu0
        %v2422 = vadd.f32 0.0, %v2421
        %v2423 = vpop.f32.mrb[0].mxu0
        %v2424 = vadd.f32 0.0, %v2423
        %2425 = vmatprep.mubr.bf16.mxu0 0
        %2426 = vmatmul.mubr.bf16.gmra.mrb[0].mxu0 %v2337
        %v2427 = vpop.f32.mrb[0].mxu0
        %v2428 = vadd.f32 0.0, %v2427
        %v2429 = vpop.f32.mrb[0].mxu0
        %v2430 = vadd.f32 0.0, %v2429
        %v2431 = vpop.f32.mrb[0].mxu0
        %v2432 = vadd.f32 0.0, %v2431
        %v2433 = vpop.f32.mrb[0].mxu0
        %v2434 = vadd.f32 0.0, %v2433
        %2435 = vmatprep.mubr.bf16.mxu0 0
        %2436 = vmatmul.mubr.bf16.gmra.mrb[0].mxu0 %v2339
        %v2437 = vpop.f32.mrb[0].mxu0
        %v2438 = vadd.f32 0.0, %v2437
        %v2439 = vpop.f32.mrb[0].mxu0
        %v2440 = vadd.f32 0.0, %v2439
        %v2441 = vpop.f32.mrb[0].mxu0
        %v2442 = vadd.f32 0.0, %v2441
        %v2443 = vpop.f32.mrb[0].mxu0
        %v2444 = vadd.f32 0.0, %v2443
        %2445 = vmatprep.mubr.bf16.mxu0 0
        %2446 = vmatmul.mubr.bf16.gmra.mrb[0].mxu0 %v2341
        %v2447 = vpop.f32.mrb[0].mxu0
        %v2448 = vadd.f32 0.0, %v2447
        %v2449 = vpop.f32.mrb[0].mxu0
        %v2450 = vadd.f32 0.0, %v2449
        %v2451 = vpop.f32.mrb[0].mxu0
        %v2452 = vadd.f32 0.0, %v2451
        %v2453 = vpop.f32.mrb[0].mxu0
        %v2454 = vadd.f32 0.0, %v2453
        %2455 = vmatprep.mubr.bf16.mxu0 0
        %2456 = vmatmul.mubr.bf16.gmra.mrb[0].mxu0 %v2343
        %v2457 = vpop.f32.mrb[0].mxu0
        %v2458 = vadd.f32 0.0, %v2457
        %v2459 = vpop.f32.mrb[0].mxu0
        %v2460 = vadd.f32 0.0, %v2459
        %v2461 = vpop.f32.mrb[0].mxu0
        %v2462 = vadd.f32 0.0, %v2461
        %v2463 = vpop.f32.mrb[0].mxu0
        %v2464 = vadd.f32 0.0, %v2463
        %2465 = vmatprep.mubr.bf16.mxu0 0
        %2466 = vmatmul.mubr.bf16.gmra.mrb[0].mxu0 %v2345
        %v2467 = vpop.f32.mrb[0].mxu0
        %v2468 = vadd.f32 0.0, %v2467
        %v2469 = vpop.f32.mrb[0].mxu0
        %v2470 = vadd.f32 0.0, %v2469
        %v2471 = vpop.f32.mrb[0].mxu0
        %v2472 = vadd.f32 0.0, %v2471
        %v2473 = vpop.f32.mrb[0].mxu0
        %v2474 = vadd.f32 0.0, %v2473
        %2475 = vmatprep.mubr.bf16.mxu0 0
        %2476 = vmatmul.mubr.bf16.gmra.mrb[0].mxu0 %v2347
        %v2477 = vpop.f32.mrb[0].mxu0
        %v2478 = vadd.f32 0.0, %v2477
        %v2479 = vpop.f32.mrb[0].mxu0
        %v2480 = vadd.f32 0.0, %v2479
        %v2481 = vpop.f32.mrb[0].mxu0
        %v2482 = vadd.f32 0.0, %v2481
        %v2483 = vpop.f32.mrb[0].mxu0
        %v2484 = vadd.f32 0.0, %v2483
        %2485 = vmatprep.mubr.bf16.mxu0 0
        %2486 = vmatmul.mubr.bf16.gmra.mrb[0].mxu0 %v2349
        %v2487 = vpop.f32.mrb[0].mxu0
        %v2488 = vadd.f32 0.0, %v2487
        %v2489 = vpop.f32.mrb[0].mxu0
        %v2490 = vadd.f32 0.0, %v2489
        %v2491 = vpop.f32.mrb[0].mxu0
        %v2492 = vadd.f32 0.0, %v2491
        %v2493 = vpop.f32.mrb[0].mxu0
        %v2494 = vadd.f32 0.0, %v2493
        %2495 = vdwg.mxu0
        %v2496 = vmax.f32 %v2418, %v2420
        %2497 = vmax.xlane.f32.xlu0 %v2496
        %v2498 = vpop.xlane.xlu0 %2497
        %v2499 = vmax.f32 %v2422, %v2424
        %2500 = vmax.xlane.f32.xlu0 %v2499
        %v2501 = vpop.xlane.xlu0 %2500
        %v2502 = vmax.f32 %v2428, %v2430
        %2503 = vmax.xlane.f32.xlu0 %v2502
        %v2504 = vpop.xlane.xlu0 %2503
        %v2505 = vmax.f32 %v2432, %v2434
        %2506 = vmax.xlane.f32.xlu0 %v2505
        %v2507 = vpop.xlane.xlu0 %2506
        %v2508 = vmax.f32 %v2438, %v2440
        %2509 = vmax.xlane.f32.xlu0 %v2508
        %v2510 = vpop.xlane.xlu0 %2509
        %v2511 = vmax.f32 %v2442, %v2444
        %2512 = vmax.xlane.f32.xlu0 %v2511
        %v2513 = vpop.xlane.xlu0 %2512
        %v2514 = vmax.f32 %v2448, %v2450
        %2515 = vmax.xlane.f32.xlu0 %v2514
        %v2516 = vpop.xlane.xlu0 %2515
        %v2517 = vmax.f32 %v2452, %v2454
        %2518 = vmax.xlane.f32.xlu0 %v2517
        %v2519 = vpop.xlane.xlu0 %2518
        %v2520 = vmax.f32 %v2458, %v2460
        %2521 = vmax.xlane.f32.xlu0 %v2520
        %v2522 = vpop.xlane.xlu0 %2521
        %v2523 = vmax.f32 %v2462, %v2464
        %2524 = vmax.xlane.f32.xlu0 %v2523
        %v2525 = vpop.xlane.xlu0 %2524
        %v2526 = vmax.f32 %v2468, %v2470
        %2527 = vmax.xlane.f32.xlu0 %v2526
        %v2528 = vpop.xlane.xlu0 %2527
        %v2529 = vmax.f32 %v2472, %v2474
        %2530 = vmax.xlane.f32.xlu0 %v2529
        %v2531 = vpop.xlane.xlu0 %2530
        %v2532 = vmax.f32 %v2478, %v2480
        %2533 = vmax.xlane.f32.xlu0 %v2532
        %v2534 = vpop.xlane.xlu0 %2533
        %v2535 = vmax.f32 %v2482, %v2484
        %2536 = vmax.xlane.f32.xlu0 %v2535
        %v2537 = vpop.xlane.xlu0 %2536
        %v2538 = vmax.f32 %v2488, %v2490
        %2539 = vmax.xlane.f32.xlu0 %v2538
        %v2540 = vpop.xlane.xlu0 %2539
        %v2541 = vmax.f32 %v2492, %v2494
        %2542 = vmax.xlane.f32.xlu0 %v2541
        %v2543 = vpop.xlane.xlu0 %2542
        %v2544 = vsub.f32 %v2418, %v2498
        %v2545 = vsub.f32 %v2420, %v2498
        %v2546 = vsub.f32 %v2422, %v2501
        %v2547 = vsub.f32 %v2424, %v2501
        %v2548 = vsub.f32 %v2428, %v2504
        %v2549 = vsub.f32 %v2430, %v2504
        %v2550 = vsub.f32 %v2432, %v2507
        %v2551 = vsub.f32 %v2434, %v2507
        %v2552 = vsub.f32 %v2438, %v2510
        %v2553 = vsub.f32 %v2440, %v2510
        %v2554 = vsub.f32 %v2442, %v2513
        %v2555 = vsub.f32 %v2444, %v2513
        %v2556 = vsub.f32 %v2448, %v2516
        %v2557 = vsub.f32 %v2450, %v2516
        %v2558 = vsub.f32 %v2452, %v2519
        %v2559 = vsub.f32 %v2454, %v2519
        %v2560 = vsub.f32 %v2458, %v2522
        %v2561 = vsub.f32 %v2460, %v2522
        %v2562 = vsub.f32 %v2462, %v2525
        %v2563 = vsub.f32 %v2464, %v2525
        %v2564 = vsub.f32 %v2468, %v2528
        %v2565 = vsub.f32 %v2470, %v2528
        %v2566 = vsub.f32 %v2472, %v2531
        %v2567 = vsub.f32 %v2474, %v2531
        %v2568 = vsub.f32 %v2478, %v2534
        %v2569 = vsub.f32 %v2480, %v2534
        %v2570 = vsub.f32 %v2482, %v2537
        %v2571 = vsub.f32 %v2484, %v2537
        %v2572 = vsub.f32 %v2488, %v2540
        %v2573 = vsub.f32 %v2490, %v2540
        %v2574 = vsub.f32 %v2492, %v2543
        %v2575 = vsub.f32 %v2494, %v2543
        %v2576 = vmul.f32 %v2544, 1.442695
        %v2577 = vpow.pop %v2576
        %v2578 = vmul.f32 %v2545, 1.442695
        %v2579 = vpow.pop %v2578
        %v2580 = vmul.f32 %v2546, 1.442695
        %v2581 = vpow.pop %v2580
        %v2582 = vmul.f32 %v2547, 1.442695
        %v2583 = vpow.pop %v2582
        %v2584 = vmul.f32 %v2548, 1.442695
        %v2585 = vpow.pop %v2584
        %v2586 = vmul.f32 %v2549, 1.442695
        %v2587 = vpow.pop %v2586
        %v2588 = vmul.f32 %v2550, 1.442695
        %v2589 = vpow.pop %v2588
        %v2590 = vmul.f32 %v2551, 1.442695
        %v2591 = vpow.pop %v2590
        %v2592 = vmul.f32 %v2552, 1.442695
        %v2593 = vpow.pop %v2592
        %v2594 = vmul.f32 %v2553, 1.442695
        %v2595 = vpow.pop %v2594
        %v2596 = vmul.f32 %v2554, 1.442695
        %v2597 = vpow.pop %v2596
        %v2598 = vmul.f32 %v2555, 1.442695
        %v2599 = vpow.pop %v2598
        %v2600 = vmul.f32 %v2556, 1.442695
        %v2601 = vpow.pop %v2600
        %v2602 = vmul.f32 %v2557, 1.442695
        %v2603 = vpow.pop %v2602
        %v2604 = vmul.f32 %v2558, 1.442695
        %v2605 = vpow.pop %v2604
        %v2606 = vmul.f32 %v2559, 1.442695
        %v2607 = vpow.pop %v2606
        %v2608 = vmul.f32 %v2560, 1.442695
        %v2609 = vpow.pop %v2608
        %v2610 = vmul.f32 %v2561, 1.442695
        %v2611 = vpow.pop %v2610
        %v2612 = vmul.f32 %v2562, 1.442695
        %v2613 = vpow.pop %v2612
        %v2614 = vmul.f32 %v2563, 1.442695
        %v2615 = vpow.pop %v2614
        %v2616 = vmul.f32 %v2564, 1.442695
        %v2617 = vpow.pop %v2616
        %v2618 = vmul.f32 %v2565, 1.442695
        %v2619 = vpow.pop %v2618
        %v2620 = vmul.f32 %v2566, 1.442695
        %v2621 = vpow.pop %v2620
        %v2622 = vmul.f32 %v2567, 1.442695
        %v2623 = vpow.pop %v2622
        %v2624 = vmul.f32 %v2568, 1.442695
        %v2625 = vpow.pop %v2624
        %v2626 = vmul.f32 %v2569, 1.442695
        %v2627 = vpow.pop %v2626
        %v2628 = vmul.f32 %v2570, 1.442695
        %v2629 = vpow.pop %v2628
        %v2630 = vmul.f32 %v2571, 1.442695
        %v2631 = vpow.pop %v2630
        %v2632 = vmul.f32 %v2572, 1.442695
        %v2633 = vpow.pop %v2632
        %v2634 = vmul.f32 %v2573, 1.442695
        %v2635 = vpow.pop %v2634
        %v2636 = vmul.f32 %v2574, 1.442695
        %v2637 = vpow.pop %v2636
        %v2638 = vmul.f32 %v2575, 1.442695
        %v2639 = vpow.pop %v2638
        %v2640 = vadd.f32 %v2577, %v2579
        %2641 = vadd.xlane.f32.xlu0 %v2640
        %v2642 = vpop.xlane.xlu0 %2641
        %v2643 = vadd.f32 %v2581, %v2583
        %2644 = vadd.xlane.f32.xlu0 %v2643
        %v2645 = vpop.xlane.xlu0 %2644
        %v2646 = vadd.f32 %v2585, %v2587
        %2647 = vadd.xlane.f32.xlu0 %v2646
        %v2648 = vpop.xlane.xlu0 %2647
        %v2649 = vadd.f32 %v2589, %v2591
        %2650 = vadd.xlane.f32.xlu0 %v2649
        %v2651 = vpop.xlane.xlu0 %2650
        %v2652 = vadd.f32 %v2593, %v2595
        %2653 = vadd.xlane.f32.xlu0 %v2652
        %v2654 = vpop.xlane.xlu0 %2653
        %v2655 = vadd.f32 %v2597, %v2599
        %2656 = vadd.xlane.f32.xlu0 %v2655
        %v2657 = vpop.xlane.xlu0 %2656
        %v2658 = vadd.f32 %v2601, %v2603
        %2659 = vadd.xlane.f32.xlu0 %v2658
        %v2660 = vpop.xlane.xlu0 %2659
        %v2661 = vadd.f32 %v2605, %v2607
        %2662 = vadd.xlane.f32.xlu0 %v2661
        %v2663 = vpop.xlane.xlu0 %2662
        %v2664 = vadd.f32 %v2609, %v2611
        %2665 = vadd.xlane.f32.xlu0 %v2664
        %v2666 = vpop.xlane.xlu0 %2665
        %v2667 = vadd.f32 %v2613, %v2615
        %2668 = vadd.xlane.f32.xlu0 %v2667
        %v2669 = vpop.xlane.xlu0 %2668
        %v2670 = vadd.f32 %v2617, %v2619
        %2671 = vadd.xlane.f32.xlu0 %v2670
        %v2672 = vpop.xlane.xlu0 %2671
        %v2673 = vadd.f32 %v2621, %v2623
        %2674 = vadd.xlane.f32.xlu0 %v2673
        %v2675 = vpop.xlane.xlu0 %2674
        %v2676 = vadd.f32 %v2625, %v2627
        %2677 = vadd.xlane.f32.xlu0 %v2676
        %v2678 = vpop.xlane.xlu0 %2677
        %v2679 = vadd.f32 %v2629, %v2631
        %2680 = vadd.xlane.f32.xlu0 %v2679
        %v2681 = vpop.xlane.xlu0 %2680
        %v2682 = vadd.f32 %v2633, %v2635
        %2683 = vadd.xlane.f32.xlu0 %v2682
        %v2684 = vpop.xlane.xlu0 %2683
        %v2685 = vadd.f32 %v2637, %v2639
        %2686 = vadd.xlane.f32.xlu0 %v2685
        %v2687 = vpop.xlane.xlu0 %2686
        %v2688 = vrcp.pop %v2642
        %v2689 = vrcp.pop %v2645
        %v2690 = vrcp.pop %v2648
        %v2691 = vrcp.pop %v2651
        %v2692 = vrcp.pop %v2654
        %v2693 = vrcp.pop %v2657
        %v2694 = vrcp.pop %v2660
        %v2695 = vrcp.pop %v2663
        %v2696 = vrcp.pop %v2666
        %v2697 = vrcp.pop %v2669
        %v2698 = vrcp.pop %v2672
        %v2699 = vrcp.pop %v2675
        %v2700 = vrcp.pop %v2678
        %v2701 = vrcp.pop %v2681
        %v2702 = vrcp.pop %v2684
        %v2703 = vrcp.pop %v2687
        %v2704 = vmul.f32 %v2577, %v2688
        %v2705 = vmul.f32 %v2579, %v2688
        %v2706 = vmul.f32 %v2581, %v2689
        %v2707 = vmul.f32 %v2583, %v2689
        %v2708 = vmul.f32 %v2585, %v2690
        %v2709 = vmul.f32 %v2587, %v2690
        %v2710 = vmul.f32 %v2589, %v2691
        %v2711 = vmul.f32 %v2591, %v2691
        %v2712 = vmul.f32 %v2593, %v2692
        %v2713 = vmul.f32 %v2595, %v2692
        %v2714 = vmul.f32 %v2597, %v2693
        %v2715 = vmul.f32 %v2599, %v2693
        %v2716 = vmul.f32 %v2601, %v2694
        %v2717 = vmul.f32 %v2603, %v2694
        %v2718 = vmul.f32 %v2605, %v2695
        %v2719 = vmul.f32 %v2607, %v2695
        %v2720 = vmul.f32 %v2609, %v2696
        %v2721 = vmul.f32 %v2611, %v2696
        %v2722 = vmul.f32 %v2613, %v2697
        %v2723 = vmul.f32 %v2615, %v2697
        %v2724 = vmul.f32 %v2617, %v2698
        %v2725 = vmul.f32 %v2619, %v2698
        %v2726 = vmul.f32 %v2621, %v2699
        %v2727 = vmul.f32 %v2623, %v2699
        %v2728 = vmul.f32 %v2625, %v2700
        %v2729 = vmul.f32 %v2627, %v2700
        %v2730 = vmul.f32 %v2629, %v2701
        %v2731 = vmul.f32 %v2631, %v2701
        %v2732 = vmul.f32 %v2633, %v2702
        %v2733 = vmul.f32 %v2635, %v2702
        %v2734 = vmul.f32 %v2637, %v2703
        %v2735 = vmul.f32 %v2639, %v2703
        %v2736 = vpack.c.bf16 %v2706, %v2704
        %v2737 = vpack.c.bf16 %v2707, %v2705
        %v2738 = vpack.c.bf16 %v2710, %v2708
        %v2739 = vpack.c.bf16 %v2711, %v2709
        %v2740 = vpack.c.bf16 %v2714, %v2712
        %v2741 = vpack.c.bf16 %v2715, %v2713
        %v2742 = vpack.c.bf16 %v2718, %v2716
        %v2743 = vpack.c.bf16 %v2719, %v2717
        %v2744 = vpack.c.bf16 %v2722, %v2720
        %v2745 = vpack.c.bf16 %v2723, %v2721
        %v2746 = vpack.c.bf16 %v2726, %v2724
        %v2747 = vpack.c.bf16 %v2727, %v2725
        %v2748 = vpack.c.bf16 %v2730, %v2728
        %v2749 = vpack.c.bf16 %v2731, %v2729
        %v2750 = vpack.c.bf16 %v2734, %v2732
        %v2751 = vpack.c.bf16 %v2735, %v2733
        %2752 = vmatprep.subr.bf16.mxu0 0
        %2753 = vmatpush1.bf16.msra.mxu0 %v2367
        %2754 = vmatprep.subr.bf16.mxu0 0
        %2755 = vmatpush1.bf16.msra.mxu0 %v2368
        %2756 = vmatprep.subr.bf16.mxu0 0
        %2757 = vmatpush1.bf16.msra.mxu0 %v2369
        %2758 = vmatprep.subr.bf16.mxu0 0
        %2759 = vmatpush1.bf16.msra.mxu0 %v2370
        %2760 = vmatprep.subr.bf16.mxu0 0
        %2761 = vmatpush1.bf16.msra.mxu0 %v2371
        %2762 = vmatprep.subr.bf16.mxu0 0
        %2763 = vmatpush1.bf16.msra.mxu0 %v2372
        %2764 = vmatprep.subr.bf16.mxu0 0
        %2765 = vmatpush1.bf16.msra.mxu0 %v2373
        %2766 = vmatprep.subr.bf16.mxu0 0
        %2767 = vmatpush1.bf16.msra.mxu0 %v2374
        %2768 = vmatprep.subr.bf16.mxu0 0
        %2769 = vmatpush1.bf16.msra.mxu0 %v2375
        %2770 = vmatprep.subr.bf16.mxu0 0
        %2771 = vmatpush1.bf16.msra.mxu0 %v2376
        %2772 = vmatprep.subr.bf16.mxu0 0
        %2773 = vmatpush1.bf16.msra.mxu0 %v2377
        %2774 = vmatprep.subr.bf16.mxu0 0
        %2775 = vmatpush1.bf16.msra.mxu0 %v2378
        %2776 = vmatprep.subr.bf16.mxu0 0
        %2777 = vmatpush1.bf16.msra.mxu0 %v2379
        %2778 = vmatprep.subr.bf16.mxu0 0
        %2779 = vmatpush1.bf16.msra.mxu0 %v2380
        %2780 = vmatprep.subr.bf16.mxu0 0
        %2781 = vmatpush1.bf16.msra.mxu0 %v2381
        %2782 = vmatprep.subr.bf16.mxu0 0
        %2783 = vmatpush1.bf16.msra.mxu0 %v2382
        %2784 = vmatprep.mubr.bf16.mxu0 %v2737
        %2785 = vmatmul.mubr.bf16.gmra.mrb[0].mxu0 %v2736
        %v2786 = vpop.f32.mrb[0].mxu0
        %v2787 = vadd.f32 0.0, %v2786
        %v2788 = vpop.f32.mrb[0].mxu0
        %v2789 = vpop.f32.mrb[0].mxu0
        %v2790 = vadd.f32 0.0, %v2789
        %v2791 = vpop.f32.mrb[0].mxu0
        %2792 = vmatprep.mubr.bf16.mxu0 %v2739
        %2793 = vmatmul.mubr.bf16.gmra.mrb[0].mxu0 %v2738
        %v2794 = vpop.f32.mrb[0].mxu0
        %v2795 = vadd.f32 0.0, %v2794
        %v2796 = vpop.f32.mrb[0].mxu0
        %v2797 = vpop.f32.mrb[0].mxu0
        %v2798 = vadd.f32 0.0, %v2797
        %v2799 = vpop.f32.mrb[0].mxu0
        %2800 = vmatprep.mubr.bf16.mxu0 %v2741
        %2801 = vmatmul.mubr.bf16.gmra.mrb[0].mxu0 %v2740
        %v2802 = vpop.f32.mrb[0].mxu0
        %v2803 = vadd.f32 0.0, %v2802
        %v2804 = vpop.f32.mrb[0].mxu0
        %v2805 = vpop.f32.mrb[0].mxu0
        %v2806 = vadd.f32 0.0, %v2805
        %v2807 = vpop.f32.mrb[0].mxu0
        %2808 = vmatprep.mubr.bf16.mxu0 %v2743
        %2809 = vmatmul.mubr.bf16.gmra.mrb[0].mxu0 %v2742
        %v2810 = vpop.f32.mrb[0].mxu0
        %v2811 = vadd.f32 0.0, %v2810
        %v2812 = vpop.f32.mrb[0].mxu0
        %v2813 = vpop.f32.mrb[0].mxu0
        %v2814 = vadd.f32 0.0, %v2813
        %v2815 = vpop.f32.mrb[0].mxu0
        %2816 = vmatprep.mubr.bf16.mxu0 %v2745
        %2817 = vmatmul.mubr.bf16.gmra.mrb[0].mxu0 %v2744
        %v2818 = vpop.f32.mrb[0].mxu0
        %v2819 = vadd.f32 0.0, %v2818
        %v2820 = vpop.f32.mrb[0].mxu0
        %v2821 = vpop.f32.mrb[0].mxu0
        %v2822 = vadd.f32 0.0, %v2821
        %v2823 = vpop.f32.mrb[0].mxu0
        %2824 = vmatprep.mubr.bf16.mxu0 %v2747
        %2825 = vmatmul.mubr.bf16.gmra.mrb[0].mxu0 %v2746
        %v2826 = vpop.f32.mrb[0].mxu0
        %v2827 = vadd.f32 0.0, %v2826
        %v2828 = vpop.f32.mrb[0].mxu0
        %v2829 = vpop.f32.mrb[0].mxu0
        %v2830 = vadd.f32 0.0, %v2829
        %v2831 = vpop.f32.mrb[0].mxu0
        %2832 = vmatprep.mubr.bf16.mxu0 %v2749
        %2833 = vmatmul.mubr.bf16.gmra.mrb[0].mxu0 %v2748
        %v2834 = vpop.f32.mrb[0].mxu0
        %v2835 = vadd.f32 0.0, %v2834
        %v2836 = vpop.f32.mrb[0].mxu0
        %v2837 = vpop.f32.mrb[0].mxu0
        %v2838 = vadd.f32 0.0, %v2837
        %v2839 = vpop.f32.mrb[0].mxu0
        %2840 = vmatprep.mubr.bf16.mxu0 %v2751
        %2841 = vmatmul.mubr.bf16.gmra.mrb[0].mxu0 %v2750
        %v2842 = vpop.f32.mrb[0].mxu0
        %v2843 = vadd.f32 0.0, %v2842
        %v2844 = vpop.f32.mrb[0].mxu0
        %v2845 = vpop.f32.mrb[0].mxu0
        %v2846 = vadd.f32 0.0, %v2845
        %v2847 = vpop.f32.mrb[0].mxu0
        %2848 = vdwg.mxu0
        %v2849 = vpack.c.bf16 %v2790, %v2787
        %v2850 = vpack.c.bf16 %v2798, %v2795
        %v2851 = vpack.c.bf16 %v2806, %v2803
        %v2852 = vpack.c.bf16 %v2814, %v2811
        %v2853 = vpack.c.bf16 %v2822, %v2819
        %v2854 = vpack.c.bf16 %v2830, %v2827
        %v2855 = vpack.c.bf16 %v2838, %v2835
        %v2856 = vpack.c.bf16 %v2846, %v2843
        %v2857 = vld [vmem:[#allocation2 + $0x80] sm:$0xff]
        %v2858 = vld [vmem:[#allocation2 + $0x88] sm:$0xff]
        %v2859 = vld [vmem:[#allocation2 + $0x90] sm:$0xff]
        %v2860 = vld [vmem:[#allocation2 + $0x98] sm:$0xff]
        %v2861 = vld [vmem:[#allocation2 + $0xa0] sm:$0xff]
        %v2862 = vld [vmem:[#allocation2 + $0xa8] sm:$0xff]
        %v2863 = vld [vmem:[#allocation2 + $0xb0] sm:$0xff]
        %v2864 = vld [vmem:[#allocation2 + $0xb8] sm:$0xff]
        %v2865 = vld [vmem:[#allocation2 + $0xc0] sm:$0xff]
        %v2866 = vld [vmem:[#allocation2 + $0xc8] sm:$0xff]
        %v2867 = vld [vmem:[#allocation2 + $0xd0] sm:$0xff]
        %v2868 = vld [vmem:[#allocation2 + $0xd8] sm:$0xff]
        %v2869 = vld [vmem:[#allocation2 + $0xe0] sm:$0xff]
        %v2870 = vld [vmem:[#allocation2 + $0xe8] sm:$0xff]
        %v2871 = vld [vmem:[#allocation2 + $0xf0] sm:$0xff]
        %v2872 = vld [vmem:[#allocation2 + $0xf8] sm:$0xff]
        %v2873 = vld [vmem:[#allocation3 + $0x8] sm:$0xff]
        %v2874 = vld [vmem:[#allocation3 + $0x18] sm:$0xff]
        %v2875 = vld [vmem:[#allocation3 + $0x28] sm:$0xff]
        %v2876 = vld [vmem:[#allocation3 + $0x38] sm:$0xff]
        %v2877 = vld [vmem:[#allocation3 + $0x48] sm:$0xff]
        %v2878 = vld [vmem:[#allocation3 + $0x58] sm:$0xff]
        %v2879 = vld [vmem:[#allocation3 + $0x68] sm:$0xff]
        %v2880 = vld [vmem:[#allocation3 + $0x78] sm:$0xff]
        %v2881 = vld [vmem:[#allocation3 + $0x88] sm:$0xff]
        %v2882 = vld [vmem:[#allocation3 + $0x98] sm:$0xff]
        %v2883 = vld [vmem:[#allocation3 + $0xa8] sm:$0xff]
        %v2884 = vld [vmem:[#allocation3 + $0xb8] sm:$0xff]
        %v2885 = vld [vmem:[#allocation3 + $0xc8] sm:$0xff]
        %v2886 = vld [vmem:[#allocation3 + $0xd8] sm:$0xff]
        %v2887 = vld [vmem:[#allocation3 + $0xe8] sm:$0xff]
        %v2888 = vld [vmem:[#allocation3 + $0xf8] sm:$0xff]
        %2889 = vmatprep.subr.bf16.mxu0 %v2858
        %2890 = vmatpush1.bf16.msra.mxu0 %v2857
        %2891 = vmatprep.subr.bf16.mxu0 %v2860
        %2892 = vmatpush1.bf16.msra.mxu0 %v2859
        %2893 = vmatprep.subr.bf16.mxu0 %v2862
        %2894 = vmatpush1.bf16.msra.mxu0 %v2861
        %2895 = vmatprep.subr.bf16.mxu0 %v2864
        %2896 = vmatpush1.bf16.msra.mxu0 %v2863
        %2897 = vmatprep.subr.bf16.mxu0 %v2866
        %2898 = vmatpush1.bf16.msra.mxu0 %v2865
        %2899 = vmatprep.subr.bf16.mxu0 %v2868
        %2900 = vmatpush1.bf16.msra.mxu0 %v2867
        %2901 = vmatprep.subr.bf16.mxu0 %v2870
        %2902 = vmatpush1.bf16.msra.mxu0 %v2869
        %2903 = vmatprep.subr.bf16.mxu0 %v2872
        %2904 = vmatpush1.bf16.msra.mxu0 %v2871
        %2905 = vmatprep.subr.bf16.mxu0 0
        %2906 = vmatpush1.bf16.msra.mxu0 0
        %2907 = vmatprep.subr.bf16.mxu0 0
        %2908 = vmatpush1.bf16.msra.mxu0 0
        %2909 = vmatprep.subr.bf16.mxu0 0
        %2910 = vmatpush1.bf16.msra.mxu0 0
        %2911 = vmatprep.subr.bf16.mxu0 0
        %2912 = vmatpush1.bf16.msra.mxu0 0
        %2913 = vmatprep.subr.bf16.mxu0 0
        %2914 = vmatpush1.bf16.msra.mxu0 0
        %2915 = vmatprep.subr.bf16.mxu0 0
        %2916 = vmatpush1.bf16.msra.mxu0 0
        %2917 = vmatprep.subr.bf16.mxu0 0
        %2918 = vmatpush1.bf16.msra.mxu0 0
        %2919 = vmatprep.subr.bf16.mxu0 0
        %2920 = vmatpush1.bf16.msra.mxu0 0
        %2921 = vmatprep.mubr.bf16.mxu0 0
        %2922 = vmatmul.mubr.bf16.gmra.mrb[0].mxu0 %v2336
        %v2923 = vpop.f32.mrb[0].mxu0
        %v2924 = vadd.f32 0.0, %v2923
        %v2925 = vpop.f32.mrb[0].mxu0
        %v2926 = vadd.f32 0.0, %v2925
        %v2927 = vpop.f32.mrb[0].mxu0
        %v2928 = vadd.f32 0.0, %v2927
        %v2929 = vpop.f32.mrb[0].mxu0
        %v2930 = vadd.f32 0.0, %v2929
        %2931 = vmatprep.mubr.bf16.mxu0 0
        %2932 = vmatmul.mubr.bf16.gmra.mrb[0].mxu0 %v2338
        %v2933 = vpop.f32.mrb[0].mxu0
        %v2934 = vadd.f32 0.0, %v2933
        %v2935 = vpop.f32.mrb[0].mxu0
        %v2936 = vadd.f32 0.0, %v2935
        %v2937 = vpop.f32.mrb[0].mxu0
        %v2938 = vadd.f32 0.0, %v2937
        %v2939 = vpop.f32.mrb[0].mxu0
        %v2940 = vadd.f32 0.0, %v2939
        %2941 = vmatprep.mubr.bf16.mxu0 0
        %2942 = vmatmul.mubr.bf16.gmra.mrb[0].mxu0 %v2340
        %v2943 = vpop.f32.mrb[0].mxu0
        %v2944 = vadd.f32 0.0, %v2943
        %v2945 = vpop.f32.mrb[0].mxu0
        %v2946 = vadd.f32 0.0, %v2945
        %v2947 = vpop.f32.mrb[0].mxu0
        %v2948 = vadd.f32 0.0, %v2947
        %v2949 = vpop.f32.mrb[0].mxu0
        %v2950 = vadd.f32 0.0, %v2949
        %2951 = vmatprep.mubr.bf16.mxu0 0
        %2952 = vmatmul.mubr.bf16.gmra.mrb[0].mxu0 %v2342
        %v2953 = vpop.f32.mrb[0].mxu0
        %v2954 = vadd.f32 0.0, %v2953
        %v2955 = vpop.f32.mrb[0].mxu0
        %v2956 = vadd.f32 0.0, %v2955
        %v2957 = vpop.f32.mrb[0].mxu0
        %v2958 = vadd.f32 0.0, %v2957
        %v2959 = vpop.f32.mrb[0].mxu0
        %v2960 = vadd.f32 0.0, %v2959
        %2961 = vmatprep.mubr.bf16.mxu0 0
        %2962 = vmatmul.mubr.bf16.gmra.mrb[0].mxu0 %v2344
        %v2963 = vpop.f32.mrb[0].mxu0
        %v2964 = vadd.f32 0.0, %v2963
        %v2965 = vpop.f32.mrb[0].mxu0
        %v2966 = vadd.f32 0.0, %v2965
        %v2967 = vpop.f32.mrb[0].mxu0
        %v2968 = vadd.f32 0.0, %v2967
        %v2969 = vpop.f32.mrb[0].mxu0
        %v2970 = vadd.f32 0.0, %v2969
        %2971 = vmatprep.mubr.bf16.mxu0 0
        %2972 = vmatmul.mubr.bf16.gmra.mrb[0].mxu0 %v2346
        %v2973 = vpop.f32.mrb[0].mxu0
        %v2974 = vadd.f32 0.0, %v2973
        %v2975 = vpop.f32.mrb[0].mxu0
        %v2976 = vadd.f32 0.0, %v2975
        %v2977 = vpop.f32.mrb[0].mxu0
        %v2978 = vadd.f32 0.0, %v2977
        %v2979 = vpop.f32.mrb[0].mxu0
        %v2980 = vadd.f32 0.0, %v2979
        %2981 = vmatprep.mubr.bf16.mxu0 0
        %2982 = vmatmul.mubr.bf16.gmra.mrb[0].mxu0 %v2348
        %v2983 = vpop.f32.mrb[0].mxu0
        %v2984 = vadd.f32 0.0, %v2983
        %v2985 = vpop.f32.mrb[0].mxu0
        %v2986 = vadd.f32 0.0, %v2985
        %v2987 = vpop.f32.mrb[0].mxu0
        %v2988 = vadd.f32 0.0, %v2987
        %v2989 = vpop.f32.mrb[0].mxu0
        %v2990 = vadd.f32 0.0, %v2989
        %2991 = vmatprep.mubr.bf16.mxu0 0
        %2992 = vmatmul.mubr.bf16.gmra.mrb[0].mxu0 %v2350
        %v2993 = vpop.f32.mrb[0].mxu0
        %v2994 = vadd.f32 0.0, %v2993
        %v2995 = vpop.f32.mrb[0].mxu0
        %v2996 = vadd.f32 0.0, %v2995
        %v2997 = vpop.f32.mrb[0].mxu0
        %v2998 = vadd.f32 0.0, %v2997
        %v2999 = vpop.f32.mrb[0].mxu0
        %v3000 = vadd.f32 0.0, %v2999
        %3001 = vdwg.mxu0
        %v3002 = vmax.f32 %v2924, %v2926
        %3003 = vmax.xlane.f32.xlu0 %v3002
        %v3004 = vpop.xlane.xlu0 %3003
        %v3005 = vmax.f32 %v2928, %v2930
        %3006 = vmax.xlane.f32.xlu0 %v3005
        %v3007 = vpop.xlane.xlu0 %3006
        %v3008 = vmax.f32 %v2934, %v2936
        %3009 = vmax.xlane.f32.xlu0 %v3008
        %v3010 = vpop.xlane.xlu0 %3009
        %v3011 = vmax.f32 %v2938, %v2940
        %3012 = vmax.xlane.f32.xlu0 %v3011
        %v3013 = vpop.xlane.xlu0 %3012
        %v3014 = vmax.f32 %v2944, %v2946
        %3015 = vmax.xlane.f32.xlu0 %v3014
        %v3016 = vpop.xlane.xlu0 %3015
        %v3017 = vmax.f32 %v2948, %v2950
        %3018 = vmax.xlane.f32.xlu0 %v3017
        %v3019 = vpop.xlane.xlu0 %3018
        %v3020 = vmax.f32 %v2954, %v2956
        %3021 = vmax.xlane.f32.xlu0 %v3020
        %v3022 = vpop.xlane.xlu0 %3021
        %v3023 = vmax.f32 %v2958, %v2960
        %3024 = vmax.xlane.f32.xlu0 %v3023
        %v3025 = vpop.xlane.xlu0 %3024
        %v3026 = vmax.f32 %v2964, %v2966
        %3027 = vmax.xlane.f32.xlu0 %v3026
        %v3028 = vpop.xlane.xlu0 %3027
        %v3029 = vmax.f32 %v2968, %v2970
        %3030 = vmax.xlane.f32.xlu0 %v3029
        %v3031 = vpop.xlane.xlu0 %3030
        %v3032 = vmax.f32 %v2974, %v2976
        %3033 = vmax.xlane.f32.xlu0 %v3032
        %v3034 = vpop.xlane.xlu0 %3033
        %v3035 = vmax.f32 %v2978, %v2980
        %3036 = vmax.xlane.f32.xlu0 %v3035
        %v3037 = vpop.xlane.xlu0 %3036
        %v3038 = vmax.f32 %v2984, %v2986
        %3039 = vmax.xlane.f32.xlu0 %v3038
        %v3040 = vpop.xlane.xlu0 %3039
        %v3041 = vmax.f32 %v2988, %v2990
        %3042 = vmax.xlane.f32.xlu0 %v3041
        %v3043 = vpop.xlane.xlu0 %3042
        %v3044 = vmax.f32 %v2994, %v2996
        %3045 = vmax.xlane.f32.xlu0 %v3044
        %v3046 = vpop.xlane.xlu0 %3045
        %v3047 = vmax.f32 %v2998, %v3000
        %3048 = vmax.xlane.f32.xlu0 %v3047
        %v3049 = vpop.xlane.xlu0 %3048
        %v3050 = vsub.f32 %v2924, %v3004
        %v3051 = vsub.f32 %v2926, %v3004
        %v3052 = vsub.f32 %v2928, %v3007
        %v3053 = vsub.f32 %v2930, %v3007
        %v3054 = vsub.f32 %v2934, %v3010
        %v3055 = vsub.f32 %v2936, %v3010
        %v3056 = vsub.f32 %v2938, %v3013
        %v3057 = vsub.f32 %v2940, %v3013
        %v3058 = vsub.f32 %v2944, %v3016
        %v3059 = vsub.f32 %v2946, %v3016
        %v3060 = vsub.f32 %v2948, %v3019
        %v3061 = vsub.f32 %v2950, %v3019
        %v3062 = vsub.f32 %v2954, %v3022
        %v3063 = vsub.f32 %v2956, %v3022
        %v3064 = vsub.f32 %v2958, %v3025
        %v3065 = vsub.f32 %v2960, %v3025
        %v3066 = vsub.f32 %v2964, %v3028
        %v3067 = vsub.f32 %v2966, %v3028
        %v3068 = vsub.f32 %v2968, %v3031
        %v3069 = vsub.f32 %v2970, %v3031
        %v3070 = vsub.f32 %v2974, %v3034
        %v3071 = vsub.f32 %v2976, %v3034
        %v3072 = vsub.f32 %v2978, %v3037
        %v3073 = vsub.f32 %v2980, %v3037
        %v3074 = vsub.f32 %v2984, %v3040
        %v3075 = vsub.f32 %v2986, %v3040
        %v3076 = vsub.f32 %v2988, %v3043
        %v3077 = vsub.f32 %v2990, %v3043
        %v3078 = vsub.f32 %v2994, %v3046
        %v3079 = vsub.f32 %v2996, %v3046
        %v3080 = vsub.f32 %v2998, %v3049
        %v3081 = vsub.f32 %v3000, %v3049
        %v3082 = vmul.f32 %v3050, 1.442695
        %v3083 = vpow.pop %v3082
        %v3084 = vmul.f32 %v3051, 1.442695
        %v3085 = vpow.pop %v3084
        %v3086 = vmul.f32 %v3052, 1.442695
        %v3087 = vpow.pop %v3086
        %v3088 = vmul.f32 %v3053, 1.442695
        %v3089 = vpow.pop %v3088
        %v3090 = vmul.f32 %v3054, 1.442695
        %v3091 = vpow.pop %v3090
        %v3092 = vmul.f32 %v3055, 1.442695
        %v3093 = vpow.pop %v3092
        %v3094 = vmul.f32 %v3056, 1.442695
        %v3095 = vpow.pop %v3094
        %v3096 = vmul.f32 %v3057, 1.442695
        %v3097 = vpow.pop %v3096
        %v3098 = vmul.f32 %v3058, 1.442695
        %v3099 = vpow.pop %v3098
        %v3100 = vmul.f32 %v3059, 1.442695
        %v3101 = vpow.pop %v3100
        %v3102 = vmul.f32 %v3060, 1.442695
        %v3103 = vpow.pop %v3102
        %v3104 = vmul.f32 %v3061, 1.442695
        %v3105 = vpow.pop %v3104
        %v3106 = vmul.f32 %v3062, 1.442695
        %v3107 = vpow.pop %v3106
        %v3108 = vmul.f32 %v3063, 1.442695
        %v3109 = vpow.pop %v3108
        %v3110 = vmul.f32 %v3064, 1.442695
        %v3111 = vpow.pop %v3110
        %v3112 = vmul.f32 %v3065, 1.442695
        %v3113 = vpow.pop %v3112
        %v3114 = vmul.f32 %v3066, 1.442695
        %v3115 = vpow.pop %v3114
        %v3116 = vmul.f32 %v3067, 1.442695
        %v3117 = vpow.pop %v3116
        %v3118 = vmul.f32 %v3068, 1.442695
        %v3119 = vpow.pop %v3118
        %v3120 = vmul.f32 %v3069, 1.442695
        %v3121 = vpow.pop %v3120
        %v3122 = vmul.f32 %v3070, 1.442695
        %v3123 = vpow.pop %v3122
        %v3124 = vmul.f32 %v3071, 1.442695
        %v3125 = vpow.pop %v3124
        %v3126 = vmul.f32 %v3072, 1.442695
        %v3127 = vpow.pop %v3126
        %v3128 = vmul.f32 %v3073, 1.442695
        %v3129 = vpow.pop %v3128
        %v3130 = vmul.f32 %v3074, 1.442695
        %v3131 = vpow.pop %v3130
        %v3132 = vmul.f32 %v3075, 1.442695
        %v3133 = vpow.pop %v3132
        %v3134 = vmul.f32 %v3076, 1.442695
        %v3135 = vpow.pop %v3134
        %v3136 = vmul.f32 %v3077, 1.442695
        %v3137 = vpow.pop %v3136
        %v3138 = vmul.f32 %v3078, 1.442695
        %v3139 = vpow.pop %v3138
        %v3140 = vmul.f32 %v3079, 1.442695
        %v3141 = vpow.pop %v3140
        %v3142 = vmul.f32 %v3080, 1.442695
        %v3143 = vpow.pop %v3142
        %v3144 = vmul.f32 %v3081, 1.442695
        %v3145 = vpow.pop %v3144
        %v3146 = vadd.f32 %v3083, %v3085
        %3147 = vadd.xlane.f32.xlu0 %v3146
        %v3148 = vpop.xlane.xlu0 %3147
        %v3149 = vadd.f32 %v3087, %v3089
        %3150 = vadd.xlane.f32.xlu0 %v3149
        %v3151 = vpop.xlane.xlu0 %3150
        %v3152 = vadd.f32 %v3091, %v3093
        %3153 = vadd.xlane.f32.xlu0 %v3152
        %v3154 = vpop.xlane.xlu0 %3153
        %v3155 = vadd.f32 %v3095, %v3097
        %3156 = vadd.xlane.f32.xlu0 %v3155
        %v3157 = vpop.xlane.xlu0 %3156
        %v3158 = vadd.f32 %v3099, %v3101
        %3159 = vadd.xlane.f32.xlu0 %v3158
        %v3160 = vpop.xlane.xlu0 %3159
        %v3161 = vadd.f32 %v3103, %v3105
        %3162 = vadd.xlane.f32.xlu0 %v3161
        %v3163 = vpop.xlane.xlu0 %3162
        %v3164 = vadd.f32 %v3107, %v3109
        %3165 = vadd.xlane.f32.xlu0 %v3164
        %v3166 = vpop.xlane.xlu0 %3165
        %v3167 = vadd.f32 %v3111, %v3113
        %3168 = vadd.xlane.f32.xlu0 %v3167
        %v3169 = vpop.xlane.xlu0 %3168
        %v3170 = vadd.f32 %v3115, %v3117
        %3171 = vadd.xlane.f32.xlu0 %v3170
        %v3172 = vpop.xlane.xlu0 %3171
        %v3173 = vadd.f32 %v3119, %v3121
        %3174 = vadd.xlane.f32.xlu0 %v3173
        %v3175 = vpop.xlane.xlu0 %3174
        %v3176 = vadd.f32 %v3123, %v3125
        %3177 = vadd.xlane.f32.xlu0 %v3176
        %v3178 = vpop.xlane.xlu0 %3177
        %v3179 = vadd.f32 %v3127, %v3129
        %3180 = vadd.xlane.f32.xlu0 %v3179
        %v3181 = vpop.xlane.xlu0 %3180
        %v3182 = vadd.f32 %v3131, %v3133
        %3183 = vadd.xlane.f32.xlu0 %v3182
        %v3184 = vpop.xlane.xlu0 %3183
        %v3185 = vadd.f32 %v3135, %v3137
        %3186 = vadd.xlane.f32.xlu0 %v3185
        %v3187 = vpop.xlane.xlu0 %3186
        %v3188 = vadd.f32 %v3139, %v3141
        %3189 = vadd.xlane.f32.xlu0 %v3188
        %v3190 = vpop.xlane.xlu0 %3189
        %v3191 = vadd.f32 %v3143, %v3145
        %3192 = vadd.xlane.f32.xlu0 %v3191
        %v3193 = vpop.xlane.xlu0 %3192
        %v3194 = vrcp.pop %v3148
        %v3195 = vrcp.pop %v3151
        %v3196 = vrcp.pop %v3154
        %v3197 = vrcp.pop %v3157
        %v3198 = vrcp.pop %v3160
        %v3199 = vrcp.pop %v3163
        %v3200 = vrcp.pop %v3166
        %v3201 = vrcp.pop %v3169
        %v3202 = vrcp.pop %v3172
        %v3203 = vrcp.pop %v3175
        %v3204 = vrcp.pop %v3178
        %v3205 = vrcp.pop %v3181
        %v3206 = vrcp.pop %v3184
        %v3207 = vrcp.pop %v3187
        %v3208 = vrcp.pop %v3190
        %v3209 = vrcp.pop %v3193
        %v3210 = vmul.f32 %v3083, %v3194
        %v3211 = vmul.f32 %v3085, %v3194
        %v3212 = vmul.f32 %v3087, %v3195
        %v3213 = vmul.f32 %v3089, %v3195
        %v3214 = vmul.f32 %v3091, %v3196
        %v3215 = vmul.f32 %v3093, %v3196
        %v3216 = vmul.f32 %v3095, %v3197
        %v3217 = vmul.f32 %v3097, %v3197
        %v3218 = vmul.f32 %v3099, %v3198
        %v3219 = vmul.f32 %v3101, %v3198
        %v3220 = vmul.f32 %v3103, %v3199
        %v3221 = vmul.f32 %v3105, %v3199
        %v3222 = vmul.f32 %v3107, %v3200
        %v3223 = vmul.f32 %v3109, %v3200
        %v3224 = vmul.f32 %v3111, %v3201
        %v3225 = vmul.f32 %v3113, %v3201
        %v3226 = vmul.f32 %v3115, %v3202
        %v3227 = vmul.f32 %v3117, %v3202
        %v3228 = vmul.f32 %v3119, %v3203
        %v3229 = vmul.f32 %v3121, %v3203
        %v3230 = vmul.f32 %v3123, %v3204
        %v3231 = vmul.f32 %v3125, %v3204
        %v3232 = vmul.f32 %v3127, %v3205
        %v3233 = vmul.f32 %v3129, %v3205
        %v3234 = vmul.f32 %v3131, %v3206
        %v3235 = vmul.f32 %v3133, %v3206
        %v3236 = vmul.f32 %v3135, %v3207
        %v3237 = vmul.f32 %v3137, %v3207
        %v3238 = vmul.f32 %v3139, %v3208
        %v3239 = vmul.f32 %v3141, %v3208
        %v3240 = vmul.f32 %v3143, %v3209
        %v3241 = vmul.f32 %v3145, %v3209
        %v3242 = vpack.c.bf16 %v3212, %v3210
        %v3243 = vpack.c.bf16 %v3213, %v3211
        %v3244 = vpack.c.bf16 %v3216, %v3214
        %v3245 = vpack.c.bf16 %v3217, %v3215
        %v3246 = vpack.c.bf16 %v3220, %v3218
        %v3247 = vpack.c.bf16 %v3221, %v3219
        %v3248 = vpack.c.bf16 %v3224, %v3222
        %v3249 = vpack.c.bf16 %v3225, %v3223
        %v3250 = vpack.c.bf16 %v3228, %v3226
        %v3251 = vpack.c.bf16 %v3229, %v3227
        %v3252 = vpack.c.bf16 %v3232, %v3230
        %v3253 = vpack.c.bf16 %v3233, %v3231
        %v3254 = vpack.c.bf16 %v3236, %v3234
        %v3255 = vpack.c.bf16 %v3237, %v3235
        %v3256 = vpack.c.bf16 %v3240, %v3238
        %v3257 = vpack.c.bf16 %v3241, %v3239
        %3258 = vmatprep.subr.bf16.mxu0 0
        %3259 = vmatpush1.bf16.msra.mxu0 %v2873
        %3260 = vmatprep.subr.bf16.mxu0 0
        %3261 = vmatpush1.bf16.msra.mxu0 %v2874
        %3262 = vmatprep.subr.bf16.mxu0 0
        %3263 = vmatpush1.bf16.msra.mxu0 %v2875
        %3264 = vmatprep.subr.bf16.mxu0 0
        %3265 = vmatpush1.bf16.msra.mxu0 %v2876
        %3266 = vmatprep.subr.bf16.mxu0 0
        %3267 = vmatpush1.bf16.msra.mxu0 %v2877
        %3268 = vmatprep.subr.bf16.mxu0 0
        %3269 = vmatpush1.bf16.msra.mxu0 %v2878
        %3270 = vmatprep.subr.bf16.mxu0 0
        %3271 = vmatpush1.bf16.msra.mxu0 %v2879
        %3272 = vmatprep.subr.bf16.mxu0 0
        %3273 = vmatpush1.bf16.msra.mxu0 %v2880
        %3274 = vmatprep.subr.bf16.mxu0 0
        %3275 = vmatpush1.bf16.msra.mxu0 %v2881
        %3276 = vmatprep.subr.bf16.mxu0 0
        %3277 = vmatpush1.bf16.msra.mxu0 %v2882
        %3278 = vmatprep.subr.bf16.mxu0 0
        %3279 = vmatpush1.bf16.msra.mxu0 %v2883
        %3280 = vmatprep.subr.bf16.mxu0 0
        %3281 = vmatpush1.bf16.msra.mxu0 %v2884
        %3282 = vmatprep.subr.bf16.mxu0 0
        %3283 = vmatpush1.bf16.msra.mxu0 %v2885
        %3284 = vmatprep.subr.bf16.mxu0 0
        %3285 = vmatpush1.bf16.msra.mxu0 %v2886
        %3286 = vmatprep.subr.bf16.mxu0 0
        %3287 = vmatpush1.bf16.msra.mxu0 %v2887
        %3288 = vmatprep.subr.bf16.mxu0 0
        %3289 = vmatpush1.bf16.msra.mxu0 %v2888
        %3290 = vmatprep.mubr.bf16.mxu0 %v3243
        %3291 = vmatmul.mubr.bf16.gmra.mrb[0].mxu0 %v3242
        %v3292 = vpop.f32.mrb[0].mxu0
        %v3293 = vadd.f32 0.0, %v3292
        %v3294 = vpop.f32.mrb[0].mxu0
        %v3295 = vpop.f32.mrb[0].mxu0
        %v3296 = vadd.f32 0.0, %v3295
        %v3297 = vpop.f32.mrb[0].mxu0
        %3298 = vmatprep.mubr.bf16.mxu0 %v3245
        %3299 = vmatmul.mubr.bf16.gmra.mrb[0].mxu0 %v3244
        %v3300 = vpop.f32.mrb[0].mxu0
        %v3301 = vadd.f32 0.0, %v3300
        %v3302 = vpop.f32.mrb[0].mxu0
        %v3303 = vpop.f32.mrb[0].mxu0
        %v3304 = vadd.f32 0.0, %v3303
        %v3305 = vpop.f32.mrb[0].mxu0
        %3306 = vmatprep.mubr.bf16.mxu0 %v3247
        %3307 = vmatmul.mubr.bf16.gmra.mrb[0].mxu0 %v3246
        %v3308 = vpop.f32.mrb[0].mxu0
        %v3309 = vadd.f32 0.0, %v3308
        %v3310 = vpop.f32.mrb[0].mxu0
        %v3311 = vpop.f32.mrb[0].mxu0
        %v3312 = vadd.f32 0.0, %v3311
        %v3313 = vpop.f32.mrb[0].mxu0
        %3314 = vmatprep.mubr.bf16.mxu0 %v3249
        %3315 = vmatmul.mubr.bf16.gmra.mrb[0].mxu0 %v3248
        %v3316 = vpop.f32.mrb[0].mxu0
        %v3317 = vadd.f32 0.0, %v3316
        %v3318 = vpop.f32.mrb[0].mxu0
        %v3319 = vpop.f32.mrb[0].mxu0
        %v3320 = vadd.f32 0.0, %v3319
        %v3321 = vpop.f32.mrb[0].mxu0
        %3322 = vmatprep.mubr.bf16.mxu0 %v3251
        %3323 = vmatmul.mubr.bf16.gmra.mrb[0].mxu0 %v3250
        %v3324 = vpop.f32.mrb[0].mxu0
        %v3325 = vadd.f32 0.0, %v3324
        %v3326 = vpop.f32.mrb[0].mxu0
        %v3327 = vpop.f32.mrb[0].mxu0
        %v3328 = vadd.f32 0.0, %v3327
        %v3329 = vpop.f32.mrb[0].mxu0
        %3330 = vmatprep.mubr.bf16.mxu0 %v3253
        %3331 = vmatmul.mubr.bf16.gmra.mrb[0].mxu0 %v3252
        %v3332 = vpop.f32.mrb[0].mxu0
        %v3333 = vadd.f32 0.0, %v3332
        %v3334 = vpop.f32.mrb[0].mxu0
        %v3335 = vpop.f32.mrb[0].mxu0
        %v3336 = vadd.f32 0.0, %v3335
        %v3337 = vpop.f32.mrb[0].mxu0
        %3338 = vmatprep.mubr.bf16.mxu0 %v3255
        %3339 = vmatmul.mubr.bf16.gmra.mrb[0].mxu0 %v3254
        %v3340 = vpop.f32.mrb[0].mxu0
        %v3341 = vadd.f32 0.0, %v3340
        %v3342 = vpop.f32.mrb[0].mxu0
        %v3343 = vpop.f32.mrb[0].mxu0
        %v3344 = vadd.f32 0.0, %v3343
        %v3345 = vpop.f32.mrb[0].mxu0
        %3346 = vmatprep.mubr.bf16.mxu0 %v3257
        %3347 = vmatmul.mubr.bf16.gmra.mrb[0].mxu0 %v3256
        %v3348 = vpop.f32.mrb[0].mxu0
        %v3349 = vadd.f32 0.0, %v3348
        %v3350 = vpop.f32.mrb[0].mxu0
        %v3351 = vpop.f32.mrb[0].mxu0
        %v3352 = vadd.f32 0.0, %v3351
        %v3353 = vpop.f32.mrb[0].mxu0
        %3354 = vdwg.mxu0
        %v3355 = vpack.c.bf16 %v3296, %v3293
        %v3356 = vpack.c.bf16 %v3304, %v3301
        %v3357 = vpack.c.bf16 %v3312, %v3309
        %v3358 = vpack.c.bf16 %v3320, %v3317
        %v3359 = vpack.c.bf16 %v3328, %v3325
        %v3360 = vpack.c.bf16 %v3336, %v3333
        %v3361 = vpack.c.bf16 %v3344, %v3341
        %v3362 = vpack.c.bf16 %v3352, %v3349
        %v3363 = vld [vmem:[#allocation12] sm:$0xff]
        %v3364 = vld [vmem:[#allocation12 + $0x8] sm:$0xff]
        %v3365 = vld [vmem:[#allocation12 + $0x10] sm:$0xff]
        %v3366 = vld [vmem:[#allocation12 + $0x18] sm:$0xff]
        %v3367 = vld [vmem:[#allocation12 + $0x20] sm:$0xff]
        %v3368 = vld [vmem:[#allocation12 + $0x28] sm:$0xff]
        %v3369 = vld [vmem:[#allocation12 + $0x30] sm:$0xff]
        %v3370 = vld [vmem:[#allocation12 + $0x38] sm:$0xff]
        %v3371 = vld [vmem:[#allocation12 + $0x40] sm:$0xff]
        %v3372 = vld [vmem:[#allocation12 + $0x48] sm:$0xff]
        %v3373 = vld [vmem:[#allocation12 + $0x50] sm:$0xff]
        %v3374 = vld [vmem:[#allocation12 + $0x58] sm:$0xff]
        %v3375 = vld [vmem:[#allocation12 + $0x60] sm:$0xff]
        %v3376 = vld [vmem:[#allocation12 + $0x68] sm:$0xff]
        %v3377 = vld [vmem:[#allocation12 + $0x70] sm:$0xff]
        %v3378 = vld [vmem:[#allocation12 + $0x78] sm:$0xff]
        %v3379 = vld [vmem:[#allocation12 + $0x80] sm:$0xff]
        %v3380 = vld [vmem:[#allocation12 + $0x88] sm:$0xff]
        %v3381 = vld [vmem:[#allocation12 + $0x90] sm:$0xff]
        %v3382 = vld [vmem:[#allocation12 + $0x98] sm:$0xff]
        %v3383 = vld [vmem:[#allocation12 + $0xa0] sm:$0xff]
        %v3384 = vld [vmem:[#allocation12 + $0xa8] sm:$0xff]
        %v3385 = vld [vmem:[#allocation12 + $0xb0] sm:$0xff]
        %v3386 = vld [vmem:[#allocation12 + $0xb8] sm:$0xff]
        %v3387 = vld [vmem:[#allocation12 + $0xc0] sm:$0xff]
        %v3388 = vld [vmem:[#allocation12 + $0xc8] sm:$0xff]
        %v3389 = vld [vmem:[#allocation12 + $0xd0] sm:$0xff]
        %v3390 = vld [vmem:[#allocation12 + $0xd8] sm:$0xff]
        %v3391 = vld [vmem:[#allocation12 + $0xe0] sm:$0xff]
        %v3392 = vld [vmem:[#allocation12 + $0xe8] sm:$0xff]
        %v3393 = vld [vmem:[#allocation12 + $0xf0] sm:$0xff]
        %v3394 = vld [vmem:[#allocation12 + $0xf8] sm:$0xff]
        %v3395 = vld [vmem:[%s8] sm:$0x3]
        %v3397 = vlaneseq
        %v3398 = vshrl.u32 %v3397, 7
        %v3399 = vsub.s32 0, %v3398
        %v3400 = vrot.slane %v3395, %v3399
        %v3401 = vlaneseq
        %v3402 = vshrl.u32 %v3401, 7
        %v3403 = vsub.s32 1, %v3402
        %v3404 = vrot.slane %v3395, %v3403
        %v3439 = vunpack.c.l.b16 %v3363
        %v3440 = vunpack.c.h.b16 %v3363
        %v3441 = vunpack.c.l.b16 %v3364
        %v3442 = vunpack.c.h.b16 %v3364
        %v3443 = vunpack.c.l.b16 %v3365
        %v3444 = vunpack.c.h.b16 %v3365
        %v3445 = vunpack.c.l.b16 %v3366
        %v3446 = vunpack.c.h.b16 %v3366
        %v3447 = vunpack.c.l.b16 %v3367
        %v3448 = vunpack.c.h.b16 %v3367
        %v3449 = vunpack.c.l.b16 %v3368
        %v3450 = vunpack.c.h.b16 %v3368
        %v3451 = vunpack.c.l.b16 %v3369
        %v3452 = vunpack.c.h.b16 %v3369
        %v3453 = vunpack.c.l.b16 %v3370
        %v3454 = vunpack.c.h.b16 %v3370
        %v3455 = vunpack.c.l.b16 %v3371
        %v3456 = vunpack.c.h.b16 %v3371
        %v3457 = vunpack.c.l.b16 %v3372
        %v3458 = vunpack.c.h.b16 %v3372
        %v3459 = vunpack.c.l.b16 %v3373
        %v3460 = vunpack.c.h.b16 %v3373
        %v3461 = vunpack.c.l.b16 %v3374
        %v3462 = vunpack.c.h.b16 %v3374
        %v3463 = vunpack.c.l.b16 %v3375
        %v3464 = vunpack.c.h.b16 %v3375
        %v3465 = vunpack.c.l.b16 %v3376
        %v3466 = vunpack.c.h.b16 %v3376
        %v3467 = vunpack.c.l.b16 %v3377
        %v3468 = vunpack.c.h.b16 %v3377
        %v3469 = vunpack.c.l.b16 %v3378
        %v3470 = vunpack.c.h.b16 %v3378
        %v3471 = vunpack.c.l.b16 %v3379
        %v3472 = vunpack.c.h.b16 %v3379
        %v3473 = vunpack.c.l.b16 %v3380
        %v3474 = vunpack.c.h.b16 %v3380
        %v3475 = vunpack.c.l.b16 %v3381
        %v3476 = vunpack.c.h.b16 %v3381
        %v3477 = vunpack.c.l.b16 %v3382
        %v3478 = vunpack.c.h.b16 %v3382
        %v3479 = vunpack.c.l.b16 %v3383
        %v3480 = vunpack.c.h.b16 %v3383
        %v3481 = vunpack.c.l.b16 %v3384
        %v3482 = vunpack.c.h.b16 %v3384
        %v3483 = vunpack.c.l.b16 %v3385
        %v3484 = vunpack.c.h.b16 %v3385
        %v3485 = vunpack.c.l.b16 %v3386
        %v3486 = vunpack.c.h.b16 %v3386
        %v3487 = vunpack.c.l.b16 %v3387
        %v3488 = vunpack.c.h.b16 %v3387
        %v3489 = vunpack.c.l.b16 %v3388
        %v3490 = vunpack.c.h.b16 %v3388
        %v3491 = vunpack.c.l.b16 %v3389
        %v3492 = vunpack.c.h.b16 %v3389
        %v3493 = vunpack.c.l.b16 %v3390
        %v3494 = vunpack.c.h.b16 %v3390
        %v3495 = vunpack.c.l.b16 %v3391
        %v3496 = vunpack.c.h.b16 %v3391
        %v3497 = vunpack.c.l.b16 %v3392
        %v3498 = vunpack.c.h.b16 %v3392
        %v3499 = vunpack.c.l.b16 %v3393
        %v3500 = vunpack.c.h.b16 %v3393
        %v3501 = vunpack.c.l.b16 %v3394
        %v3502 = vunpack.c.h.b16 %v3394
        %v3503 = vpack.c.b16 %v3441, %v3439
        %v3504 = vpack.c.b16 %v3442, %v3440
        %v3505 = vpack.c.b16 %v3445, %v3443
        %v3506 = vpack.c.b16 %v3446, %v3444
        %v3507 = vpack.c.b16 %v3449, %v3447
        %v3508 = vpack.c.b16 %v3450, %v3448
        %v3509 = vpack.c.b16 %v3453, %v3451
        %v3510 = vpack.c.b16 %v3454, %v3452
        %v3511 = vpack.c.b16 %v3457, %v3455
        %v3512 = vpack.c.b16 %v3458, %v3456
        %v3513 = vpack.c.b16 %v3461, %v3459
        %v3514 = vpack.c.b16 %v3462, %v3460
        %v3515 = vpack.c.b16 %v3465, %v3463
        %v3516 = vpack.c.b16 %v3466, %v3464
        %v3517 = vpack.c.b16 %v3469, %v3467
        %v3518 = vpack.c.b16 %v3470, %v3468
        %v3519 = vpack.c.b16 %v3473, %v3471
        %v3520 = vpack.c.b16 %v3474, %v3472
        %v3521 = vpack.c.b16 %v3477, %v3475
        %v3522 = vpack.c.b16 %v3478, %v3476
        %v3523 = vpack.c.b16 %v3481, %v3479
        %v3524 = vpack.c.b16 %v3482, %v3480
        %v3525 = vpack.c.b16 %v3485, %v3483
        %v3526 = vpack.c.b16 %v3486, %v3484
        %v3527 = vpack.c.b16 %v3489, %v3487
        %v3528 = vpack.c.b16 %v3490, %v3488
        %v3529 = vpack.c.b16 %v3493, %v3491
        %v3530 = vpack.c.b16 %v3494, %v3492
        %v3531 = vpack.c.b16 %v3497, %v3495
        %v3532 = vpack.c.b16 %v3498, %v3496
        %v3533 = vpack.c.b16 %v3501, %v3499
        %v3534 = vpack.c.b16 %v3502, %v3500
        %3567 = vmatprep.subr.bf16.mxu0 %v3504
        %3568 = vmatpush1.bf16.msra.mxu0 %v3503
        %3569 = vmatprep.subr.bf16.mxu0 %v3506
        %3570 = vmatpush1.bf16.msra.mxu0 %v3505
        %3571 = vmatprep.subr.bf16.mxu0 %v3508
        %3572 = vmatpush1.bf16.msra.mxu0 %v3507
        %3573 = vmatprep.subr.bf16.mxu0 %v3510
        %3574 = vmatpush1.bf16.msra.mxu0 %v3509
        %3575 = vmatprep.subr.bf16.mxu0 %v3512
        %3576 = vmatpush1.bf16.msra.mxu0 %v3511
        %3577 = vmatprep.subr.bf16.mxu0 %v3514
        %3578 = vmatpush1.bf16.msra.mxu0 %v3513
        %3579 = vmatprep.subr.bf16.mxu0 %v3516
        %3580 = vmatpush1.bf16.msra.mxu0 %v3515
        %3581 = vmatprep.subr.bf16.mxu0 %v3518
        %3582 = vmatpush1.bf16.msra.mxu0 %v3517
        %3583 = vmatprep.subr.bf16.mxu0 %v3520
        %3584 = vmatpush1.bf16.msra.mxu0 %v3519
        %3585 = vmatprep.subr.bf16.mxu0 %v3522
        %3586 = vmatpush1.bf16.msra.mxu0 %v3521
        %3587 = vmatprep.subr.bf16.mxu0 %v3524
        %3588 = vmatpush1.bf16.msra.mxu0 %v3523
        %3589 = vmatprep.subr.bf16.mxu0 %v3526
        %3590 = vmatpush1.bf16.msra.mxu0 %v3525
        %3591 = vmatprep.subr.bf16.mxu0 %v3528
        %3592 = vmatpush1.bf16.msra.mxu0 %v3527
        %3593 = vmatprep.subr.bf16.mxu0 %v3530
        %3594 = vmatpush1.bf16.msra.mxu0 %v3529
        %3595 = vmatprep.subr.bf16.mxu0 %v3532
        %3596 = vmatpush1.bf16.msra.mxu0 %v3531
        %3597 = vmatprep.subr.bf16.mxu0 %v3534
        %3598 = vmatpush1.bf16.msra.mxu0 %v3533
        %3599 = vmatprep.mubr.bf16.mxu0 %v3355
        %3600 = vmatmul.mubr.bf16.gmra.mrb[0].mxu0 %v2849
        %v3601 = vpop.f32.mrb[0].mxu0
        %v3602 = vadd.f32 %v3400, %v3601
        %v3603 = vpop.f32.mrb[0].mxu0
        %v3604 = vadd.f32 %v3404, %v3603
        %v3605 = vpop.f32.mrb[0].mxu0
        %v3606 = vadd.f32 %v3400, %v3605
        %v3607 = vpop.f32.mrb[0].mxu0
        %v3608 = vadd.f32 %v3404, %v3607
        %3609 = vmatprep.mubr.bf16.mxu0 %v3356
        %3610 = vmatmul.mubr.bf16.gmra.mrb[0].mxu0 %v2850
        %v3611 = vpop.f32.mrb[0].mxu0
        %v3612 = vadd.f32 %v3400, %v3611
        %v3613 = vpop.f32.mrb[0].mxu0
        %v3614 = vadd.f32 %v3404, %v3613
        %v3615 = vpop.f32.mrb[0].mxu0
        %v3616 = vadd.f32 %v3400, %v3615
        %v3617 = vpop.f32.mrb[0].mxu0
        %v3618 = vadd.f32 %v3404, %v3617
        %3619 = vmatprep.mubr.bf16.mxu0 %v3357
        %3620 = vmatmul.mubr.bf16.gmra.mrb[0].mxu0 %v2851
        %v3621 = vpop.f32.mrb[0].mxu0
        %v3622 = vadd.f32 %v3400, %v3621
        %v3623 = vpop.f32.mrb[0].mxu0
        %v3624 = vadd.f32 %v3404, %v3623
        %v3625 = vpop.f32.mrb[0].mxu0
        %v3626 = vadd.f32 %v3400, %v3625
        %v3627 = vpop.f32.mrb[0].mxu0
        %v3628 = vadd.f32 %v3404, %v3627
        %3629 = vmatprep.mubr.bf16.mxu0 %v3358
        %3630 = vmatmul.mubr.bf16.gmra.mrb[0].mxu0 %v2852
        %v3631 = vpop.f32.mrb[0].mxu0
        %v3632 = vadd.f32 %v3400, %v3631
        %v3633 = vpop.f32.mrb[0].mxu0
        %v3634 = vadd.f32 %v3404, %v3633
        %v3635 = vpop.f32.mrb[0].mxu0
        %v3636 = vadd.f32 %v3400, %v3635
        %v3637 = vpop.f32.mrb[0].mxu0
        %v3638 = vadd.f32 %v3404, %v3637
        %3639 = vmatprep.mubr.bf16.mxu0 %v3359
        %3640 = vmatmul.mubr.bf16.gmra.mrb[0].mxu0 %v2853
        %v3641 = vpop.f32.mrb[0].mxu0
        %v3642 = vadd.f32 %v3400, %v3641
        %v3643 = vpop.f32.mrb[0].mxu0
        %v3644 = vadd.f32 %v3404, %v3643
        %v3645 = vpop.f32.mrb[0].mxu0
        %v3646 = vadd.f32 %v3400, %v3645
        %v3647 = vpop.f32.mrb[0].mxu0
        %v3648 = vadd.f32 %v3404, %v3647
        %3649 = vmatprep.mubr.bf16.mxu0 %v3360
        %3650 = vmatmul.mubr.bf16.gmra.mrb[0].mxu0 %v2854
        %v3651 = vpop.f32.mrb[0].mxu0
        %v3652 = vadd.f32 %v3400, %v3651
        %v3653 = vpop.f32.mrb[0].mxu0
        %v3654 = vadd.f32 %v3404, %v3653
        %v3655 = vpop.f32.mrb[0].mxu0
        %v3656 = vadd.f32 %v3400, %v3655
        %v3657 = vpop.f32.mrb[0].mxu0
        %v3658 = vadd.f32 %v3404, %v3657
        %3659 = vmatprep.mubr.bf16.mxu0 %v3361
        %3660 = vmatmul.mubr.bf16.gmra.mrb[0].mxu0 %v2855
        %v3661 = vpop.f32.mrb[0].mxu0
        %v3662 = vadd.f32 %v3400, %v3661
        %v3663 = vpop.f32.mrb[0].mxu0
        %v3664 = vadd.f32 %v3404, %v3663
        %v3665 = vpop.f32.mrb[0].mxu0
        %v3666 = vadd.f32 %v3400, %v3665
        %v3667 = vpop.f32.mrb[0].mxu0
        %v3668 = vadd.f32 %v3404, %v3667
        %3669 = vmatprep.mubr.bf16.mxu0 %v3362
        %3670 = vmatmul.mubr.bf16.gmra.mrb[0].mxu0 %v2856
        %v3671 = vpop.f32.mrb[0].mxu0
        %v3672 = vadd.f32 %v3400, %v3671
        %v3673 = vpop.f32.mrb[0].mxu0
        %v3674 = vadd.f32 %v3404, %v3673
        %v3675 = vpop.f32.mrb[0].mxu0
        %v3676 = vadd.f32 %v3400, %v3675
        %v3677 = vpop.f32.mrb[0].mxu0
        %v3678 = vadd.f32 %v3404, %v3677
        %3679 = vdwg.mxu0
        %v3680 = vunpack.c.l.bf16 %v1922
        %v3681 = vunpack.c.h.bf16 %v1922
        %v3682 = vunpack.c.l.bf16 %v1923
        %v3683 = vunpack.c.h.bf16 %v1923
        %v3684 = vunpack.c.l.bf16 %v1924
        %v3685 = vunpack.c.h.bf16 %v1924
        %v3686 = vunpack.c.l.bf16 %v1925
        %v3687 = vunpack.c.h.bf16 %v1925
        %v3688 = vunpack.c.l.bf16 %v1926
        %v3689 = vunpack.c.h.bf16 %v1926
        %v3690 = vunpack.c.l.bf16 %v1927
        %v3691 = vunpack.c.h.bf16 %v1927
        %v3692 = vunpack.c.l.bf16 %v1928
        %v3693 = vunpack.c.h.bf16 %v1928
        %v3694 = vunpack.c.l.bf16 %v1929
        %v3695 = vunpack.c.h.bf16 %v1929
        %v3696 = vunpack.c.l.bf16 %v1930
        %v3697 = vunpack.c.h.bf16 %v1930
        %v3698 = vunpack.c.l.bf16 %v1931
        %v3699 = vunpack.c.h.bf16 %v1931
        %v3700 = vunpack.c.l.bf16 %v1932
        %v3701 = vunpack.c.h.bf16 %v1932
        %v3702 = vunpack.c.l.bf16 %v1933
        %v3703 = vunpack.c.h.bf16 %v1933
        %v3704 = vunpack.c.l.bf16 %v1934
        %v3705 = vunpack.c.h.bf16 %v1934
        %v3706 = vunpack.c.l.bf16 %v1935
        %v3707 = vunpack.c.h.bf16 %v1935
        %v3708 = vunpack.c.l.bf16 %v1936
        %v3709 = vunpack.c.h.bf16 %v1936
        %v3710 = vunpack.c.l.bf16 %v1937
        %v3711 = vunpack.c.h.bf16 %v1937
        %v3712 = vadd.f32 %v3602, %v3680
        %v3713 = vadd.f32 %v3604, %v3681
        %v3714 = vadd.f32 %v3606, %v3682
        %v3715 = vadd.f32 %v3608, %v3683
        %v3716 = vadd.f32 %v3612, %v3684
        %v3717 = vadd.f32 %v3614, %v3685
        %v3718 = vadd.f32 %v3616, %v3686
        %v3719 = vadd.f32 %v3618, %v3687
        %v3720 = vadd.f32 %v3622, %v3688
        %v3721 = vadd.f32 %v3624, %v3689
        %v3722 = vadd.f32 %v3626, %v3690
        %v3723 = vadd.f32 %v3628, %v3691
        %v3724 = vadd.f32 %v3632, %v3692
        %v3725 = vadd.f32 %v3634, %v3693
        %v3726 = vadd.f32 %v3636, %v3694
        %v3727 = vadd.f32 %v3638, %v3695
        %v3728 = vadd.f32 %v3642, %v3696
        %v3729 = vadd.f32 %v3644, %v3697
        %v3730 = vadd.f32 %v3646, %v3698
        %v3731 = vadd.f32 %v3648, %v3699
        %v3732 = vadd.f32 %v3652, %v3700
        %v3733 = vadd.f32 %v3654, %v3701
        %v3734 = vadd.f32 %v3656, %v3702
        %v3735 = vadd.f32 %v3658, %v3703
        %v3736 = vadd.f32 %v3662, %v3704
        %v3737 = vadd.f32 %v3664, %v3705
        %v3738 = vadd.f32 %v3666, %v3706
        %v3739 = vadd.f32 %v3668, %v3707
        %v3740 = vadd.f32 %v3672, %v3708
        %v3741 = vadd.f32 %v3674, %v3709
        %v3742 = vadd.f32 %v3676, %v3710
        %v3743 = vadd.f32 %v3678, %v3711
        %v3744 = vld [vmem:[%s9] sm:$0x3]
        %v3745 = vld [vmem:[%s10] sm:$0x3]
        %v3746 = vadd.f32 %v3712, %v3713
        %3747 = vadd.xlane.f32.xlu0 %v3746
        %v3748 = vpop.xlane.xlu0 %3747
        %v3749 = vadd.f32 %v3714, %v3715
        %3750 = vadd.xlane.f32.xlu0 %v3749
        %v3751 = vpop.xlane.xlu0 %3750
        %v3752 = vadd.f32 %v3716, %v3717
        %3753 = vadd.xlane.f32.xlu0 %v3752
        %v3754 = vpop.xlane.xlu0 %3753
        %v3755 = vadd.f32 %v3718, %v3719
        %3756 = vadd.xlane.f32.xlu0 %v3755
        %v3757 = vpop.xlane.xlu0 %3756
        %v3758 = vadd.f32 %v3720, %v3721
        %3759 = vadd.xlane.f32.xlu0 %v3758
        %v3760 = vpop.xlane.xlu0 %3759
        %v3761 = vadd.f32 %v3722, %v3723
        %3762 = vadd.xlane.f32.xlu0 %v3761
        %v3763 = vpop.xlane.xlu0 %3762
        %v3764 = vadd.f32 %v3724, %v3725
        %3765 = vadd.xlane.f32.xlu0 %v3764
        %v3766 = vpop.xlane.xlu0 %3765
        %v3767 = vadd.f32 %v3726, %v3727
        %3768 = vadd.xlane.f32.xlu0 %v3767
        %v3769 = vpop.xlane.xlu0 %3768
        %v3770 = vadd.f32 %v3728, %v3729
        %3771 = vadd.xlane.f32.xlu0 %v3770
        %v3772 = vpop.xlane.xlu0 %3771
        %v3773 = vadd.f32 %v3730, %v3731
        %3774 = vadd.xlane.f32.xlu0 %v3773
        %v3775 = vpop.xlane.xlu0 %3774
        %v3776 = vadd.f32 %v3732, %v3733
        %3777 = vadd.xlane.f32.xlu0 %v3776
        %v3778 = vpop.xlane.xlu0 %3777
        %v3779 = vadd.f32 %v3734, %v3735
        %3780 = vadd.xlane.f32.xlu0 %v3779
        %v3781 = vpop.xlane.xlu0 %3780
        %v3782 = vadd.f32 %v3736, %v3737
        %3783 = vadd.xlane.f32.xlu0 %v3782
        %v3784 = vpop.xlane.xlu0 %3783
        %v3785 = vadd.f32 %v3738, %v3739
        %3786 = vadd.xlane.f32.xlu0 %v3785
        %v3787 = vpop.xlane.xlu0 %3786
        %v3788 = vadd.f32 %v3740, %v3741
        %3789 = vadd.xlane.f32.xlu0 %v3788
        %v3790 = vpop.xlane.xlu0 %3789
        %v3791 = vadd.f32 %v3742, %v3743
        %3792 = vadd.xlane.f32.xlu0 %v3791
        %v3793 = vpop.xlane.xlu0 %3792
        %v3794 = vrcp.pop 256.0
        %v3795 = vmul.f32 %v3748, %v3794
        %v3796 = vmul.f32 %v3751, %v3794
        %v3797 = vmul.f32 %v3754, %v3794
        %v3798 = vmul.f32 %v3757, %v3794
        %v3799 = vmul.f32 %v3760, %v3794
        %v3800 = vmul.f32 %v3763, %v3794
        %v3801 = vmul.f32 %v3766, %v3794
        %v3802 = vmul.f32 %v3769, %v3794
        %v3803 = vmul.f32 %v3772, %v3794
        %v3804 = vmul.f32 %v3775, %v3794
        %v3805 = vmul.f32 %v3778, %v3794
        %v3806 = vmul.f32 %v3781, %v3794
        %v3807 = vmul.f32 %v3784, %v3794
        %v3808 = vmul.f32 %v3787, %v3794
        %v3809 = vmul.f32 %v3790, %v3794
        %v3810 = vmul.f32 %v3793, %v3794
        %v3811 = vsub.f32 %v3712, %v3795
        %v3812 = vsub.f32 %v3713, %v3795
        %v3813 = vsub.f32 %v3714, %v3796
        %v3814 = vsub.f32 %v3715, %v3796
        %v3815 = vsub.f32 %v3716, %v3797
        %v3816 = vsub.f32 %v3717, %v3797
        %v3817 = vsub.f32 %v3718, %v3798
        %v3818 = vsub.f32 %v3719, %v3798
        %v3819 = vsub.f32 %v3720, %v3799
        %v3820 = vsub.f32 %v3721, %v3799
        %v3821 = vsub.f32 %v3722, %v3800
        %v3822 = vsub.f32 %v3723, %v3800
        %v3823 = vsub.f32 %v3724, %v3801
        %v3824 = vsub.f32 %v3725, %v3801
        %v3825 = vsub.f32 %v3726, %v3802
        %v3826 = vsub.f32 %v3727, %v3802
        %v3827 = vsub.f32 %v3728, %v3803
        %v3828 = vsub.f32 %v3729, %v3803
        %v3829 = vsub.f32 %v3730, %v3804
        %v3830 = vsub.f32 %v3731, %v3804
        %v3831 = vsub.f32 %v3732, %v3805
        %v3832 = vsub.f32 %v3733, %v3805
        %v3833 = vsub.f32 %v3734, %v3806
        %v3834 = vsub.f32 %v3735, %v3806
        %v3835 = vsub.f32 %v3736, %v3807
        %v3836 = vsub.f32 %v3737, %v3807
        %v3837 = vsub.f32 %v3738, %v3808
        %v3838 = vsub.f32 %v3739, %v3808
        %v3839 = vsub.f32 %v3740, %v3809
        %v3840 = vsub.f32 %v3741, %v3809
        %v3841 = vsub.f32 %v3742, %v3810
        %v3842 = vsub.f32 %v3743, %v3810
        %v3843 = vmul.f32 %v3811, %v3811
        %v3844 = vmul.f32 %v3812, %v3812
        %v3845 = vmul.f32 %v3813, %v3813
        %v3846 = vmul.f32 %v3814, %v3814
        %v3847 = vmul.f32 %v3815, %v3815
        %v3848 = vmul.f32 %v3816, %v3816
        %v3849 = vmul.f32 %v3817, %v3817
        %v3850 = vmul.f32 %v3818, %v3818
        %v3851 = vmul.f32 %v3819, %v3819
        %v3852 = vmul.f32 %v3820, %v3820
        %v3853 = vmul.f32 %v3821, %v3821
        %v3854 = vmul.f32 %v3822, %v3822
        %v3855 = vmul.f32 %v3823, %v3823
        %v3856 = vmul.f32 %v3824, %v3824
        %v3857 = vmul.f32 %v3825, %v3825
        %v3858 = vmul.f32 %v3826, %v3826
        %v3859 = vmul.f32 %v3827, %v3827
        %v3860 = vmul.f32 %v3828, %v3828
        %v3861 = vmul.f32 %v3829, %v3829
        %v3862 = vmul.f32 %v3830, %v3830
        %v3863 = vmul.f32 %v3831, %v3831
        %v3864 = vmul.f32 %v3832, %v3832
        %v3865 = vmul.f32 %v3833, %v3833
        %v3866 = vmul.f32 %v3834, %v3834
        %v3867 = vmul.f32 %v3835, %v3835
        %v3868 = vmul.f32 %v3836, %v3836
        %v3869 = vmul.f32 %v3837, %v3837
        %v3870 = vmul.f32 %v3838, %v3838
        %v3871 = vmul.f32 %v3839, %v3839
        %v3872 = vmul.f32 %v3840, %v3840
        %v3873 = vmul.f32 %v3841, %v3841
        %v3874 = vmul.f32 %v3842, %v3842
        %v3875 = vadd.f32 %v3843, %v3844
        %3876 = vadd.xlane.f32.xlu0 %v3875
        %v3877 = vpop.xlane.xlu0 %3876
        %v3878 = vadd.f32 %v3845, %v3846
        %3879 = vadd.xlane.f32.xlu0 %v3878
        %v3880 = vpop.xlane.xlu0 %3879
        %v3881 = vadd.f32 %v3847, %v3848
        %3882 = vadd.xlane.f32.xlu0 %v3881
        %v3883 = vpop.xlane.xlu0 %3882
        %v3884 = vadd.f32 %v3849, %v3850
        %3885 = vadd.xlane.f32.xlu0 %v3884
        %v3886 = vpop.xlane.xlu0 %3885
        %v3887 = vadd.f32 %v3851, %v3852
        %3888 = vadd.xlane.f32.xlu0 %v3887
        %v3889 = vpop.xlane.xlu0 %3888
        %v3890 = vadd.f32 %v3853, %v3854
        %3891 = vadd.xlane.f32.xlu0 %v3890
        %v3892 = vpop.xlane.xlu0 %3891
        %v3893 = vadd.f32 %v3855, %v3856
        %3894 = vadd.xlane.f32.xlu0 %v3893
        %v3895 = vpop.xlane.xlu0 %3894
        %v3896 = vadd.f32 %v3857, %v3858
        %3897 = vadd.xlane.f32.xlu0 %v3896
        %v3898 = vpop.xlane.xlu0 %3897
        %v3899 = vadd.f32 %v3859, %v3860
        %3900 = vadd.xlane.f32.xlu0 %v3899
        %v3901 = vpop.xlane.xlu0 %3900
        %v3902 = vadd.f32 %v3861, %v3862
        %3903 = vadd.xlane.f32.xlu0 %v3902
        %v3904 = vpop.xlane.xlu0 %3903
        %v3905 = vadd.f32 %v3863, %v3864
        %3906 = vadd.xlane.f32.xlu0 %v3905
        %v3907 = vpop.xlane.xlu0 %3906
        %v3908 = vadd.f32 %v3865, %v3866
        %3909 = vadd.xlane.f32.xlu0 %v3908
        %v3910 = vpop.xlane.xlu0 %3909
        %v3911 = vadd.f32 %v3867, %v3868
        %3912 = vadd.xlane.f32.xlu0 %v3911
        %v3913 = vpop.xlane.xlu0 %3912
        %v3914 = vadd.f32 %v3869, %v3870
        %3915 = vadd.xlane.f32.xlu0 %v3914
        %v3916 = vpop.xlane.xlu0 %3915
        %v3917 = vadd.f32 %v3871, %v3872
        %3918 = vadd.xlane.f32.xlu0 %v3917
        %v3919 = vpop.xlane.xlu0 %3918
        %v3920 = vadd.f32 %v3873, %v3874
        %3921 = vadd.xlane.f32.xlu0 %v3920
        %v3922 = vpop.xlane.xlu0 %3921
        %v3923 = vmul.f32 %v3877, %v3794
        %v3924 = vmul.f32 %v3880, %v3794
        %v3925 = vmul.f32 %v3883, %v3794
        %v3926 = vmul.f32 %v3886, %v3794
        %v3927 = vmul.f32 %v3889, %v3794
        %v3928 = vmul.f32 %v3892, %v3794
        %v3929 = vmul.f32 %v3895, %v3794
        %v3930 = vmul.f32 %v3898, %v3794
        %v3931 = vmul.f32 %v3901, %v3794
        %v3932 = vmul.f32 %v3904, %v3794
        %v3933 = vmul.f32 %v3907, %v3794
        %v3934 = vmul.f32 %v3910, %v3794
        %v3935 = vmul.f32 %v3913, %v3794
        %v3936 = vmul.f32 %v3916, %v3794
        %v3937 = vmul.f32 %v3919, %v3794
        %v3938 = vmul.f32 %v3922, %v3794
        %v3939 = vadd.f32 %v3923, 1e-05
        %v3940 = vadd.f32 %v3924, 1e-05
        %v3941 = vadd.f32 %v3925, 1e-05
        %v3942 = vadd.f32 %v3926, 1e-05
        %v3943 = vadd.f32 %v3927, 1e-05
        %v3944 = vadd.f32 %v3928, 1e-05
        %v3945 = vadd.f32 %v3929, 1e-05
        %v3946 = vadd.f32 %v3930, 1e-05
        %v3947 = vadd.f32 %v3931, 1e-05
        %v3948 = vadd.f32 %v3932, 1e-05
        %v3949 = vadd.f32 %v3933, 1e-05
        %v3950 = vadd.f32 %v3934, 1e-05
        %v3951 = vadd.f32 %v3935, 1e-05
        %v3952 = vadd.f32 %v3936, 1e-05
        %v3953 = vadd.f32 %v3937, 1e-05
        %v3954 = vadd.f32 %v3938, 1e-05
        %v3955 = vrsqrt.pop %v3939
        %v3956 = vrsqrt.pop %v3940
        %v3957 = vrsqrt.pop %v3941
        %v3958 = vrsqrt.pop %v3942
        %v3959 = vrsqrt.pop %v3943
        %v3960 = vrsqrt.pop %v3944
        %v3961 = vrsqrt.pop %v3945
        %v3962 = vrsqrt.pop %v3946
        %v3963 = vrsqrt.pop %v3947
        %v3964 = vrsqrt.pop %v3948
        %v3965 = vrsqrt.pop %v3949
        %v3966 = vrsqrt.pop %v3950
        %v3967 = vrsqrt.pop %v3951
        %v3968 = vrsqrt.pop %v3952
        %v3969 = vrsqrt.pop %v3953
        %v3970 = vrsqrt.pop %v3954
        %v3971 = vmul.f32 %v3811, %v3955
        %v3972 = vmul.f32 %v3812, %v3955
        %v3973 = vmul.f32 %v3813, %v3956
        %v3974 = vmul.f32 %v3814, %v3956
        %v3975 = vmul.f32 %v3815, %v3957
        %v3976 = vmul.f32 %v3816, %v3957
        %v3977 = vmul.f32 %v3817, %v3958
        %v3978 = vmul.f32 %v3818, %v3958
        %v3979 = vmul.f32 %v3819, %v3959
        %v3980 = vmul.f32 %v3820, %v3959
        %v3981 = vmul.f32 %v3821, %v3960
        %v3982 = vmul.f32 %v3822, %v3960
        %v3983 = vmul.f32 %v3823, %v3961
        %v3984 = vmul.f32 %v3824, %v3961
        %v3985 = vmul.f32 %v3825, %v3962
        %v3986 = vmul.f32 %v3826, %v3962
        %v3987 = vmul.f32 %v3827, %v3963
        %v3988 = vmul.f32 %v3828, %v3963
        %v3989 = vmul.f32 %v3829, %v3964
        %v3990 = vmul.f32 %v3830, %v3964
        %v3991 = vmul.f32 %v3831, %v3965
        %v3992 = vmul.f32 %v3832, %v3965
        %v3993 = vmul.f32 %v3833, %v3966
        %v3994 = vmul.f32 %v3834, %v3966
        %v3995 = vmul.f32 %v3835, %v3967
        %v3996 = vmul.f32 %v3836, %v3967
        %v3997 = vmul.f32 %v3837, %v3968
        %v3998 = vmul.f32 %v3838, %v3968
        %v3999 = vmul.f32 %v3839, %v3969
        %v4000 = vmul.f32 %v3840, %v3969
        %v4001 = vmul.f32 %v3841, %v3970
        %v4002 = vmul.f32 %v3842, %v3970
        %v4004 = vlaneseq
        %v4005 = vshrl.u32 %v4004, 7
        %v4006 = vsub.s32 0, %v4005
        %v4007 = vrot.slane %v3744, %v4006
        %v4008 = vlaneseq
        %v4009 = vshrl.u32 %v4008, 7
        %v4010 = vsub.s32 1, %v4009
        %v4011 = vrot.slane %v3744, %v4010
        %v4014 = vmul.f32 %v3971, %v4007
        %v4015 = vmul.f32 %v3972, %v4011
        %v4016 = vmul.f32 %v3973, %v4007
        %v4017 = vmul.f32 %v3974, %v4011
        %v4018 = vmul.f32 %v3975, %v4007
        %v4019 = vmul.f32 %v3976, %v4011
        %v4020 = vmul.f32 %v3977, %v4007
        %v4021 = vmul.f32 %v3978, %v4011
        %v4022 = vmul.f32 %v3979, %v4007
        %v4023 = vmul.f32 %v3980, %v4011
        %v4024 = vmul.f32 %v3981, %v4007
        %v4025 = vmul.f32 %v3982, %v4011
        %v4026 = vmul.f32 %v3983, %v4007
        %v4027 = vmul.f32 %v3984, %v4011
        %v4028 = vmul.f32 %v3985, %v4007
        %v4029 = vmul.f32 %v3986, %v4011
        %v4030 = vmul.f32 %v3987, %v4007
        %v4031 = vmul.f32 %v3988, %v4011
        %v4032 = vmul.f32 %v3989, %v4007
        %v4033 = vmul.f32 %v3990, %v4011
        %v4034 = vmul.f32 %v3991, %v4007
        %v4035 = vmul.f32 %v3992, %v4011
        %v4036 = vmul.f32 %v3993, %v4007
        %v4037 = vmul.f32 %v3994, %v4011
        %v4038 = vmul.f32 %v3995, %v4007
        %v4039 = vmul.f32 %v3996, %v4011
        %v4040 = vmul.f32 %v3997, %v4007
        %v4041 = vmul.f32 %v3998, %v4011
        %v4042 = vmul.f32 %v3999, %v4007
        %v4043 = vmul.f32 %v4000, %v4011
        %v4044 = vmul.f32 %v4001, %v4007
        %v4045 = vmul.f32 %v4002, %v4011
        %v4047 = vlaneseq
        %v4048 = vshrl.u32 %v4047, 7
        %v4049 = vsub.s32 0, %v4048
        %v4050 = vrot.slane %v3745, %v4049
        %v4051 = vlaneseq
        %v4052 = vshrl.u32 %v4051, 7
        %v4053 = vsub.s32 1, %v4052
        %v4054 = vrot.slane %v3745, %v4053
        %v4057 = vadd.f32 %v4014, %v4050
        %v4058 = vadd.f32 %v4015, %v4054
        %v4059 = vadd.f32 %v4016, %v4050
        %v4060 = vadd.f32 %v4017, %v4054
        %v4061 = vadd.f32 %v4018, %v4050
        %v4062 = vadd.f32 %v4019, %v4054
        %v4063 = vadd.f32 %v4020, %v4050
        %v4064 = vadd.f32 %v4021, %v4054
        %v4065 = vadd.f32 %v4022, %v4050
        %v4066 = vadd.f32 %v4023, %v4054
        %v4067 = vadd.f32 %v4024, %v4050
        %v4068 = vadd.f32 %v4025, %v4054
        %v4069 = vadd.f32 %v4026, %v4050
        %v4070 = vadd.f32 %v4027, %v4054
        %v4071 = vadd.f32 %v4028, %v4050
        %v4072 = vadd.f32 %v4029, %v4054
        %v4073 = vadd.f32 %v4030, %v4050
        %v4074 = vadd.f32 %v4031, %v4054
        %v4075 = vadd.f32 %v4032, %v4050
        %v4076 = vadd.f32 %v4033, %v4054
        %v4077 = vadd.f32 %v4034, %v4050
        %v4078 = vadd.f32 %v4035, %v4054
        %v4079 = vadd.f32 %v4036, %v4050
        %v4080 = vadd.f32 %v4037, %v4054
        %v4081 = vadd.f32 %v4038, %v4050
        %v4082 = vadd.f32 %v4039, %v4054
        %v4083 = vadd.f32 %v4040, %v4050
        %v4084 = vadd.f32 %v4041, %v4054
        %v4085 = vadd.f32 %v4042, %v4050
        %v4086 = vadd.f32 %v4043, %v4054
        %v4087 = vadd.f32 %v4044, %v4050
        %v4088 = vadd.f32 %v4045, %v4054
        %v4089 = vpack.c.bf16 %v4059, %v4057
        %v4090 = vpack.c.bf16 %v4060, %v4058
        %v4091 = vpack.c.bf16 %v4063, %v4061
        %v4092 = vpack.c.bf16 %v4064, %v4062
        %v4093 = vpack.c.bf16 %v4067, %v4065
        %v4094 = vpack.c.bf16 %v4068, %v4066
        %v4095 = vpack.c.bf16 %v4071, %v4069
        %v4096 = vpack.c.bf16 %v4072, %v4070
        %v4097 = vpack.c.bf16 %v4075, %v4073
        %v4098 = vpack.c.bf16 %v4076, %v4074
        %v4099 = vpack.c.bf16 %v4079, %v4077
        %v4100 = vpack.c.bf16 %v4080, %v4078
        %v4101 = vpack.c.bf16 %v4083, %v4081
        %v4102 = vpack.c.bf16 %v4084, %v4082
        %v4103 = vpack.c.bf16 %v4087, %v4085
        %v4104 = vpack.c.bf16 %v4088, %v4086
        %v4105 = vld [vmem:[#allocation13] sm:$0xff]
        %v4106 = vld [vmem:[#allocation13 + $0x8] sm:$0xff]
        %v4107 = vld [vmem:[#allocation13 + $0x10] sm:$0xff]
        %v4108 = vld [vmem:[#allocation13 + $0x18] sm:$0xff]
        %v4109 = vld [vmem:[#allocation13 + $0x20] sm:$0xff]
        %v4110 = vld [vmem:[#allocation13 + $0x28] sm:$0xff]
        %v4111 = vld [vmem:[#allocation13 + $0x30] sm:$0xff]
        %v4112 = vld [vmem:[#allocation13 + $0x38] sm:$0xff]
        %v4113 = vld [vmem:[#allocation13 + $0x40] sm:$0xff]
        %v4114 = vld [vmem:[#allocation13 + $0x48] sm:$0xff]
        %v4115 = vld [vmem:[#allocation13 + $0x50] sm:$0xff]
        %v4116 = vld [vmem:[#allocation13 + $0x58] sm:$0xff]
        %v4117 = vld [vmem:[#allocation13 + $0x60] sm:$0xff]
        %v4118 = vld [vmem:[#allocation13 + $0x68] sm:$0xff]
        %v4119 = vld [vmem:[#allocation13 + $0x70] sm:$0xff]
        %v4120 = vld [vmem:[#allocation13 + $0x78] sm:$0xff]
        %v4121 = vld [vmem:[#allocation13 + $0x80] sm:$0xff]
        %v4122 = vld [vmem:[#allocation13 + $0x88] sm:$0xff]
        %v4123 = vld [vmem:[#allocation13 + $0x90] sm:$0xff]
        %v4124 = vld [vmem:[#allocation13 + $0x98] sm:$0xff]
        %v4125 = vld [vmem:[#allocation13 + $0xa0] sm:$0xff]
        %v4126 = vld [vmem:[#allocation13 + $0xa8] sm:$0xff]
        %v4127 = vld [vmem:[#allocation13 + $0xb0] sm:$0xff]
        %v4128 = vld [vmem:[#allocation13 + $0xb8] sm:$0xff]
        %v4129 = vld [vmem:[#allocation13 + $0xc0] sm:$0xff]
        %v4130 = vld [vmem:[#allocation13 + $0xc8] sm:$0xff]
        %v4131 = vld [vmem:[#allocation13 + $0xd0] sm:$0xff]
        %v4132 = vld [vmem:[#allocation13 + $0xd8] sm:$0xff]
        %v4133 = vld [vmem:[#allocation13 + $0xe0] sm:$0xff]
        %v4134 = vld [vmem:[#allocation13 + $0xe8] sm:$0xff]
        %v4135 = vld [vmem:[#allocation13 + $0xf0] sm:$0xff]
        %v4136 = vld [vmem:[#allocation13 + $0xf8] sm:$0xff]
        %v4137 = vld [vmem:[#allocation13 + $0x100] sm:$0xff]
        %v4138 = vld [vmem:[#allocation13 + $0x108] sm:$0xff]
        %v4139 = vld [vmem:[#allocation13 + $0x110] sm:$0xff]
        %v4140 = vld [vmem:[#allocation13 + $0x118] sm:$0xff]
        %v4141 = vld [vmem:[#allocation13 + $0x120] sm:$0xff]
        %v4142 = vld [vmem:[#allocation13 + $0x128] sm:$0xff]
        %v4143 = vld [vmem:[#allocation13 + $0x130] sm:$0xff]
        %v4144 = vld [vmem:[#allocation13 + $0x138] sm:$0xff]
        %v4145 = vld [vmem:[#allocation13 + $0x140] sm:$0xff]
        %v4146 = vld [vmem:[#allocation13 + $0x148] sm:$0xff]
        %v4147 = vld [vmem:[#allocation13 + $0x150] sm:$0xff]
        %v4148 = vld [vmem:[#allocation13 + $0x158] sm:$0xff]
        %v4149 = vld [vmem:[#allocation13 + $0x160] sm:$0xff]
        %v4150 = vld [vmem:[#allocation13 + $0x168] sm:$0xff]
        %v4151 = vld [vmem:[#allocation13 + $0x170] sm:$0xff]
        %v4152 = vld [vmem:[#allocation13 + $0x178] sm:$0xff]
        %v4153 = vld [vmem:[#allocation13 + $0x180] sm:$0xff]
        %v4154 = vld [vmem:[#allocation13 + $0x188] sm:$0xff]
        %v4155 = vld [vmem:[#allocation13 + $0x190] sm:$0xff]
        %v4156 = vld [vmem:[#allocation13 + $0x198] sm:$0xff]
        %v4157 = vld [vmem:[#allocation13 + $0x1a0] sm:$0xff]
        %v4158 = vld [vmem:[#allocation13 + $0x1a8] sm:$0xff]
        %v4159 = vld [vmem:[#allocation13 + $0x1b0] sm:$0xff]
        %v4160 = vld [vmem:[#allocation13 + $0x1b8] sm:$0xff]
        %v4161 = vld [vmem:[#allocation13 + $0x1c0] sm:$0xff]
        %v4162 = vld [vmem:[#allocation13 + $0x1c8] sm:$0xff]
        %v4163 = vld [vmem:[#allocation13 + $0x1d0] sm:$0xff]
        %v4164 = vld [vmem:[#allocation13 + $0x1d8] sm:$0xff]
        %v4165 = vld [vmem:[#allocation13 + $0x1e0] sm:$0xff]
        %v4166 = vld [vmem:[#allocation13 + $0x1e8] sm:$0xff]
        %v4167 = vld [vmem:[#allocation13 + $0x1f0] sm:$0xff]
        %v4168 = vld [vmem:[#allocation13 + $0x1f8] sm:$0xff]
        %v4169 = vld [vmem:[%s12] sm:$0xf]
        %v4171 = vlaneseq
        %v4172 = vshrl.u32 %v4171, 7
        %v4173 = vsub.s32 0, %v4172
        %v4174 = vrot.slane %v4169, %v4173
        %v4175 = vlaneseq
        %v4176 = vshrl.u32 %v4175, 7
        %v4177 = vsub.s32 1, %v4176
        %v4178 = vrot.slane %v4169, %v4177
        %v4179 = vlaneseq
        %v4180 = vshrl.u32 %v4179, 7
        %v4181 = vsub.s32 2, %v4180
        %v4182 = vrot.slane %v4169, %v4181
        %v4183 = vlaneseq
        %v4184 = vshrl.u32 %v4183, 7
        %v4185 = vsub.s32 3, %v4184
        %v4186 = vrot.slane %v4169, %v4185
        %v4255 = vunpack.c.l.b16 %v4105
        %v4256 = vunpack.c.h.b16 %v4105
        %v4257 = vunpack.c.l.b16 %v4106
        %v4258 = vunpack.c.h.b16 %v4106
        %v4259 = vunpack.c.l.b16 %v4107
        %v4260 = vunpack.c.h.b16 %v4107
        %v4261 = vunpack.c.l.b16 %v4108
        %v4262 = vunpack.c.h.b16 %v4108
        %v4263 = vunpack.c.l.b16 %v4109
        %v4264 = vunpack.c.h.b16 %v4109
        %v4265 = vunpack.c.l.b16 %v4110
        %v4266 = vunpack.c.h.b16 %v4110
        %v4267 = vunpack.c.l.b16 %v4111
        %v4268 = vunpack.c.h.b16 %v4111
        %v4269 = vunpack.c.l.b16 %v4112
        %v4270 = vunpack.c.h.b16 %v4112
        %v4271 = vunpack.c.l.b16 %v4113
        %v4272 = vunpack.c.h.b16 %v4113
        %v4273 = vunpack.c.l.b16 %v4114
        %v4274 = vunpack.c.h.b16 %v4114
        %v4275 = vunpack.c.l.b16 %v4115
        %v4276 = vunpack.c.h.b16 %v4115
        %v4277 = vunpack.c.l.b16 %v4116
        %v4278 = vunpack.c.h.b16 %v4116
        %v4279 = vunpack.c.l.b16 %v4117
        %v4280 = vunpack.c.h.b16 %v4117
        %v4281 = vunpack.c.l.b16 %v4118
        %v4282 = vunpack.c.h.b16 %v4118
        %v4283 = vunpack.c.l.b16 %v4119
        %v4284 = vunpack.c.h.b16 %v4119
        %v4285 = vunpack.c.l.b16 %v4120
        %v4286 = vunpack.c.h.b16 %v4120
        %v4287 = vunpack.c.l.b16 %v4121
        %v4288 = vunpack.c.h.b16 %v4121
        %v4289 = vunpack.c.l.b16 %v4122
        %v4290 = vunpack.c.h.b16 %v4122
        %v4291 = vunpack.c.l.b16 %v4123
        %v4292 = vunpack.c.h.b16 %v4123
        %v4293 = vunpack.c.l.b16 %v4124
        %v4294 = vunpack.c.h.b16 %v4124
        %v4295 = vunpack.c.l.b16 %v4125
        %v4296 = vunpack.c.h.b16 %v4125
        %v4297 = vunpack.c.l.b16 %v4126
        %v4298 = vunpack.c.h.b16 %v4126
        %v4299 = vunpack.c.l.b16 %v4127
        %v4300 = vunpack.c.h.b16 %v4127
        %v4301 = vunpack.c.l.b16 %v4128
        %v4302 = vunpack.c.h.b16 %v4128
        %v4303 = vunpack.c.l.b16 %v4129
        %v4304 = vunpack.c.h.b16 %v4129
        %v4305 = vunpack.c.l.b16 %v4130
        %v4306 = vunpack.c.h.b16 %v4130
        %v4307 = vunpack.c.l.b16 %v4131
        %v4308 = vunpack.c.h.b16 %v4131
        %v4309 = vunpack.c.l.b16 %v4132
        %v4310 = vunpack.c.h.b16 %v4132
        %v4311 = vunpack.c.l.b16 %v4133
        %v4312 = vunpack.c.h.b16 %v4133
        %v4313 = vunpack.c.l.b16 %v4134
        %v4314 = vunpack.c.h.b16 %v4134
        %v4315 = vunpack.c.l.b16 %v4135
        %v4316 = vunpack.c.h.b16 %v4135
        %v4317 = vunpack.c.l.b16 %v4136
        %v4318 = vunpack.c.h.b16 %v4136
        %v4319 = vunpack.c.l.b16 %v4137
        %v4320 = vunpack.c.h.b16 %v4137
        %v4321 = vunpack.c.l.b16 %v4138
        %v4322 = vunpack.c.h.b16 %v4138
        %v4323 = vunpack.c.l.b16 %v4139
        %v4324 = vunpack.c.h.b16 %v4139
        %v4325 = vunpack.c.l.b16 %v4140
        %v4326 = vunpack.c.h.b16 %v4140
        %v4327 = vunpack.c.l.b16 %v4141
        %v4328 = vunpack.c.h.b16 %v4141
        %v4329 = vunpack.c.l.b16 %v4142
        %v4330 = vunpack.c.h.b16 %v4142
        %v4331 = vunpack.c.l.b16 %v4143
        %v4332 = vunpack.c.h.b16 %v4143
        %v4333 = vunpack.c.l.b16 %v4144
        %v4334 = vunpack.c.h.b16 %v4144
        %v4335 = vunpack.c.l.b16 %v4145
        %v4336 = vunpack.c.h.b16 %v4145
        %v4337 = vunpack.c.l.b16 %v4146
        %v4338 = vunpack.c.h.b16 %v4146
        %v4339 = vunpack.c.l.b16 %v4147
        %v4340 = vunpack.c.h.b16 %v4147
        %v4341 = vunpack.c.l.b16 %v4148
        %v4342 = vunpack.c.h.b16 %v4148
        %v4343 = vunpack.c.l.b16 %v4149
        %v4344 = vunpack.c.h.b16 %v4149
        %v4345 = vunpack.c.l.b16 %v4150
        %v4346 = vunpack.c.h.b16 %v4150
        %v4347 = vunpack.c.l.b16 %v4151
        %v4348 = vunpack.c.h.b16 %v4151
        %v4349 = vunpack.c.l.b16 %v4152
        %v4350 = vunpack.c.h.b16 %v4152
        %v4351 = vunpack.c.l.b16 %v4153
        %v4352 = vunpack.c.h.b16 %v4153
        %v4353 = vunpack.c.l.b16 %v4154
        %v4354 = vunpack.c.h.b16 %v4154
        %v4355 = vunpack.c.l.b16 %v4155
        %v4356 = vunpack.c.h.b16 %v4155
        %v4357 = vunpack.c.l.b16 %v4156
        %v4358 = vunpack.c.h.b16 %v4156
        %v4359 = vunpack.c.l.b16 %v4157
        %v4360 = vunpack.c.h.b16 %v4157
        %v4361 = vunpack.c.l.b16 %v4158
        %v4362 = vunpack.c.h.b16 %v4158
        %v4363 = vunpack.c.l.b16 %v4159
        %v4364 = vunpack.c.h.b16 %v4159
        %v4365 = vunpack.c.l.b16 %v4160
        %v4366 = vunpack.c.h.b16 %v4160
        %v4367 = vunpack.c.l.b16 %v4161
        %v4368 = vunpack.c.h.b16 %v4161
        %v4369 = vunpack.c.l.b16 %v4162
        %v4370 = vunpack.c.h.b16 %v4162
        %v4371 = vunpack.c.l.b16 %v4163
        %v4372 = vunpack.c.h.b16 %v4163
        %v4373 = vunpack.c.l.b16 %v4164
        %v4374 = vunpack.c.h.b16 %v4164
        %v4375 = vunpack.c.l.b16 %v4165
        %v4376 = vunpack.c.h.b16 %v4165
        %v4377 = vunpack.c.l.b16 %v4166
        %v4378 = vunpack.c.h.b16 %v4166
        %v4379 = vunpack.c.l.b16 %v4167
        %v4380 = vunpack.c.h.b16 %v4167
        %v4381 = vunpack.c.l.b16 %v4168
        %v4382 = vunpack.c.h.b16 %v4168
        %v4383 = vpack.c.b16 %v4259, %v4255
        %v4384 = vpack.c.b16 %v4260, %v4256
        %v4385 = vpack.c.b16 %v4261, %v4257
        %v4386 = vpack.c.b16 %v4262, %v4258
        %v4387 = vpack.c.b16 %v4267, %v4263
        %v4388 = vpack.c.b16 %v4268, %v4264
        %v4389 = vpack.c.b16 %v4269, %v4265
        %v4390 = vpack.c.b16 %v4270, %v4266
        %v4391 = vpack.c.b16 %v4275, %v4271
        %v4392 = vpack.c.b16 %v4276, %v4272
        %v4393 = vpack.c.b16 %v4277, %v4273
        %v4394 = vpack.c.b16 %v4278, %v4274
        %v4395 = vpack.c.b16 %v4283, %v4279
        %v4396 = vpack.c.b16 %v4284, %v4280
        %v4397 = vpack.c.b16 %v4285, %v4281
        %v4398 = vpack.c.b16 %v4286, %v4282
        %v4399 = vpack.c.b16 %v4291, %v4287
        %v4400 = vpack.c.b16 %v4292, %v4288
        %v4401 = vpack.c.b16 %v4293, %v4289
        %v4402 = vpack.c.b16 %v4294, %v4290
        %v4403 = vpack.c.b16 %v4299, %v4295
        %v4404 = vpack.c.b16 %v4300, %v4296
        %v4405 = vpack.c.b16 %v4301, %v4297
        %v4406 = vpack.c.b16 %v4302, %v4298
        %v4407 = vpack.c.b16 %v4307, %v4303
        %v4408 = vpack.c.b16 %v4308, %v4304
        %v4409 = vpack.c.b16 %v4309, %v4305
        %v4410 = vpack.c.b16 %v4310, %v4306
        %v4411 = vpack.c.b16 %v4315, %v4311
        %v4412 = vpack.c.b16 %v4316, %v4312
        %v4413 = vpack.c.b16 %v4317, %v4313
        %v4414 = vpack.c.b16 %v4318, %v4314
        %v4415 = vpack.c.b16 %v4323, %v4319
        %v4416 = vpack.c.b16 %v4324, %v4320
        %v4417 = vpack.c.b16 %v4325, %v4321
        %v4418 = vpack.c.b16 %v4326, %v4322
        %v4419 = vpack.c.b16 %v4331, %v4327
        %v4420 = vpack.c.b16 %v4332, %v4328
        %v4421 = vpack.c.b16 %v4333, %v4329
        %v4422 = vpack.c.b16 %v4334, %v4330
        %v4423 = vpack.c.b16 %v4339, %v4335
        %v4424 = vpack.c.b16 %v4340, %v4336
        %v4425 = vpack.c.b16 %v4341, %v4337
        %v4426 = vpack.c.b16 %v4342, %v4338
        %v4427 = vpack.c.b16 %v4347, %v4343
        %v4428 = vpack.c.b16 %v4348, %v4344
        %v4429 = vpack.c.b16 %v4349, %v4345
        %v4430 = vpack.c.b16 %v4350, %v4346
        %v4431 = vpack.c.b16 %v4355, %v4351
        %v4432 = vpack.c.b16 %v4356, %v4352
        %v4433 = vpack.c.b16 %v4357, %v4353
        %v4434 = vpack.c.b16 %v4358, %v4354
        %v4435 = vpack.c.b16 %v4363, %v4359
        %v4436 = vpack.c.b16 %v4364, %v4360
        %v4437 = vpack.c.b16 %v4365, %v4361
        %v4438 = vpack.c.b16 %v4366, %v4362
        %v4439 = vpack.c.b16 %v4371, %v4367
        %v4440 = vpack.c.b16 %v4372, %v4368
        %v4441 = vpack.c.b16 %v4373, %v4369
        %v4442 = vpack.c.b16 %v4374, %v4370
        %v4443 = vpack.c.b16 %v4379, %v4375
        %v4444 = vpack.c.b16 %v4380, %v4376
        %v4445 = vpack.c.b16 %v4381, %v4377
        %v4446 = vpack.c.b16 %v4382, %v4378
        %4511 = vmatprep.subr.bf16.mxu0 %v4384
        %4512 = vmatpush1.bf16.msra.mxu0 %v4383
        %4513 = vmatprep.subr.bf16.mxu0 %v4388
        %4514 = vmatpush1.bf16.msra.mxu0 %v4387
        %4515 = vmatprep.subr.bf16.mxu0 %v4392
        %4516 = vmatpush1.bf16.msra.mxu0 %v4391
        %4517 = vmatprep.subr.bf16.mxu0 %v4396
        %4518 = vmatpush1.bf16.msra.mxu0 %v4395
        %4519 = vmatprep.subr.bf16.mxu0 %v4400
        %4520 = vmatpush1.bf16.msra.mxu0 %v4399
        %4521 = vmatprep.subr.bf16.mxu0 %v4404
        %4522 = vmatpush1.bf16.msra.mxu0 %v4403
        %4523 = vmatprep.subr.bf16.mxu0 %v4408
        %4524 = vmatpush1.bf16.msra.mxu0 %v4407
        %4525 = vmatprep.subr.bf16.mxu0 %v4412
        %4526 = vmatpush1.bf16.msra.mxu0 %v4411
        %4527 = vmatprep.subr.bf16.mxu0 %v4416
        %4528 = vmatpush1.bf16.msra.mxu0 %v4415
        %4529 = vmatprep.subr.bf16.mxu0 %v4420
        %4530 = vmatpush1.bf16.msra.mxu0 %v4419
        %4531 = vmatprep.subr.bf16.mxu0 %v4424
        %4532 = vmatpush1.bf16.msra.mxu0 %v4423
        %4533 = vmatprep.subr.bf16.mxu0 %v4428
        %4534 = vmatpush1.bf16.msra.mxu0 %v4427
        %4535 = vmatprep.subr.bf16.mxu0 %v4432
        %4536 = vmatpush1.bf16.msra.mxu0 %v4431
        %4537 = vmatprep.subr.bf16.mxu0 %v4436
        %4538 = vmatpush1.bf16.msra.mxu0 %v4435
        %4539 = vmatprep.subr.bf16.mxu0 %v4440
        %4540 = vmatpush1.bf16.msra.mxu0 %v4439
        %4541 = vmatprep.subr.bf16.mxu0 %v4444
        %4542 = vmatpush1.bf16.msra.mxu0 %v4443
        %4543 = vmatprep.mubr.bf16.mxu0 %v4090
        %4544 = vmatmul.mubr.bf16.gmra.mrb[0].mxu0 %v4089
        %v4545 = vpop.f32.mrb[0].mxu0
        %v4546 = vadd.f32 %v4174, %v4545
        %v4547 = vpop.f32.mrb[0].mxu0
        %v4548 = vadd.f32 %v4178, %v4547
        %v4549 = vpop.f32.mrb[0].mxu0
        %v4550 = vadd.f32 %v4174, %v4549
        %v4551 = vpop.f32.mrb[0].mxu0
        %v4552 = vadd.f32 %v4178, %v4551
        %4553 = vmatprep.mubr.bf16.mxu0 %v4092
        %4554 = vmatmul.mubr.bf16.gmra.mrb[0].mxu0 %v4091
        %v4555 = vpop.f32.mrb[0].mxu0
        %v4556 = vadd.f32 %v4174, %v4555
        %v4557 = vpop.f32.mrb[0].mxu0
        %v4558 = vadd.f32 %v4178, %v4557
        %v4559 = vpop.f32.mrb[0].mxu0
        %v4560 = vadd.f32 %v4174, %v4559
        %v4561 = vpop.f32.mrb[0].mxu0
        %v4562 = vadd.f32 %v4178, %v4561
        %4563 = vmatprep.mubr.bf16.mxu0 %v4094
        %4564 = vmatmul.mubr.bf16.gmra.mrb[0].mxu0 %v4093
        %v4565 = vpop.f32.mrb[0].mxu0
        %v4566 = vadd.f32 %v4174, %v4565
        %v4567 = vpop.f32.mrb[0].mxu0
        %v4568 = vadd.f32 %v4178, %v4567
        %v4569 = vpop.f32.mrb[0].mxu0
        %v4570 = vadd.f32 %v4174, %v4569
        %v4571 = vpop.f32.mrb[0].mxu0
        %v4572 = vadd.f32 %v4178, %v4571
        %4573 = vmatprep.mubr.bf16.mxu0 %v4096
        %4574 = vmatmul.mubr.bf16.gmra.mrb[0].mxu0 %v4095
        %v4575 = vpop.f32.mrb[0].mxu0
        %v4576 = vadd.f32 %v4174, %v4575
        %v4577 = vpop.f32.mrb[0].mxu0
        %v4578 = vadd.f32 %v4178, %v4577
        %v4579 = vpop.f32.mrb[0].mxu0
        %v4580 = vadd.f32 %v4174, %v4579
        %v4581 = vpop.f32.mrb[0].mxu0
        %v4582 = vadd.f32 %v4178, %v4581
        %4583 = vmatprep.mubr.bf16.mxu0 %v4098
        %4584 = vmatmul.mubr.bf16.gmra.mrb[0].mxu0 %v4097
        %v4585 = vpop.f32.mrb[0].mxu0
        %v4586 = vadd.f32 %v4174, %v4585
        %v4587 = vpop.f32.mrb[0].mxu0
        %v4588 = vadd.f32 %v4178, %v4587
        %v4589 = vpop.f32.mrb[0].mxu0
        %v4590 = vadd.f32 %v4174, %v4589
        %v4591 = vpop.f32.mrb[0].mxu0
        %v4592 = vadd.f32 %v4178, %v4591
        %4593 = vmatprep.mubr.bf16.mxu0 %v4100
        %4594 = vmatmul.mubr.bf16.gmra.mrb[0].mxu0 %v4099
        %v4595 = vpop.f32.mrb[0].mxu0
        %v4596 = vadd.f32 %v4174, %v4595
        %v4597 = vpop.f32.mrb[0].mxu0
        %v4598 = vadd.f32 %v4178, %v4597
        %v4599 = vpop.f32.mrb[0].mxu0
        %v4600 = vadd.f32 %v4174, %v4599
        %v4601 = vpop.f32.mrb[0].mxu0
        %v4602 = vadd.f32 %v4178, %v4601
        %4603 = vmatprep.mubr.bf16.mxu0 %v4102
        %4604 = vmatmul.mubr.bf16.gmra.mrb[0].mxu0 %v4101
        %v4605 = vpop.f32.mrb[0].mxu0
        %v4606 = vadd.f32 %v4174, %v4605
        %v4607 = vpop.f32.mrb[0].mxu0
        %v4608 = vadd.f32 %v4178, %v4607
        %v4609 = vpop.f32.mrb[0].mxu0
        %v4610 = vadd.f32 %v4174, %v4609
        %v4611 = vpop.f32.mrb[0].mxu0
        %v4612 = vadd.f32 %v4178, %v4611
        %4613 = vmatprep.mubr.bf16.mxu0 %v4104
        %4614 = vmatmul.mubr.bf16.gmra.mrb[0].mxu0 %v4103
        %v4615 = vpop.f32.mrb[0].mxu0
        %v4616 = vadd.f32 %v4174, %v4615
        %v4617 = vpop.f32.mrb[0].mxu0
        %v4618 = vadd.f32 %v4178, %v4617
        %v4619 = vpop.f32.mrb[0].mxu0
        %v4620 = vadd.f32 %v4174, %v4619
        %v4621 = vpop.f32.mrb[0].mxu0
        %v4622 = vadd.f32 %v4178, %v4621
        %4623 = vdwg.mxu0
        %4624 = vmatprep.subr.bf16.mxu0 %v4386
        %4625 = vmatpush1.bf16.msra.mxu0 %v4385
        %4626 = vmatprep.subr.bf16.mxu0 %v4390
        %4627 = vmatpush1.bf16.msra.mxu0 %v4389
        %4628 = vmatprep.subr.bf16.mxu0 %v4394
        %4629 = vmatpush1.bf16.msra.mxu0 %v4393
        %4630 = vmatprep.subr.bf16.mxu0 %v4398
        %4631 = vmatpush1.bf16.msra.mxu0 %v4397
        %4632 = vmatprep.subr.bf16.mxu0 %v4402
        %4633 = vmatpush1.bf16.msra.mxu0 %v4401
        %4634 = vmatprep.subr.bf16.mxu0 %v4406
        %4635 = vmatpush1.bf16.msra.mxu0 %v4405
        %4636 = vmatprep.subr.bf16.mxu0 %v4410
        %4637 = vmatpush1.bf16.msra.mxu0 %v4409
        %4638 = vmatprep.subr.bf16.mxu0 %v4414
        %4639 = vmatpush1.bf16.msra.mxu0 %v4413
        %4640 = vmatprep.subr.bf16.mxu0 %v4418
        %4641 = vmatpush1.bf16.msra.mxu0 %v4417
        %4642 = vmatprep.subr.bf16.mxu0 %v4422
        %4643 = vmatpush1.bf16.msra.mxu0 %v4421
        %4644 = vmatprep.subr.bf16.mxu0 %v4426
        %4645 = vmatpush1.bf16.msra.mxu0 %v4425
        %4646 = vmatprep.subr.bf16.mxu0 %v4430
        %4647 = vmatpush1.bf16.msra.mxu0 %v4429
        %4648 = vmatprep.subr.bf16.mxu0 %v4434
        %4649 = vmatpush1.bf16.msra.mxu0 %v4433
        %4650 = vmatprep.subr.bf16.mxu0 %v4438
        %4651 = vmatpush1.bf16.msra.mxu0 %v4437
        %4652 = vmatprep.subr.bf16.mxu0 %v4442
        %4653 = vmatpush1.bf16.msra.mxu0 %v4441
        %4654 = vmatprep.subr.bf16.mxu0 %v4446
        %4655 = vmatpush1.bf16.msra.mxu0 %v4445
        %4656 = vmatprep.mubr.bf16.mxu0 %v4090
        %4657 = vmatmul.mubr.bf16.gmra.mrb[0].mxu0 %v4089
        %v4658 = vpop.f32.mrb[0].mxu0
        %v4659 = vadd.f32 %v4182, %v4658
        %v4660 = vpop.f32.mrb[0].mxu0
        %v4661 = vadd.f32 %v4186, %v4660
        %v4662 = vpop.f32.mrb[0].mxu0
        %v4663 = vadd.f32 %v4182, %v4662
        %v4664 = vpop.f32.mrb[0].mxu0
        %v4665 = vadd.f32 %v4186, %v4664
        %4666 = vmatprep.mubr.bf16.mxu0 %v4092
        %4667 = vmatmul.mubr.bf16.gmra.mrb[0].mxu0 %v4091
        %v4668 = vpop.f32.mrb[0].mxu0
        %v4669 = vadd.f32 %v4182, %v4668
        %v4670 = vpop.f32.mrb[0].mxu0
        %v4671 = vadd.f32 %v4186, %v4670
        %v4672 = vpop.f32.mrb[0].mxu0
        %v4673 = vadd.f32 %v4182, %v4672
        %v4674 = vpop.f32.mrb[0].mxu0
        %v4675 = vadd.f32 %v4186, %v4674
        %4676 = vmatprep.mubr.bf16.mxu0 %v4094
        %4677 = vmatmul.mubr.bf16.gmra.mrb[0].mxu0 %v4093
        %v4678 = vpop.f32.mrb[0].mxu0
        %v4679 = vadd.f32 %v4182, %v4678
        %v4680 = vpop.f32.mrb[0].mxu0
        %v4681 = vadd.f32 %v4186, %v4680
        %v4682 = vpop.f32.mrb[0].mxu0
        %v4683 = vadd.f32 %v4182, %v4682
        %v4684 = vpop.f32.mrb[0].mxu0
        %v4685 = vadd.f32 %v4186, %v4684
        %4686 = vmatprep.mubr.bf16.mxu0 %v4096
        %4687 = vmatmul.mubr.bf16.gmra.mrb[0].mxu0 %v4095
        %v4688 = vpop.f32.mrb[0].mxu0
        %v4689 = vadd.f32 %v4182, %v4688
        %v4690 = vpop.f32.mrb[0].mxu0
        %v4691 = vadd.f32 %v4186, %v4690
        %v4692 = vpop.f32.mrb[0].mxu0
        %v4693 = vadd.f32 %v4182, %v4692
        %v4694 = vpop.f32.mrb[0].mxu0
        %v4695 = vadd.f32 %v4186, %v4694
        %4696 = vmatprep.mubr.bf16.mxu0 %v4098
        %4697 = vmatmul.mubr.bf16.gmra.mrb[0].mxu0 %v4097
        %v4698 = vpop.f32.mrb[0].mxu0
        %v4699 = vadd.f32 %v4182, %v4698
        %v4700 = vpop.f32.mrb[0].mxu0
        %v4701 = vadd.f32 %v4186, %v4700
        %v4702 = vpop.f32.mrb[0].mxu0
        %v4703 = vadd.f32 %v4182, %v4702
        %v4704 = vpop.f32.mrb[0].mxu0
        %v4705 = vadd.f32 %v4186, %v4704
        %4706 = vmatprep.mubr.bf16.mxu0 %v4100
        %4707 = vmatmul.mubr.bf16.gmra.mrb[0].mxu0 %v4099
        %v4708 = vpop.f32.mrb[0].mxu0
        %v4709 = vadd.f32 %v4182, %v4708
        %v4710 = vpop.f32.mrb[0].mxu0
        %v4711 = vadd.f32 %v4186, %v4710
        %v4712 = vpop.f32.mrb[0].mxu0
        %v4713 = vadd.f32 %v4182, %v4712
        %v4714 = vpop.f32.mrb[0].mxu0
        %v4715 = vadd.f32 %v4186, %v4714
        %4716 = vmatprep.mubr.bf16.mxu0 %v4102
        %4717 = vmatmul.mubr.bf16.gmra.mrb[0].mxu0 %v4101
        %v4718 = vpop.f32.mrb[0].mxu0
        %v4719 = vadd.f32 %v4182, %v4718
        %v4720 = vpop.f32.mrb[0].mxu0
        %v4721 = vadd.f32 %v4186, %v4720
        %v4722 = vpop.f32.mrb[0].mxu0
        %v4723 = vadd.f32 %v4182, %v4722
        %v4724 = vpop.f32.mrb[0].mxu0
        %v4725 = vadd.f32 %v4186, %v4724
        %4726 = vmatprep.mubr.bf16.mxu0 %v4104
        %4727 = vmatmul.mubr.bf16.gmra.mrb[0].mxu0 %v4103
        %v4728 = vpop.f32.mrb[0].mxu0
        %v4729 = vadd.f32 %v4182, %v4728
        %v4730 = vpop.f32.mrb[0].mxu0
        %v4731 = vadd.f32 %v4186, %v4730
        %v4732 = vpop.f32.mrb[0].mxu0
        %v4733 = vadd.f32 %v4182, %v4732
        %v4734 = vpop.f32.mrb[0].mxu0
        %v4735 = vadd.f32 %v4186, %v4734
        %4736 = vdwg.mxu0
        %v4737 = vmax.f32 %v4546, 0.0
        %v4738 = vmax.f32 %v4548, 0.0
        %v4739 = vmax.f32 %v4659, 0.0
        %v4740 = vmax.f32 %v4661, 0.0
        %v4741 = vmax.f32 %v4550, 0.0
        %v4742 = vmax.f32 %v4552, 0.0
        %v4743 = vmax.f32 %v4663, 0.0
        %v4744 = vmax.f32 %v4665, 0.0
        %v4745 = vmax.f32 %v4556, 0.0
        %v4746 = vmax.f32 %v4558, 0.0
        %v4747 = vmax.f32 %v4669, 0.0
        %v4748 = vmax.f32 %v4671, 0.0
        %v4749 = vmax.f32 %v4560, 0.0
        %v4750 = vmax.f32 %v4562, 0.0
        %v4751 = vmax.f32 %v4673, 0.0
        %v4752 = vmax.f32 %v4675, 0.0
        %v4753 = vmax.f32 %v4566, 0.0
        %v4754 = vmax.f32 %v4568, 0.0
        %v4755 = vmax.f32 %v4679, 0.0
        %v4756 = vmax.f32 %v4681, 0.0
        %v4757 = vmax.f32 %v4570, 0.0
        %v4758 = vmax.f32 %v4572, 0.0
        %v4759 = vmax.f32 %v4683, 0.0
        %v4760 = vmax.f32 %v4685, 0.0
        %v4761 = vmax.f32 %v4576, 0.0
        %v4762 = vmax.f32 %v4578, 0.0
        %v4763 = vmax.f32 %v4689, 0.0
        %v4764 = vmax.f32 %v4691, 0.0
        %v4765 = vmax.f32 %v4580, 0.0
        %v4766 = vmax.f32 %v4582, 0.0
        %v4767 = vmax.f32 %v4693, 0.0
        %v4768 = vmax.f32 %v4695, 0.0
        %v4769 = vmax.f32 %v4586, 0.0
        %v4770 = vmax.f32 %v4588, 0.0
        %v4771 = vmax.f32 %v4699, 0.0
        %v4772 = vmax.f32 %v4701, 0.0
        %v4773 = vmax.f32 %v4590, 0.0
        %v4774 = vmax.f32 %v4592, 0.0
        %v4775 = vmax.f32 %v4703, 0.0
        %v4776 = vmax.f32 %v4705, 0.0
        %v4777 = vmax.f32 %v4596, 0.0
        %v4778 = vmax.f32 %v4598, 0.0
        %v4779 = vmax.f32 %v4709, 0.0
        %v4780 = vmax.f32 %v4711, 0.0
        %v4781 = vmax.f32 %v4600, 0.0
        %v4782 = vmax.f32 %v4602, 0.0
        %v4783 = vmax.f32 %v4713, 0.0
        %v4784 = vmax.f32 %v4715, 0.0
        %v4785 = vmax.f32 %v4606, 0.0
        %v4786 = vmax.f32 %v4608, 0.0
        %v4787 = vmax.f32 %v4719, 0.0
        %v4788 = vmax.f32 %v4721, 0.0
        %v4789 = vmax.f32 %v4610, 0.0
        %v4790 = vmax.f32 %v4612, 0.0
        %v4791 = vmax.f32 %v4723, 0.0
        %v4792 = vmax.f32 %v4725, 0.0
        %v4793 = vmax.f32 %v4616, 0.0
        %v4794 = vmax.f32 %v4618, 0.0
        %v4795 = vmax.f32 %v4729, 0.0
        %v4796 = vmax.f32 %v4731, 0.0
        %v4797 = vmax.f32 %v4620, 0.0
        %v4798 = vmax.f32 %v4622, 0.0
        %v4799 = vmax.f32 %v4733, 0.0
        %v4800 = vmax.f32 %v4735, 0.0
        %v4801 = vpack.c.bf16 %v4741, %v4737
        %v4802 = vpack.c.bf16 %v4742, %v4738
        %v4803 = vpack.c.bf16 %v4743, %v4739
        %v4804 = vpack.c.bf16 %v4744, %v4740
        %v4805 = vpack.c.bf16 %v4749, %v4745
        %v4806 = vpack.c.bf16 %v4750, %v4746
        %v4807 = vpack.c.bf16 %v4751, %v4747
        %v4808 = vpack.c.bf16 %v4752, %v4748
        %v4809 = vpack.c.bf16 %v4757, %v4753
        %v4810 = vpack.c.bf16 %v4758, %v4754
        %v4811 = vpack.c.bf16 %v4759, %v4755
        %v4812 = vpack.c.bf16 %v4760, %v4756
        %v4813 = vpack.c.bf16 %v4765, %v4761
        %v4814 = vpack.c.bf16 %v4766, %v4762
        %v4815 = vpack.c.bf16 %v4767, %v4763
        %v4816 = vpack.c.bf16 %v4768, %v4764
        %v4817 = vpack.c.bf16 %v4773, %v4769
        %v4818 = vpack.c.bf16 %v4774, %v4770
        %v4819 = vpack.c.bf16 %v4775, %v4771
        %v4820 = vpack.c.bf16 %v4776, %v4772
        %v4821 = vpack.c.bf16 %v4781, %v4777
        %v4822 = vpack.c.bf16 %v4782, %v4778
        %v4823 = vpack.c.bf16 %v4783, %v4779
        %v4824 = vpack.c.bf16 %v4784, %v4780
        %v4825 = vpack.c.bf16 %v4789, %v4785
        %v4826 = vpack.c.bf16 %v4790, %v4786
        %v4827 = vpack.c.bf16 %v4791, %v4787
        %v4828 = vpack.c.bf16 %v4792, %v4788
        %v4829 = vpack.c.bf16 %v4797, %v4793
        %v4830 = vpack.c.bf16 %v4798, %v4794
        %v4831 = vpack.c.bf16 %v4799, %v4795
        %v4832 = vpack.c.bf16 %v4800, %v4796
        %v4833 = vld [vmem:[#allocation15] sm:$0xff]
        %v4834 = vld [vmem:[#allocation15 + $0x8] sm:$0xff]
        %v4835 = vld [vmem:[#allocation15 + $0x10] sm:$0xff]
        %v4836 = vld [vmem:[#allocation15 + $0x18] sm:$0xff]
        %v4837 = vld [vmem:[#allocation15 + $0x20] sm:$0xff]
        %v4838 = vld [vmem:[#allocation15 + $0x28] sm:$0xff]
        %v4839 = vld [vmem:[#allocation15 + $0x30] sm:$0xff]
        %v4840 = vld [vmem:[#allocation15 + $0x38] sm:$0xff]
        %v4841 = vld [vmem:[#allocation15 + $0x40] sm:$0xff]
        %v4842 = vld [vmem:[#allocation15 + $0x48] sm:$0xff]
        %v4843 = vld [vmem:[#allocation15 + $0x50] sm:$0xff]
        %v4844 = vld [vmem:[#allocation15 + $0x58] sm:$0xff]
        %v4845 = vld [vmem:[#allocation15 + $0x60] sm:$0xff]
        %v4846 = vld [vmem:[#allocation15 + $0x68] sm:$0xff]
        %v4847 = vld [vmem:[#allocation15 + $0x70] sm:$0xff]
        %v4848 = vld [vmem:[#allocation15 + $0x78] sm:$0xff]
        %v4849 = vld [vmem:[#allocation15 + $0x80] sm:$0xff]
        %v4850 = vld [vmem:[#allocation15 + $0x88] sm:$0xff]
        %v4851 = vld [vmem:[#allocation15 + $0x90] sm:$0xff]
        %v4852 = vld [vmem:[#allocation15 + $0x98] sm:$0xff]
        %v4853 = vld [vmem:[#allocation15 + $0xa0] sm:$0xff]
        %v4854 = vld [vmem:[#allocation15 + $0xa8] sm:$0xff]
        %v4855 = vld [vmem:[#allocation15 + $0xb0] sm:$0xff]
        %v4856 = vld [vmem:[#allocation15 + $0xb8] sm:$0xff]
        %v4857 = vld [vmem:[#allocation15 + $0xc0] sm:$0xff]
        %v4858 = vld [vmem:[#allocation15 + $0xc8] sm:$0xff]
        %v4859 = vld [vmem:[#allocation15 + $0xd0] sm:$0xff]
        %v4860 = vld [vmem:[#allocation15 + $0xd8] sm:$0xff]
        %v4861 = vld [vmem:[#allocation15 + $0xe0] sm:$0xff]
        %v4862 = vld [vmem:[#allocation15 + $0xe8] sm:$0xff]
        %v4863 = vld [vmem:[#allocation15 + $0xf0] sm:$0xff]
        %v4864 = vld [vmem:[#allocation15 + $0xf8] sm:$0xff]
        %v4865 = vld [vmem:[#allocation15 + $0x100] sm:$0xff]
        %v4866 = vld [vmem:[#allocation15 + $0x108] sm:$0xff]
        %v4867 = vld [vmem:[#allocation15 + $0x110] sm:$0xff]
        %v4868 = vld [vmem:[#allocation15 + $0x118] sm:$0xff]
        %v4869 = vld [vmem:[#allocation15 + $0x120] sm:$0xff]
        %v4870 = vld [vmem:[#allocation15 + $0x128] sm:$0xff]
        %v4871 = vld [vmem:[#allocation15 + $0x130] sm:$0xff]
        %v4872 = vld [vmem:[#allocation15 + $0x138] sm:$0xff]
        %v4873 = vld [vmem:[#allocation15 + $0x140] sm:$0xff]
        %v4874 = vld [vmem:[#allocation15 + $0x148] sm:$0xff]
        %v4875 = vld [vmem:[#allocation15 + $0x150] sm:$0xff]
        %v4876 = vld [vmem:[#allocation15 + $0x158] sm:$0xff]
        %v4877 = vld [vmem:[#allocation15 + $0x160] sm:$0xff]
        %v4878 = vld [vmem:[#allocation15 + $0x168] sm:$0xff]
        %v4879 = vld [vmem:[#allocation15 + $0x170] sm:$0xff]
        %v4880 = vld [vmem:[#allocation15 + $0x178] sm:$0xff]
        %v4881 = vld [vmem:[#allocation15 + $0x180] sm:$0xff]
        %v4882 = vld [vmem:[#allocation15 + $0x188] sm:$0xff]
        %v4883 = vld [vmem:[#allocation15 + $0x190] sm:$0xff]
        %v4884 = vld [vmem:[#allocation15 + $0x198] sm:$0xff]
        %v4885 = vld [vmem:[#allocation15 + $0x1a0] sm:$0xff]
        %v4886 = vld [vmem:[#allocation15 + $0x1a8] sm:$0xff]
        %v4887 = vld [vmem:[#allocation15 + $0x1b0] sm:$0xff]
        %v4888 = vld [vmem:[#allocation15 + $0x1b8] sm:$0xff]
        %v4889 = vld [vmem:[#allocation15 + $0x1c0] sm:$0xff]
        %v4890 = vld [vmem:[#allocation15 + $0x1c8] sm:$0xff]
        %v4891 = vld [vmem:[#allocation15 + $0x1d0] sm:$0xff]
        %v4892 = vld [vmem:[#allocation15 + $0x1d8] sm:$0xff]
        %v4893 = vld [vmem:[#allocation15 + $0x1e0] sm:$0xff]
        %v4894 = vld [vmem:[#allocation15 + $0x1e8] sm:$0xff]
        %v4895 = vld [vmem:[#allocation15 + $0x1f0] sm:$0xff]
        %v4896 = vld [vmem:[#allocation15 + $0x1f8] sm:$0xff]
        %v4897 = vld [vmem:[%s14] sm:$0x3]
        %v4899 = vlaneseq
        %v4900 = vshrl.u32 %v4899, 7
        %v4901 = vsub.s32 0, %v4900
        %v4902 = vrot.slane %v4897, %v4901
        %v4903 = vlaneseq
        %v4904 = vshrl.u32 %v4903, 7
        %v4905 = vsub.s32 1, %v4904
        %v4906 = vrot.slane %v4897, %v4905
        %v4973 = vunpack.c.l.b16 %v4833
        %v4974 = vunpack.c.h.b16 %v4833
        %v4975 = vunpack.c.l.b16 %v4834
        %v4976 = vunpack.c.h.b16 %v4834
        %v4977 = vunpack.c.l.b16 %v4835
        %v4978 = vunpack.c.h.b16 %v4835
        %v4979 = vunpack.c.l.b16 %v4836
        %v4980 = vunpack.c.h.b16 %v4836
        %v4981 = vunpack.c.l.b16 %v4837
        %v4982 = vunpack.c.h.b16 %v4837
        %v4983 = vunpack.c.l.b16 %v4838
        %v4984 = vunpack.c.h.b16 %v4838
        %v4985 = vunpack.c.l.b16 %v4839
        %v4986 = vunpack.c.h.b16 %v4839
        %v4987 = vunpack.c.l.b16 %v4840
        %v4988 = vunpack.c.h.b16 %v4840
        %v4989 = vunpack.c.l.b16 %v4841
        %v4990 = vunpack.c.h.b16 %v4841
        %v4991 = vunpack.c.l.b16 %v4842
        %v4992 = vunpack.c.h.b16 %v4842
        %v4993 = vunpack.c.l.b16 %v4843
        %v4994 = vunpack.c.h.b16 %v4843
        %v4995 = vunpack.c.l.b16 %v4844
        %v4996 = vunpack.c.h.b16 %v4844
        %v4997 = vunpack.c.l.b16 %v4845
        %v4998 = vunpack.c.h.b16 %v4845
        %v4999 = vunpack.c.l.b16 %v4846
        %v5000 = vunpack.c.h.b16 %v4846
        %v5001 = vunpack.c.l.b16 %v4847
        %v5002 = vunpack.c.h.b16 %v4847
        %v5003 = vunpack.c.l.b16 %v4848
        %v5004 = vunpack.c.h.b16 %v4848
        %v5005 = vunpack.c.l.b16 %v4849
        %v5006 = vunpack.c.h.b16 %v4849
        %v5007 = vunpack.c.l.b16 %v4850
        %v5008 = vunpack.c.h.b16 %v4850
        %v5009 = vunpack.c.l.b16 %v4851
        %v5010 = vunpack.c.h.b16 %v4851
        %v5011 = vunpack.c.l.b16 %v4852
        %v5012 = vunpack.c.h.b16 %v4852
        %v5013 = vunpack.c.l.b16 %v4853
        %v5014 = vunpack.c.h.b16 %v4853
        %v5015 = vunpack.c.l.b16 %v4854
        %v5016 = vunpack.c.h.b16 %v4854
        %v5017 = vunpack.c.l.b16 %v4855
        %v5018 = vunpack.c.h.b16 %v4855
        %v5019 = vunpack.c.l.b16 %v4856
        %v5020 = vunpack.c.h.b16 %v4856
        %v5021 = vunpack.c.l.b16 %v4857
        %v5022 = vunpack.c.h.b16 %v4857
        %v5023 = vunpack.c.l.b16 %v4858
        %v5024 = vunpack.c.h.b16 %v4858
        %v5025 = vunpack.c.l.b16 %v4859
        %v5026 = vunpack.c.h.b16 %v4859
        %v5027 = vunpack.c.l.b16 %v4860
        %v5028 = vunpack.c.h.b16 %v4860
        %v5029 = vunpack.c.l.b16 %v4861
        %v5030 = vunpack.c.h.b16 %v4861
        %v5031 = vunpack.c.l.b16 %v4862
        %v5032 = vunpack.c.h.b16 %v4862
        %v5033 = vunpack.c.l.b16 %v4863
        %v5034 = vunpack.c.h.b16 %v4863
        %v5035 = vunpack.c.l.b16 %v4864
        %v5036 = vunpack.c.h.b16 %v4864
        %v5037 = vunpack.c.l.b16 %v4865
        %v5038 = vunpack.c.h.b16 %v4865
        %v5039 = vunpack.c.l.b16 %v4866
        %v5040 = vunpack.c.h.b16 %v4866
        %v5041 = vunpack.c.l.b16 %v4867
        %v5042 = vunpack.c.h.b16 %v4867
        %v5043 = vunpack.c.l.b16 %v4868
        %v5044 = vunpack.c.h.b16 %v4868
        %v5045 = vunpack.c.l.b16 %v4869
        %v5046 = vunpack.c.h.b16 %v4869
        %v5047 = vunpack.c.l.b16 %v4870
        %v5048 = vunpack.c.h.b16 %v4870
        %v5049 = vunpack.c.l.b16 %v4871
        %v5050 = vunpack.c.h.b16 %v4871
        %v5051 = vunpack.c.l.b16 %v4872
        %v5052 = vunpack.c.h.b16 %v4872
        %v5053 = vunpack.c.l.b16 %v4873
        %v5054 = vunpack.c.h.b16 %v4873
        %v5055 = vunpack.c.l.b16 %v4874
        %v5056 = vunpack.c.h.b16 %v4874
        %v5057 = vunpack.c.l.b16 %v4875
        %v5058 = vunpack.c.h.b16 %v4875
        %v5059 = vunpack.c.l.b16 %v4876
        %v5060 = vunpack.c.h.b16 %v4876
        %v5061 = vunpack.c.l.b16 %v4877
        %v5062 = vunpack.c.h.b16 %v4877
        %v5063 = vunpack.c.l.b16 %v4878
        %v5064 = vunpack.c.h.b16 %v4878
        %v5065 = vunpack.c.l.b16 %v4879
        %v5066 = vunpack.c.h.b16 %v4879
        %v5067 = vunpack.c.l.b16 %v4880
        %v5068 = vunpack.c.h.b16 %v4880
        %v5069 = vunpack.c.l.b16 %v4881
        %v5070 = vunpack.c.h.b16 %v4881
        %v5071 = vunpack.c.l.b16 %v4882
        %v5072 = vunpack.c.h.b16 %v4882
        %v5073 = vunpack.c.l.b16 %v4883
        %v5074 = vunpack.c.h.b16 %v4883
        %v5075 = vunpack.c.l.b16 %v4884
        %v5076 = vunpack.c.h.b16 %v4884
        %v5077 = vunpack.c.l.b16 %v4885
        %v5078 = vunpack.c.h.b16 %v4885
        %v5079 = vunpack.c.l.b16 %v4886
        %v5080 = vunpack.c.h.b16 %v4886
        %v5081 = vunpack.c.l.b16 %v4887
        %v5082 = vunpack.c.h.b16 %v4887
        %v5083 = vunpack.c.l.b16 %v4888
        %v5084 = vunpack.c.h.b16 %v4888
        %v5085 = vunpack.c.l.b16 %v4889
        %v5086 = vunpack.c.h.b16 %v4889
        %v5087 = vunpack.c.l.b16 %v4890
        %v5088 = vunpack.c.h.b16 %v4890
        %v5089 = vunpack.c.l.b16 %v4891
        %v5090 = vunpack.c.h.b16 %v4891
        %v5091 = vunpack.c.l.b16 %v4892
        %v5092 = vunpack.c.h.b16 %v4892
        %v5093 = vunpack.c.l.b16 %v4893
        %v5094 = vunpack.c.h.b16 %v4893
        %v5095 = vunpack.c.l.b16 %v4894
        %v5096 = vunpack.c.h.b16 %v4894
        %v5097 = vunpack.c.l.b16 %v4895
        %v5098 = vunpack.c.h.b16 %v4895
        %v5099 = vunpack.c.l.b16 %v4896
        %v5100 = vunpack.c.h.b16 %v4896
        %v5101 = vpack.c.b16 %v4975, %v4973
        %v5102 = vpack.c.b16 %v4976, %v4974
        %v5103 = vpack.c.b16 %v4979, %v4977
        %v5104 = vpack.c.b16 %v4980, %v4978
        %v5105 = vpack.c.b16 %v4983, %v4981
        %v5106 = vpack.c.b16 %v4984, %v4982
        %v5107 = vpack.c.b16 %v4987, %v4985
        %v5108 = vpack.c.b16 %v4988, %v4986
        %v5109 = vpack.c.b16 %v4991, %v4989
        %v5110 = vpack.c.b16 %v4992, %v4990
        %v5111 = vpack.c.b16 %v4995, %v4993
        %v5112 = vpack.c.b16 %v4996, %v4994
        %v5113 = vpack.c.b16 %v4999, %v4997
        %v5114 = vpack.c.b16 %v5000, %v4998
        %v5115 = vpack.c.b16 %v5003, %v5001
        %v5116 = vpack.c.b16 %v5004, %v5002
        %v5117 = vpack.c.b16 %v5007, %v5005
        %v5118 = vpack.c.b16 %v5008, %v5006
        %v5119 = vpack.c.b16 %v5011, %v5009
        %v5120 = vpack.c.b16 %v5012, %v5010
        %v5121 = vpack.c.b16 %v5015, %v5013
        %v5122 = vpack.c.b16 %v5016, %v5014
        %v5123 = vpack.c.b16 %v5019, %v5017
        %v5124 = vpack.c.b16 %v5020, %v5018
        %v5125 = vpack.c.b16 %v5023, %v5021
        %v5126 = vpack.c.b16 %v5024, %v5022
        %v5127 = vpack.c.b16 %v5027, %v5025
        %v5128 = vpack.c.b16 %v5028, %v5026
        %v5129 = vpack.c.b16 %v5031, %v5029
        %v5130 = vpack.c.b16 %v5032, %v5030
        %v5131 = vpack.c.b16 %v5035, %v5033
        %v5132 = vpack.c.b16 %v5036, %v5034
        %v5133 = vpack.c.b16 %v5039, %v5037
        %v5134 = vpack.c.b16 %v5040, %v5038
        %v5135 = vpack.c.b16 %v5043, %v5041
        %v5136 = vpack.c.b16 %v5044, %v5042
        %v5137 = vpack.c.b16 %v5047, %v5045
        %v5138 = vpack.c.b16 %v5048, %v5046
        %v5139 = vpack.c.b16 %v5051, %v5049
        %v5140 = vpack.c.b16 %v5052, %v5050
        %v5141 = vpack.c.b16 %v5055, %v5053
        %v5142 = vpack.c.b16 %v5056, %v5054
        %v5143 = vpack.c.b16 %v5059, %v5057
        %v5144 = vpack.c.b16 %v5060, %v5058
        %v5145 = vpack.c.b16 %v5063, %v5061
        %v5146 = vpack.c.b16 %v5064, %v5062
        %v5147 = vpack.c.b16 %v5067, %v5065
        %v5148 = vpack.c.b16 %v5068, %v5066
        %v5149 = vpack.c.b16 %v5071, %v5069
        %v5150 = vpack.c.b16 %v5072, %v5070
        %v5151 = vpack.c.b16 %v5075, %v5073
        %v5152 = vpack.c.b16 %v5076, %v5074
        %v5153 = vpack.c.b16 %v5079, %v5077
        %v5154 = vpack.c.b16 %v5080, %v5078
        %v5155 = vpack.c.b16 %v5083, %v5081
        %v5156 = vpack.c.b16 %v5084, %v5082
        %v5157 = vpack.c.b16 %v5087, %v5085
        %v5158 = vpack.c.b16 %v5088, %v5086
        %v5159 = vpack.c.b16 %v5091, %v5089
        %v5160 = vpack.c.b16 %v5092, %v5090
        %v5161 = vpack.c.b16 %v5095, %v5093
        %v5162 = vpack.c.b16 %v5096, %v5094
        %v5163 = vpack.c.b16 %v5099, %v5097
        %v5164 = vpack.c.b16 %v5100, %v5098
        %5229 = vmatprep.subr.bf16.mxu0 %v5102
        %5230 = vmatpush1.bf16.msra.mxu0 %v5101
        %5231 = vmatprep.subr.bf16.mxu0 %v5104
        %5232 = vmatpush1.bf16.msra.mxu0 %v5103
        %5233 = vmatprep.subr.bf16.mxu0 %v5106
        %5234 = vmatpush1.bf16.msra.mxu0 %v5105
        %5235 = vmatprep.subr.bf16.mxu0 %v5108
        %5236 = vmatpush1.bf16.msra.mxu0 %v5107
        %5237 = vmatprep.subr.bf16.mxu0 %v5110
        %5238 = vmatpush1.bf16.msra.mxu0 %v5109
        %5239 = vmatprep.subr.bf16.mxu0 %v5112
        %5240 = vmatpush1.bf16.msra.mxu0 %v5111
        %5241 = vmatprep.subr.bf16.mxu0 %v5114
        %5242 = vmatpush1.bf16.msra.mxu0 %v5113
        %5243 = vmatprep.subr.bf16.mxu0 %v5116
        %5244 = vmatpush1.bf16.msra.mxu0 %v5115
        %5245 = vmatprep.subr.bf16.mxu0 %v5118
        %5246 = vmatpush1.bf16.msra.mxu0 %v5117
        %5247 = vmatprep.subr.bf16.mxu0 %v5120
        %5248 = vmatpush1.bf16.msra.mxu0 %v5119
        %5249 = vmatprep.subr.bf16.mxu0 %v5122
        %5250 = vmatpush1.bf16.msra.mxu0 %v5121
        %5251 = vmatprep.subr.bf16.mxu0 %v5124
        %5252 = vmatpush1.bf16.msra.mxu0 %v5123
        %5253 = vmatprep.subr.bf16.mxu0 %v5126
        %5254 = vmatpush1.bf16.msra.mxu0 %v5125
        %5255 = vmatprep.subr.bf16.mxu0 %v5128
        %5256 = vmatpush1.bf16.msra.mxu0 %v5127
        %5257 = vmatprep.subr.bf16.mxu0 %v5130
        %5258 = vmatpush1.bf16.msra.mxu0 %v5129
        %5259 = vmatprep.subr.bf16.mxu0 %v5132
        %5260 = vmatpush1.bf16.msra.mxu0 %v5131
        %5261 = vmatprep.mubr.bf16.mxu0 %v4802
        %5262 = vmatmul.mubr.bf16.gmra.mrb[0].mxu0 %v4801
        %v5263 = vpop.f32.mrb[0].mxu0
        %v5264 = vadd.f32 %v4902, %v5263
        %v5265 = vpop.f32.mrb[0].mxu0
        %v5266 = vadd.f32 %v4906, %v5265
        %v5267 = vpop.f32.mrb[0].mxu0
        %v5268 = vadd.f32 %v4902, %v5267
        %v5269 = vpop.f32.mrb[0].mxu0
        %v5270 = vadd.f32 %v4906, %v5269
        %5271 = vmatprep.mubr.bf16.mxu0 %v4806
        %5272 = vmatmul.mubr.bf16.gmra.mrb[0].mxu0 %v4805
        %v5273 = vpop.f32.mrb[0].mxu0
        %v5274 = vadd.f32 %v4902, %v5273
        %v5275 = vpop.f32.mrb[0].mxu0
        %v5276 = vadd.f32 %v4906, %v5275
        %v5277 = vpop.f32.mrb[0].mxu0
        %v5278 = vadd.f32 %v4902, %v5277
        %v5279 = vpop.f32.mrb[0].mxu0
        %v5280 = vadd.f32 %v4906, %v5279
        %5281 = vmatprep.mubr.bf16.mxu0 %v4810
        %5282 = vmatmul.mubr.bf16.gmra.mrb[0].mxu0 %v4809
        %v5283 = vpop.f32.mrb[0].mxu0
        %v5284 = vadd.f32 %v4902, %v5283
        %v5285 = vpop.f32.mrb[0].mxu0
        %v5286 = vadd.f32 %v4906, %v5285
        %v5287 = vpop.f32.mrb[0].mxu0
        %v5288 = vadd.f32 %v4902, %v5287
        %v5289 = vpop.f32.mrb[0].mxu0
        %v5290 = vadd.f32 %v4906, %v5289
        %5291 = vmatprep.mubr.bf16.mxu0 %v4814
        %5292 = vmatmul.mubr.bf16.gmra.mrb[0].mxu0 %v4813
        %v5293 = vpop.f32.mrb[0].mxu0
        %v5294 = vadd.f32 %v4902, %v5293
        %v5295 = vpop.f32.mrb[0].mxu0
        %v5296 = vadd.f32 %v4906, %v5295
        %v5297 = vpop.f32.mrb[0].mxu0
        %v5298 = vadd.f32 %v4902, %v5297
        %v5299 = vpop.f32.mrb[0].mxu0
        %v5300 = vadd.f32 %v4906, %v5299
        %5301 = vmatprep.mubr.bf16.mxu0 %v4818
        %5302 = vmatmul.mubr.bf16.gmra.mrb[0].mxu0 %v4817
        %v5303 = vpop.f32.mrb[0].mxu0
        %v5304 = vadd.f32 %v4902, %v5303
        %v5305 = vpop.f32.mrb[0].mxu0
        %v5306 = vadd.f32 %v4906, %v5305
        %v5307 = vpop.f32.mrb[0].mxu0
        %v5308 = vadd.f32 %v4902, %v5307
        %v5309 = vpop.f32.mrb[0].mxu0
        %v5310 = vadd.f32 %v4906, %v5309
        %5311 = vmatprep.mubr.bf16.mxu0 %v4822
        %5312 = vmatmul.mubr.bf16.gmra.mrb[0].mxu0 %v4821
        %v5313 = vpop.f32.mrb[0].mxu0
        %v5314 = vadd.f32 %v4902, %v5313
        %v5315 = vpop.f32.mrb[0].mxu0
        %v5316 = vadd.f32 %v4906, %v5315
        %v5317 = vpop.f32.mrb[0].mxu0
        %v5318 = vadd.f32 %v4902, %v5317
        %v5319 = vpop.f32.mrb[0].mxu0
        %v5320 = vadd.f32 %v4906, %v5319
        %5321 = vmatprep.mubr.bf16.mxu0 %v4826
        %5322 = vmatmul.mubr.bf16.gmra.mrb[0].mxu0 %v4825
        %v5323 = vpop.f32.mrb[0].mxu0
        %v5324 = vadd.f32 %v4902, %v5323
        %v5325 = vpop.f32.mrb[0].mxu0
        %v5326 = vadd.f32 %v4906, %v5325
        %v5327 = vpop.f32.mrb[0].mxu0
        %v5328 = vadd.f32 %v4902, %v5327
        %v5329 = vpop.f32.mrb[0].mxu0
        %v5330 = vadd.f32 %v4906, %v5329
        %5331 = vmatprep.mubr.bf16.mxu0 %v4830
        %5332 = vmatmul.mubr.bf16.gmra.mrb[0].mxu0 %v4829
        %v5333 = vpop.f32.mrb[0].mxu0
        %v5334 = vadd.f32 %v4902, %v5333
        %v5335 = vpop.f32.mrb[0].mxu0
        %v5336 = vadd.f32 %v4906, %v5335
        %v5337 = vpop.f32.mrb[0].mxu0
        %v5338 = vadd.f32 %v4902, %v5337
        %v5339 = vpop.f32.mrb[0].mxu0
        %v5340 = vadd.f32 %v4906, %v5339
        %5341 = vdwg.mxu0
        %5342 = vmatprep.subr.bf16.mxu0 %v5134
        %5343 = vmatpush1.bf16.msra.mxu0 %v5133
        %5344 = vmatprep.subr.bf16.mxu0 %v5136
        %5345 = vmatpush1.bf16.msra.mxu0 %v5135
        %5346 = vmatprep.subr.bf16.mxu0 %v5138
        %5347 = vmatpush1.bf16.msra.mxu0 %v5137
        %5348 = vmatprep.subr.bf16.mxu0 %v5140
        %5349 = vmatpush1.bf16.msra.mxu0 %v5139
        %5350 = vmatprep.subr.bf16.mxu0 %v5142
        %5351 = vmatpush1.bf16.msra.mxu0 %v5141
        %5352 = vmatprep.subr.bf16.mxu0 %v5144
        %5353 = vmatpush1.bf16.msra.mxu0 %v5143
        %5354 = vmatprep.subr.bf16.mxu0 %v5146
        %5355 = vmatpush1.bf16.msra.mxu0 %v5145
        %5356 = vmatprep.subr.bf16.mxu0 %v5148
        %5357 = vmatpush1.bf16.msra.mxu0 %v5147
        %5358 = vmatprep.subr.bf16.mxu0 %v5150
        %5359 = vmatpush1.bf16.msra.mxu0 %v5149
        %5360 = vmatprep.subr.bf16.mxu0 %v5152
        %5361 = vmatpush1.bf16.msra.mxu0 %v5151
        %5362 = vmatprep.subr.bf16.mxu0 %v5154
        %5363 = vmatpush1.bf16.msra.mxu0 %v5153
        %5364 = vmatprep.subr.bf16.mxu0 %v5156
        %5365 = vmatpush1.bf16.msra.mxu0 %v5155
        %5366 = vmatprep.subr.bf16.mxu0 %v5158
        %5367 = vmatpush1.bf16.msra.mxu0 %v5157
        %5368 = vmatprep.subr.bf16.mxu0 %v5160
        %5369 = vmatpush1.bf16.msra.mxu0 %v5159
        %5370 = vmatprep.subr.bf16.mxu0 %v5162
        %5371 = vmatpush1.bf16.msra.mxu0 %v5161
        %5372 = vmatprep.subr.bf16.mxu0 %v5164
        %5373 = vmatpush1.bf16.msra.mxu0 %v5163
        %5374 = vmatprep.mubr.bf16.mxu0 %v4804
        %5375 = vmatmul.mubr.bf16.gmra.mrb[0].mxu0 %v4803
        %v5376 = vpop.f32.mrb[0].mxu0
        %v5377 = vadd.f32 %v5264, %v5376
        %v5378 = vpop.f32.mrb[0].mxu0
        %v5379 = vadd.f32 %v5266, %v5378
        %v5380 = vpop.f32.mrb[0].mxu0
        %v5381 = vadd.f32 %v5268, %v5380
        %v5382 = vpop.f32.mrb[0].mxu0
        %v5383 = vadd.f32 %v5270, %v5382
        %5384 = vmatprep.mubr.bf16.mxu0 %v4808
        %5385 = vmatmul.mubr.bf16.gmra.mrb[0].mxu0 %v4807
        %v5386 = vpop.f32.mrb[0].mxu0
        %v5387 = vadd.f32 %v5274, %v5386
        %v5388 = vpop.f32.mrb[0].mxu0
        %v5389 = vadd.f32 %v5276, %v5388
        %v5390 = vpop.f32.mrb[0].mxu0
        %v5391 = vadd.f32 %v5278, %v5390
        %v5392 = vpop.f32.mrb[0].mxu0
        %v5393 = vadd.f32 %v5280, %v5392
        %5394 = vmatprep.mubr.bf16.mxu0 %v4812
        %5395 = vmatmul.mubr.bf16.gmra.mrb[0].mxu0 %v4811
        %v5396 = vpop.f32.mrb[0].mxu0
        %v5397 = vadd.f32 %v5284, %v5396
        %v5398 = vpop.f32.mrb[0].mxu0
        %v5399 = vadd.f32 %v5286, %v5398
        %v5400 = vpop.f32.mrb[0].mxu0
        %v5401 = vadd.f32 %v5288, %v5400
        %v5402 = vpop.f32.mrb[0].mxu0
        %v5403 = vadd.f32 %v5290, %v5402
        %5404 = vmatprep.mubr.bf16.mxu0 %v4816
        %5405 = vmatmul.mubr.bf16.gmra.mrb[0].mxu0 %v4815
        %v5406 = vpop.f32.mrb[0].mxu0
        %v5407 = vadd.f32 %v5294, %v5406
        %v5408 = vpop.f32.mrb[0].mxu0
        %v5409 = vadd.f32 %v5296, %v5408
        %v5410 = vpop.f32.mrb[0].mxu0
        %v5411 = vadd.f32 %v5298, %v5410
        %v5412 = vpop.f32.mrb[0].mxu0
        %v5413 = vadd.f32 %v5300, %v5412
        %5414 = vmatprep.mubr.bf16.mxu0 %v4820
        %5415 = vmatmul.mubr.bf16.gmra.mrb[0].mxu0 %v4819
        %v5416 = vpop.f32.mrb[0].mxu0
        %v5417 = vadd.f32 %v5304, %v5416
        %v5418 = vpop.f32.mrb[0].mxu0
        %v5419 = vadd.f32 %v5306, %v5418
        %v5420 = vpop.f32.mrb[0].mxu0
        %v5421 = vadd.f32 %v5308, %v5420
        %v5422 = vpop.f32.mrb[0].mxu0
        %v5423 = vadd.f32 %v5310, %v5422
        %5424 = vmatprep.mubr.bf16.mxu0 %v4824
        %5425 = vmatmul.mubr.bf16.gmra.mrb[0].mxu0 %v4823
        %v5426 = vpop.f32.mrb[0].mxu0
        %v5427 = vadd.f32 %v5314, %v5426
        %v5428 = vpop.f32.mrb[0].mxu0
        %v5429 = vadd.f32 %v5316, %v5428
        %v5430 = vpop.f32.mrb[0].mxu0
        %v5431 = vadd.f32 %v5318, %v5430
        %v5432 = vpop.f32.mrb[0].mxu0
        %v5433 = vadd.f32 %v5320, %v5432
        %5434 = vmatprep.mubr.bf16.mxu0 %v4828
        %5435 = vmatmul.mubr.bf16.gmra.mrb[0].mxu0 %v4827
        %v5436 = vpop.f32.mrb[0].mxu0
        %v5437 = vadd.f32 %v5324, %v5436
        %v5438 = vpop.f32.mrb[0].mxu0
        %v5439 = vadd.f32 %v5326, %v5438
        %v5440 = vpop.f32.mrb[0].mxu0
        %v5441 = vadd.f32 %v5328, %v5440
        %v5442 = vpop.f32.mrb[0].mxu0
        %v5443 = vadd.f32 %v5330, %v5442
        %5444 = vmatprep.mubr.bf16.mxu0 %v4832
        %5445 = vmatmul.mubr.bf16.gmra.mrb[0].mxu0 %v4831
        %v5446 = vpop.f32.mrb[0].mxu0
        %v5447 = vadd.f32 %v5334, %v5446
        %v5448 = vpop.f32.mrb[0].mxu0
        %v5449 = vadd.f32 %v5336, %v5448
        %v5450 = vpop.f32.mrb[0].mxu0
        %v5451 = vadd.f32 %v5338, %v5450
        %v5452 = vpop.f32.mrb[0].mxu0
        %v5453 = vadd.f32 %v5340, %v5452
        %5454 = vdwg.mxu0
        %v5455 = vadd.f32 %v5377, %v4057
        %v5456 = vadd.f32 %v5379, %v4058
        %v5457 = vadd.f32 %v5381, %v4059
        %v5458 = vadd.f32 %v5383, %v4060
        %v5459 = vadd.f32 %v5387, %v4061
        %v5460 = vadd.f32 %v5389, %v4062
        %v5461 = vadd.f32 %v5391, %v4063
        %v5462 = vadd.f32 %v5393, %v4064
        %v5463 = vadd.f32 %v5397, %v4065
        %v5464 = vadd.f32 %v5399, %v4066
        %v5465 = vadd.f32 %v5401, %v4067
        %v5466 = vadd.f32 %v5403, %v4068
        %v5467 = vadd.f32 %v5407, %v4069
        %v5468 = vadd.f32 %v5409, %v4070
        %v5469 = vadd.f32 %v5411, %v4071
        %v5470 = vadd.f32 %v5413, %v4072
        %v5471 = vadd.f32 %v5417, %v4073
        %v5472 = vadd.f32 %v5419, %v4074
        %v5473 = vadd.f32 %v5421, %v4075
        %v5474 = vadd.f32 %v5423, %v4076
        %v5475 = vadd.f32 %v5427, %v4077
        %v5476 = vadd.f32 %v5429, %v4078
        %v5477 = vadd.f32 %v5431, %v4079
        %v5478 = vadd.f32 %v5433, %v4080
        %v5479 = vadd.f32 %v5437, %v4081
        %v5480 = vadd.f32 %v5439, %v4082
        %v5481 = vadd.f32 %v5441, %v4083
        %v5482 = vadd.f32 %v5443, %v4084
        %v5483 = vadd.f32 %v5447, %v4085
        %v5484 = vadd.f32 %v5449, %v4086
        %v5485 = vadd.f32 %v5451, %v4087
        %v5486 = vadd.f32 %v5453, %v4088
        %v5487 = vld [vmem:[%s15] sm:$0x3]
        %v5488 = vld [vmem:[%s16] sm:$0x3]
        %v5489 = vadd.f32 %v5455, %v5456
        %5490 = vadd.xlane.f32.xlu0 %v5489
        %v5491 = vpop.xlane.xlu0 %5490
        %v5492 = vadd.f32 %v5457, %v5458
        %5493 = vadd.xlane.f32.xlu0 %v5492
        %v5494 = vpop.xlane.xlu0 %5493
        %v5495 = vadd.f32 %v5459, %v5460
        %5496 = vadd.xlane.f32.xlu0 %v5495
        %v5497 = vpop.xlane.xlu0 %5496
        %v5498 = vadd.f32 %v5461, %v5462
        %5499 = vadd.xlane.f32.xlu0 %v5498
        %v5500 = vpop.xlane.xlu0 %5499
        %v5501 = vadd.f32 %v5463, %v5464
        %5502 = vadd.xlane.f32.xlu0 %v5501
        %v5503 = vpop.xlane.xlu0 %5502
        %v5504 = vadd.f32 %v5465, %v5466
        %5505 = vadd.xlane.f32.xlu0 %v5504
        %v5506 = vpop.xlane.xlu0 %5505
        %v5507 = vadd.f32 %v5467, %v5468
        %5508 = vadd.xlane.f32.xlu0 %v5507
        %v5509 = vpop.xlane.xlu0 %5508
        %v5510 = vadd.f32 %v5469, %v5470
        %5511 = vadd.xlane.f32.xlu0 %v5510
        %v5512 = vpop.xlane.xlu0 %5511
        %v5513 = vadd.f32 %v5471, %v5472
        %5514 = vadd.xlane.f32.xlu0 %v5513
        %v5515 = vpop.xlane.xlu0 %5514
        %v5516 = vadd.f32 %v5473, %v5474
        %5517 = vadd.xlane.f32.xlu0 %v5516
        %v5518 = vpop.xlane.xlu0 %5517
        %v5519 = vadd.f32 %v5475, %v5476
        %5520 = vadd.xlane.f32.xlu0 %v5519
        %v5521 = vpop.xlane.xlu0 %5520
        %v5522 = vadd.f32 %v5477, %v5478
        %5523 = vadd.xlane.f32.xlu0 %v5522
        %v5524 = vpop.xlane.xlu0 %5523
        %v5525 = vadd.f32 %v5479, %v5480
        %5526 = vadd.xlane.f32.xlu0 %v5525
        %v5527 = vpop.xlane.xlu0 %5526
        %v5528 = vadd.f32 %v5481, %v5482
        %5529 = vadd.xlane.f32.xlu0 %v5528
        %v5530 = vpop.xlane.xlu0 %5529
        %v5531 = vadd.f32 %v5483, %v5484
        %5532 = vadd.xlane.f32.xlu0 %v5531
        %v5533 = vpop.xlane.xlu0 %5532
        %v5534 = vadd.f32 %v5485, %v5486
        %5535 = vadd.xlane.f32.xlu0 %v5534
        %v5536 = vpop.xlane.xlu0 %5535
        %v5537 = vmul.f32 %v5491, %v3794
        %v5538 = vmul.f32 %v5494, %v3794
        %v5539 = vmul.f32 %v5497, %v3794
        %v5540 = vmul.f32 %v5500, %v3794
        %v5541 = vmul.f32 %v5503, %v3794
        %v5542 = vmul.f32 %v5506, %v3794
        %v5543 = vmul.f32 %v5509, %v3794
        %v5544 = vmul.f32 %v5512, %v3794
        %v5545 = vmul.f32 %v5515, %v3794
        %v5546 = vmul.f32 %v5518, %v3794
        %v5547 = vmul.f32 %v5521, %v3794
        %v5548 = vmul.f32 %v5524, %v3794
        %v5549 = vmul.f32 %v5527, %v3794
        %v5550 = vmul.f32 %v5530, %v3794
        %v5551 = vmul.f32 %v5533, %v3794
        %v5552 = vmul.f32 %v5536, %v3794
        %v5553 = vsub.f32 %v5455, %v5537
        %v5554 = vsub.f32 %v5456, %v5537
        %v5555 = vsub.f32 %v5457, %v5538
        %v5556 = vsub.f32 %v5458, %v5538
        %v5557 = vsub.f32 %v5459, %v5539
        %v5558 = vsub.f32 %v5460, %v5539
        %v5559 = vsub.f32 %v5461, %v5540
        %v5560 = vsub.f32 %v5462, %v5540
        %v5561 = vsub.f32 %v5463, %v5541
        %v5562 = vsub.f32 %v5464, %v5541
        %v5563 = vsub.f32 %v5465, %v5542
        %v5564 = vsub.f32 %v5466, %v5542
        %v5565 = vsub.f32 %v5467, %v5543
        %v5566 = vsub.f32 %v5468, %v5543
        %v5567 = vsub.f32 %v5469, %v5544
        %v5568 = vsub.f32 %v5470, %v5544
        %v5569 = vsub.f32 %v5471, %v5545
        %v5570 = vsub.f32 %v5472, %v5545
        %v5571 = vsub.f32 %v5473, %v5546
        %v5572 = vsub.f32 %v5474, %v5546
        %v5573 = vsub.f32 %v5475, %v5547
        %v5574 = vsub.f32 %v5476, %v5547
        %v5575 = vsub.f32 %v5477, %v5548
        %v5576 = vsub.f32 %v5478, %v5548
        %v5577 = vsub.f32 %v5479, %v5549
        %v5578 = vsub.f32 %v5480, %v5549
        %v5579 = vsub.f32 %v5481, %v5550
        %v5580 = vsub.f32 %v5482, %v5550
        %v5581 = vsub.f32 %v5483, %v5551
        %v5582 = vsub.f32 %v5484, %v5551
        %v5583 = vsub.f32 %v5485, %v5552
        %v5584 = vsub.f32 %v5486, %v5552
        %v5585 = vmul.f32 %v5553, %v5553
        %v5586 = vmul.f32 %v5554, %v5554
        %v5587 = vmul.f32 %v5555, %v5555
        %v5588 = vmul.f32 %v5556, %v5556
        %v5589 = vmul.f32 %v5557, %v5557
        %v5590 = vmul.f32 %v5558, %v5558
        %v5591 = vmul.f32 %v5559, %v5559
        %v5592 = vmul.f32 %v5560, %v5560
        %v5593 = vmul.f32 %v5561, %v5561
        %v5594 = vmul.f32 %v5562, %v5562
        %v5595 = vmul.f32 %v5563, %v5563
        %v5596 = vmul.f32 %v5564, %v5564
        %v5597 = vmul.f32 %v5565, %v5565
        %v5598 = vmul.f32 %v5566, %v5566
        %v5599 = vmul.f32 %v5567, %v5567
        %v5600 = vmul.f32 %v5568, %v5568
        %v5601 = vmul.f32 %v5569, %v5569
        %v5602 = vmul.f32 %v5570, %v5570
        %v5603 = vmul.f32 %v5571, %v5571
        %v5604 = vmul.f32 %v5572, %v5572
        %v5605 = vmul.f32 %v5573, %v5573
        %v5606 = vmul.f32 %v5574, %v5574
        %v5607 = vmul.f32 %v5575, %v5575
        %v5608 = vmul.f32 %v5576, %v5576
        %v5609 = vmul.f32 %v5577, %v5577
        %v5610 = vmul.f32 %v5578, %v5578
        %v5611 = vmul.f32 %v5579, %v5579
        %v5612 = vmul.f32 %v5580, %v5580
        %v5613 = vmul.f32 %v5581, %v5581
        %v5614 = vmul.f32 %v5582, %v5582
        %v5615 = vmul.f32 %v5583, %v5583
        %v5616 = vmul.f32 %v5584, %v5584
        %v5617 = vadd.f32 %v5585, %v5586
        %5618 = vadd.xlane.f32.xlu0 %v5617
        %v5619 = vpop.xlane.xlu0 %5618
        %v5620 = vadd.f32 %v5587, %v5588
        %5621 = vadd.xlane.f32.xlu0 %v5620
        %v5622 = vpop.xlane.xlu0 %5621
        %v5623 = vadd.f32 %v5589, %v5590
        %5624 = vadd.xlane.f32.xlu0 %v5623
        %v5625 = vpop.xlane.xlu0 %5624
        %v5626 = vadd.f32 %v5591, %v5592
        %5627 = vadd.xlane.f32.xlu0 %v5626
        %v5628 = vpop.xlane.xlu0 %5627
        %v5629 = vadd.f32 %v5593, %v5594
        %5630 = vadd.xlane.f32.xlu0 %v5629
        %v5631 = vpop.xlane.xlu0 %5630
        %v5632 = vadd.f32 %v5595, %v5596
        %5633 = vadd.xlane.f32.xlu0 %v5632
        %v5634 = vpop.xlane.xlu0 %5633
        %v5635 = vadd.f32 %v5597, %v5598
        %5636 = vadd.xlane.f32.xlu0 %v5635
        %v5637 = vpop.xlane.xlu0 %5636
        %v5638 = vadd.f32 %v5599, %v5600
        %5639 = vadd.xlane.f32.xlu0 %v5638
        %v5640 = vpop.xlane.xlu0 %5639
        %v5641 = vadd.f32 %v5601, %v5602
        %5642 = vadd.xlane.f32.xlu0 %v5641
        %v5643 = vpop.xlane.xlu0 %5642
        %v5644 = vadd.f32 %v5603, %v5604
        %5645 = vadd.xlane.f32.xlu0 %v5644
        %v5646 = vpop.xlane.xlu0 %5645
        %v5647 = vadd.f32 %v5605, %v5606
        %5648 = vadd.xlane.f32.xlu0 %v5647
        %v5649 = vpop.xlane.xlu0 %5648
        %v5650 = vadd.f32 %v5607, %v5608
        %5651 = vadd.xlane.f32.xlu0 %v5650
        %v5652 = vpop.xlane.xlu0 %5651
        %v5653 = vadd.f32 %v5609, %v5610
        %5654 = vadd.xlane.f32.xlu0 %v5653
        %v5655 = vpop.xlane.xlu0 %5654
        %v5656 = vadd.f32 %v5611, %v5612
        %5657 = vadd.xlane.f32.xlu0 %v5656
        %v5658 = vpop.xlane.xlu0 %5657
        %v5659 = vadd.f32 %v5613, %v5614
        %5660 = vadd.xlane.f32.xlu0 %v5659
        %v5661 = vpop.xlane.xlu0 %5660
        %v5662 = vadd.f32 %v5615, %v5616
        %5663 = vadd.xlane.f32.xlu0 %v5662
        %v5664 = vpop.xlane.xlu0 %5663
        %v5665 = vmul.f32 %v5619, %v3794
        %v5666 = vmul.f32 %v5622, %v3794
        %v5667 = vmul.f32 %v5625, %v3794
        %v5668 = vmul.f32 %v5628, %v3794
        %v5669 = vmul.f32 %v5631, %v3794
        %v5670 = vmul.f32 %v5634, %v3794
        %v5671 = vmul.f32 %v5637, %v3794
        %v5672 = vmul.f32 %v5640, %v3794
        %v5673 = vmul.f32 %v5643, %v3794
        %v5674 = vmul.f32 %v5646, %v3794
        %v5675 = vmul.f32 %v5649, %v3794
        %v5676 = vmul.f32 %v5652, %v3794
        %v5677 = vmul.f32 %v5655, %v3794
        %v5678 = vmul.f32 %v5658, %v3794
        %v5679 = vmul.f32 %v5661, %v3794
        %v5680 = vmul.f32 %v5664, %v3794
        %v5681 = vadd.f32 %v5665, 1e-05
        %v5682 = vadd.f32 %v5666, 1e-05
        %v5683 = vadd.f32 %v5667, 1e-05
        %v5684 = vadd.f32 %v5668, 1e-05
        %v5685 = vadd.f32 %v5669, 1e-05
        %v5686 = vadd.f32 %v5670, 1e-05
        %v5687 = vadd.f32 %v5671, 1e-05
        %v5688 = vadd.f32 %v5672, 1e-05
        %v5689 = vadd.f32 %v5673, 1e-05
        %v5690 = vadd.f32 %v5674, 1e-05
        %v5691 = vadd.f32 %v5675, 1e-05
        %v5692 = vadd.f32 %v5676, 1e-05
        %v5693 = vadd.f32 %v5677, 1e-05
        %v5694 = vadd.f32 %v5678, 1e-05
        %v5695 = vadd.f32 %v5679, 1e-05
        %v5696 = vadd.f32 %v5680, 1e-05
        %v5697 = vrsqrt.pop %v5681
        %v5698 = vrsqrt.pop %v5682
        %v5699 = vrsqrt.pop %v5683
        %v5700 = vrsqrt.pop %v5684
        %v5701 = vrsqrt.pop %v5685
        %v5702 = vrsqrt.pop %v5686
        %v5703 = vrsqrt.pop %v5687
        %v5704 = vrsqrt.pop %v5688
        %v5705 = vrsqrt.pop %v5689
        %v5706 = vrsqrt.pop %v5690
        %v5707 = vrsqrt.pop %v5691
        %v5708 = vrsqrt.pop %v5692
        %v5709 = vrsqrt.pop %v5693
        %v5710 = vrsqrt.pop %v5694
        %v5711 = vrsqrt.pop %v5695
        %v5712 = vrsqrt.pop %v5696
        %v5713 = vmul.f32 %v5553, %v5697
        %v5714 = vmul.f32 %v5554, %v5697
        %v5715 = vmul.f32 %v5555, %v5698
        %v5716 = vmul.f32 %v5556, %v5698
        %v5717 = vmul.f32 %v5557, %v5699
        %v5718 = vmul.f32 %v5558, %v5699
        %v5719 = vmul.f32 %v5559, %v5700
        %v5720 = vmul.f32 %v5560, %v5700
        %v5721 = vmul.f32 %v5561, %v5701
        %v5722 = vmul.f32 %v5562, %v5701
        %v5723 = vmul.f32 %v5563, %v5702
        %v5724 = vmul.f32 %v5564, %v5702
        %v5725 = vmul.f32 %v5565, %v5703
        %v5726 = vmul.f32 %v5566, %v5703
        %v5727 = vmul.f32 %v5567, %v5704
        %v5728 = vmul.f32 %v5568, %v5704
        %v5729 = vmul.f32 %v5569, %v5705
        %v5730 = vmul.f32 %v5570, %v5705
        %v5731 = vmul.f32 %v5571, %v5706
        %v5732 = vmul.f32 %v5572, %v5706
        %v5733 = vmul.f32 %v5573, %v5707
        %v5734 = vmul.f32 %v5574, %v5707
        %v5735 = vmul.f32 %v5575, %v5708
        %v5736 = vmul.f32 %v5576, %v5708
        %v5737 = vmul.f32 %v5577, %v5709
        %v5738 = vmul.f32 %v5578, %v5709
        %v5739 = vmul.f32 %v5579, %v5710
        %v5740 = vmul.f32 %v5580, %v5710
        %v5741 = vmul.f32 %v5581, %v5711
        %v5742 = vmul.f32 %v5582, %v5711
        %v5743 = vmul.f32 %v5583, %v5712
        %v5744 = vmul.f32 %v5584, %v5712
        %v5746 = vlaneseq
        %v5747 = vshrl.u32 %v5746, 7
        %v5748 = vsub.s32 0, %v5747
        %v5749 = vrot.slane %v5487, %v5748
        %v5750 = vlaneseq
        %v5751 = vshrl.u32 %v5750, 7
        %v5752 = vsub.s32 1, %v5751
        %v5753 = vrot.slane %v5487, %v5752
        %v5756 = vmul.f32 %v5713, %v5749
        %v5757 = vmul.f32 %v5714, %v5753
        %v5758 = vmul.f32 %v5715, %v5749
        %v5759 = vmul.f32 %v5716, %v5753
        %v5760 = vmul.f32 %v5717, %v5749
        %v5761 = vmul.f32 %v5718, %v5753
        %v5762 = vmul.f32 %v5719, %v5749
        %v5763 = vmul.f32 %v5720, %v5753
        %v5764 = vmul.f32 %v5721, %v5749
        %v5765 = vmul.f32 %v5722, %v5753
        %v5766 = vmul.f32 %v5723, %v5749
        %v5767 = vmul.f32 %v5724, %v5753
        %v5768 = vmul.f32 %v5725, %v5749
        %v5769 = vmul.f32 %v5726, %v5753
        %v5770 = vmul.f32 %v5727, %v5749
        %v5771 = vmul.f32 %v5728, %v5753
        %v5772 = vmul.f32 %v5729, %v5749
        %v5773 = vmul.f32 %v5730, %v5753
        %v5774 = vmul.f32 %v5731, %v5749
        %v5775 = vmul.f32 %v5732, %v5753
        %v5776 = vmul.f32 %v5733, %v5749
        %v5777 = vmul.f32 %v5734, %v5753
        %v5778 = vmul.f32 %v5735, %v5749
        %v5779 = vmul.f32 %v5736, %v5753
        %v5780 = vmul.f32 %v5737, %v5749
        %v5781 = vmul.f32 %v5738, %v5753
        %v5782 = vmul.f32 %v5739, %v5749
        %v5783 = vmul.f32 %v5740, %v5753
        %v5784 = vmul.f32 %v5741, %v5749
        %v5785 = vmul.f32 %v5742, %v5753
        %v5786 = vmul.f32 %v5743, %v5749
        %v5787 = vmul.f32 %v5744, %v5753
        %v5789 = vlaneseq
        %v5790 = vshrl.u32 %v5789, 7
        %v5791 = vsub.s32 0, %v5790
        %v5792 = vrot.slane %v5488, %v5791
        %v5793 = vlaneseq
        %v5794 = vshrl.u32 %v5793, 7
        %v5795 = vsub.s32 1, %v5794
        %v5796 = vrot.slane %v5488, %v5795
        %v5799 = vadd.f32 %v5756, %v5792
        %v5800 = vadd.f32 %v5757, %v5796
        %v5801 = vadd.f32 %v5758, %v5792
        %v5802 = vadd.f32 %v5759, %v5796
        %v5803 = vadd.f32 %v5760, %v5792
        %v5804 = vadd.f32 %v5761, %v5796
        %v5805 = vadd.f32 %v5762, %v5792
        %v5806 = vadd.f32 %v5763, %v5796
        %v5807 = vadd.f32 %v5764, %v5792
        %v5808 = vadd.f32 %v5765, %v5796
        %v5809 = vadd.f32 %v5766, %v5792
        %v5810 = vadd.f32 %v5767, %v5796
        %v5811 = vadd.f32 %v5768, %v5792
        %v5812 = vadd.f32 %v5769, %v5796
        %v5813 = vadd.f32 %v5770, %v5792
        %v5814 = vadd.f32 %v5771, %v5796
        %v5815 = vadd.f32 %v5772, %v5792
        %v5816 = vadd.f32 %v5773, %v5796
        %v5817 = vadd.f32 %v5774, %v5792
        %v5818 = vadd.f32 %v5775, %v5796
        %v5819 = vadd.f32 %v5776, %v5792
        %v5820 = vadd.f32 %v5777, %v5796
        %v5821 = vadd.f32 %v5778, %v5792
        %v5822 = vadd.f32 %v5779, %v5796
        %v5823 = vadd.f32 %v5780, %v5792
        %v5824 = vadd.f32 %v5781, %v5796
        %v5825 = vadd.f32 %v5782, %v5792
        %v5826 = vadd.f32 %v5783, %v5796
        %v5827 = vadd.f32 %v5784, %v5792
        %v5828 = vadd.f32 %v5785, %v5796
        %v5829 = vadd.f32 %v5786, %v5792
        %v5830 = vadd.f32 %v5787, %v5796
        %v5831 = vpack.c.bf16 %v5801, %v5799
        %v5832 = vpack.c.bf16 %v5802, %v5800
        %v5833 = vpack.c.bf16 %v5805, %v5803
        %v5834 = vpack.c.bf16 %v5806, %v5804
        %v5835 = vpack.c.bf16 %v5809, %v5807
        %v5836 = vpack.c.bf16 %v5810, %v5808
        %v5837 = vpack.c.bf16 %v5813, %v5811
        %v5838 = vpack.c.bf16 %v5814, %v5812
        %v5839 = vpack.c.bf16 %v5817, %v5815
        %v5840 = vpack.c.bf16 %v5818, %v5816
        %v5841 = vpack.c.bf16 %v5821, %v5819
        %v5842 = vpack.c.bf16 %v5822, %v5820
        %v5843 = vpack.c.bf16 %v5825, %v5823
        %v5844 = vpack.c.bf16 %v5826, %v5824
        %v5845 = vpack.c.bf16 %v5829, %v5827
        %v5846 = vpack.c.bf16 %v5830, %v5828
        %v5863 = vunpack.c.l.b16 %v5831
        %v5864 = vunpack.c.l.b16 %v5832
        %v5865 = vunpack.c.h.b16 %v5831
        %v5866 = vunpack.c.h.b16 %v5832
        %v5867 = vunpack.c.l.b16 %v5833
        %v5868 = vunpack.c.l.b16 %v5834
        %v5869 = vunpack.c.h.b16 %v5833
        %v5870 = vunpack.c.h.b16 %v5834
        %v5871 = vunpack.c.l.b16 %v5835
        %v5872 = vunpack.c.l.b16 %v5836
        %v5873 = vunpack.c.h.b16 %v5835
        %v5874 = vunpack.c.h.b16 %v5836
        %v5875 = vunpack.c.l.b16 %v5837
        %v5876 = vunpack.c.l.b16 %v5838
        %v5877 = vunpack.c.h.b16 %v5837
        %v5878 = vunpack.c.h.b16 %v5838
        %v5879 = vunpack.c.l.b16 %v5839
        %v5880 = vunpack.c.l.b16 %v5840
        %v5881 = vunpack.c.h.b16 %v5839
        %v5882 = vunpack.c.h.b16 %v5840
        %v5883 = vunpack.c.l.b16 %v5841
        %v5884 = vunpack.c.l.b16 %v5842
        %v5885 = vunpack.c.h.b16 %v5841
        %v5886 = vunpack.c.h.b16 %v5842
        %v5887 = vunpack.c.l.b16 %v5843
        %v5888 = vunpack.c.l.b16 %v5844
        %v5889 = vunpack.c.h.b16 %v5843
        %v5890 = vunpack.c.h.b16 %v5844
        %v5891 = vunpack.c.l.b16 %v5845
        %v5892 = vunpack.c.l.b16 %v5846
        %v5893 = vunpack.c.h.b16 %v5845
        %v5894 = vunpack.c.h.b16 %v5846
        %v5895 = vpack.c.b16 %v5864, %v5863
        %v5896 = vpack.c.b16 %v5866, %v5865
        %v5897 = vpack.c.b16 %v5868, %v5867
        %v5898 = vpack.c.b16 %v5870, %v5869
        %v5899 = vpack.c.b16 %v5872, %v5871
        %v5900 = vpack.c.b16 %v5874, %v5873
        %v5901 = vpack.c.b16 %v5876, %v5875
        %v5902 = vpack.c.b16 %v5878, %v5877
        %v5903 = vpack.c.b16 %v5880, %v5879
        %v5904 = vpack.c.b16 %v5882, %v5881
        %v5905 = vpack.c.b16 %v5884, %v5883
        %v5906 = vpack.c.b16 %v5886, %v5885
        %v5907 = vpack.c.b16 %v5888, %v5887
        %v5908 = vpack.c.b16 %v5890, %v5889
        %v5909 = vpack.c.b16 %v5892, %v5891
        %v5910 = vpack.c.b16 %v5894, %v5893
        %5927 = vst [vmem:[%s667] sm:$0xff] %v5895
        %5928 = vst [vmem:[%s667 + $0x8] sm:$0xff] %v5896
        %5929 = vst [vmem:[%s667 + $0x10] sm:$0xff] %v5897
        %5930 = vst [vmem:[%s667 + $0x18] sm:$0xff] %v5898
        %5931 = vst [vmem:[%s667 + $0x20] sm:$0xff] %v5899
        %5932 = vst [vmem:[%s667 + $0x28] sm:$0xff] %v5900
        %5933 = vst [vmem:[%s667 + $0x30] sm:$0xff] %v5901
        %5934 = vst [vmem:[%s667 + $0x38] sm:$0xff] %v5902
        %5935 = vst [vmem:[%s667 + $0x40] sm:$0xff] %v5903
        %5936 = vst [vmem:[%s667 + $0x48] sm:$0xff] %v5904
        %5937 = vst [vmem:[%s667 + $0x50] sm:$0xff] %v5905
        %5938 = vst [vmem:[%s667 + $0x58] sm:$0xff] %v5906
        %5939 = vst [vmem:[%s667 + $0x60] sm:$0xff] %v5907
        %5940 = vst [vmem:[%s667 + $0x68] sm:$0xff] %v5908
        %5941 = vst [vmem:[%s667 + $0x70] sm:$0xff] %v5909
        %5942 = vst [vmem:[%s667 + $0x78] sm:$0xff] %v5910
        %s5943 = sand.u32 %s421, 1
        %s5944 = scalar_lea.sflag [#allocation6], %s5943
        %s5945 = sand.u32 %s421, 1
        %s5946 = smul.addr %s5945, 128
        %s5947 = scalar_lea.vmem [#allocation16], %s5946
        // Predicated region
        $region121: #{tpu_custom_call.1} parent=87 // pred_check
          %p5948 = pneg %p431
        $region122: #{tpu_custom_call.1} parent=87 // pred_check_branch
          %5950 = sbr.rel (%p5948) target = $region124
        $region123: #{tpu_custom_call.1} parent=87 // pred_region
          %s5951 = smul.u32 16, %s42
          %s5953 = ssub.s32 2048, 2048
          %5954 = vsyncadd %s5944, %s5953
          %s5955 = smul.addr %s5951, 2
          %s5956 = smul.addr %s41, 64
          %s5957 = sadd.s32 %s5955, %s5956
          %s5958 = smul.addr %s5957, 64
          %s5959 = scalar_lea.hbm %s17, %s5958
          %s5960 = sshll.u32 %s5947, 4
          %s5961 = int_to_ptr.vmem [resolvable:$true] %s5960
          %5966 = dma.vmem_to_hbm [thread:$0]  %s5961, 2048, %s5959, %s5944, 128, 128, 8
        $region124: #{tpu_custom_call.1} parent=87 // pred_fallthru
          _
      $region88: #{tpu_custom_call.1} parent=5 // pred_fallthru
        _
      %p5967 = scmp.le.s32.totalorder 2, %s32
      // Predicated region
      $region125: #{tpu_custom_call.1} parent=5 // pred_check
        %p5968 = pneg %p5967
      $region126: #{tpu_custom_call.1} parent=5 // pred_check_branch
        %5970 = sbr.rel (%p5968) target = $region128
      $region127: #{tpu_custom_call.1} parent=5 // pred_region
        %s5971 = ssub.s32 %s32, 2
        // Predicated region
        $region129: #{tpu_custom_call.1} parent=127 // pred_check
          %p5972 = pneg %p437
        $region130: #{tpu_custom_call.1} parent=127 // pred_check_branch
          %5974 = sbr.rel (%p5972) target = $region132
        $region131: #{tpu_custom_call.1} parent=127 // pred_region
          %s5975 = sand.u32 %s422, 1
          %s5976 = scalar_lea.sflag [#allocation6], %s5975
          %s5977 = sand.u32 %s422, 1
          %s5978 = smul.addr %s5977, 128
          %s5979 = scalar_lea.vmem [#allocation16], %s5978
          %5980 = dma.done %s5976, 2048
        $region132: #{tpu_custom_call.1} parent=127 // pred_fallthru
          _
      $region128: #{tpu_custom_call.1} parent=5 // pred_fallthru
        _
    $region6: #{tpu_custom_call.1} parent=1 // loop_footer
      %s36 = sadd.s32 1, %s32
    $region7: #{tpu_custom_call.1} parent=1 // loop_footer_branch
      %31 = sbr.rel target = $region3
    $region8: #{tpu_custom_call.1} parent=1 // loop_exit
      _
    %5981 = vsyncpa [#allocation5], 1
    %s5982 = scalar_lea.sflag [#allocation5], 1
    %5983 = vsyncpa %s5982, 1
    %5984 = vsyncpa [#allocation8], 1
    %5985 = vsyncpa [#allocation11], 1
    %5986 = vsyncpa [#allocation14], 1
    %5987 = vsyncpa [#allocation6], 1
    %s5988 = scalar_lea.sflag [#allocation6], 1
    %5989 = vsyncpa %s5988, 1

</llo_original>
